<compile_context>
chip_gen: v5e
topology: v5e:2x2
jax: 0.10.0
libtpu: 0.0.40
codegen_flags: <defaults>
</compile_context>

<pallas_src>
import math
from functools import partial

import jax
import jax.numpy as jnp
from jax import lax
from jax.experimental import pallas as pl
from jax.experimental.pallas import tpu as pltpu


# ------------------------- tiling helpers -------------------------

# Sized so double-buffered tiles fit v7x's 64 MiB physical VMEM with headroom;
# v5e/v6e (128 MiB) trivially satisfy it.
_VMEM_LIMIT_BYTES = 48 * 1024 * 1024


def _cparams(*dim_semantics):
    return pltpu.CompilerParams(
        dimension_semantics=dim_semantics,
        vmem_limit_bytes=_VMEM_LIMIT_BYTES,
    )


def _pick_tile(dim, candidates=(512, 256, 128)):
    """Largest MXU/lane-aligned tile that exactly divides dim, else the full dim."""
    for t in candidates:
        if dim % t == 0:
            return t
    return dim


# ------------------------- Pallas kernels -------------------------

def _layernorm_kernel(x_ref, g_ref, b_ref, o_ref):
    x = x_ref[...].astype(jnp.float32)
    mean = jnp.mean(x, axis=-1, keepdims=True)
    var = jnp.mean(jnp.square(x - mean), axis=-1, keepdims=True)
    y = (x - mean) * lax.rsqrt(var + 1e-5)
    y = y * g_ref[...].astype(jnp.float32) + b_ref[...].astype(jnp.float32)
    o_ref[...] = y.astype(o_ref.dtype)


def layernorm(x, g, b):
    M, D = x.shape
    tm = _pick_tile(M)
    return pl.pallas_call(
        _layernorm_kernel,
        out_shape=jax.ShapeDtypeStruct((M, D), x.dtype),
        grid=(M // tm,),
        in_specs=[
            pl.BlockSpec((tm, D), lambda i: (i, 0)),
            pl.BlockSpec((1, D), lambda i: (0, 0)),
            pl.BlockSpec((1, D), lambda i: (0, 0)),
        ],
        out_specs=pl.BlockSpec((tm, D), lambda i: (i, 0)),
        compiler_params=_cparams("parallel"),
    )(x, g.reshape(1, D), b.reshape(1, D))


def _matmul_bias_kernel(x_ref, w_ref, b_ref, o_ref):
    acc = jnp.dot(x_ref[...].astype(jnp.bfloat16), w_ref[...],
                  preferred_element_type=jnp.float32)
    o_ref[...] = (acc + b_ref[...].astype(jnp.float32)).astype(o_ref.dtype)


def matmul_bias(x, w, b):
    """y = x @ w + b.  Tiled over (M, N); K kept whole in the block."""
    M, K = x.shape
    N = w.shape[1]
    tm, tn = _pick_tile(M), _pick_tile(N)
    return pl.pallas_call(
        _matmul_bias_kernel,
        out_shape=jax.ShapeDtypeStruct((M, N), x.dtype),
        grid=(M // tm, N // tn),
        in_specs=[
            pl.BlockSpec((tm, K), lambda i, j: (i, 0)),
            pl.BlockSpec((K, tn), lambda i, j: (0, j)),
            pl.BlockSpec((1, tn), lambda i, j: (0, j)),
        ],
        out_specs=pl.BlockSpec((tm, tn), lambda i, j: (i, j)),
        compiler_params=_cparams("parallel", "parallel"),
    )(x, w, b.reshape(1, N))


def _matmul_bias_res_kernel(x_ref, w_ref, b_ref, r_ref, o_ref):
    acc = jnp.dot(x_ref[...].astype(jnp.bfloat16), w_ref[...],
                  preferred_element_type=jnp.float32)
    acc = acc + b_ref[...].astype(jnp.float32) + r_ref[...].astype(jnp.float32)
    o_ref[...] = acc.astype(o_ref.dtype)


def matmul_bias_residual(x, w, b, res):
    """y = res + x @ w + b  (residual folded into the projection kernel)."""
    M, K = x.shape
    N = w.shape[1]
    tm, tn = _pick_tile(M), _pick_tile(N)
    return pl.pallas_call(
        _matmul_bias_res_kernel,
        out_shape=jax.ShapeDtypeStruct((M, N), x.dtype),
        grid=(M // tm, N // tn),
        in_specs=[
            pl.BlockSpec((tm, K), lambda i, j: (i, 0)),
            pl.BlockSpec((K, tn), lambda i, j: (0, j)),
            pl.BlockSpec((1, tn), lambda i, j: (0, j)),
            pl.BlockSpec((tm, tn), lambda i, j: (i, j)),
        ],
        out_specs=pl.BlockSpec((tm, tn), lambda i, j: (i, j)),
        compiler_params=_cparams("parallel", "parallel"),
    )(x, w, b.reshape(1, N), res)


def _ln_matmul_bias_kernel(x_ref, g_ref, bln_ref, w_ref, b_ref, o_ref):
    # LayerNorm in f32 (matches the fp16-safe LayerNorm subclass), then bf16 MXU matmul.
    x = x_ref[...].astype(jnp.float32)
    mean = jnp.mean(x, axis=-1, keepdims=True)
    var = jnp.mean(jnp.square(x - mean), axis=-1, keepdims=True)
    xn = (x - mean) * lax.rsqrt(var + 1e-5)
    xn = xn * g_ref[...].astype(jnp.float32) + bln_ref[...].astype(jnp.float32)
    acc = jnp.dot(xn.astype(jnp.bfloat16), w_ref[...],
                  preferred_element_type=jnp.float32)
    o_ref[...] = (acc + b_ref[...].astype(jnp.float32)).astype(o_ref.dtype)


def ln_matmul_bias(x, g, b_ln, w, b):
    """y = LayerNorm(x) @ w + b, fused so x is read from HBM once."""
    M, K = x.shape
    N = w.shape[1]
    tm, tn = _pick_tile(M), _pick_tile(N)
    return pl.pallas_call(
        _ln_matmul_bias_kernel,
        out_shape=jax.ShapeDtypeStruct((M, N), x.dtype),
        grid=(M // tm, N // tn),
        in_specs=[
            pl.BlockSpec((tm, K), lambda i, j: (i, 0)),
            pl.BlockSpec((1, K), lambda i, j: (0, 0)),
            pl.BlockSpec((1, K), lambda i, j: (0, 0)),
            pl.BlockSpec((K, tn), lambda i, j: (0, j)),
            pl.BlockSpec((1, tn), lambda i, j: (0, j)),
        ],
        out_specs=pl.BlockSpec((tm, tn), lambda i, j: (i, j)),
        compiler_params=_cparams("parallel", "parallel"),
    )(x, g.reshape(1, K), b_ln.reshape(1, K), w, b.reshape(1, N))


def _ln_mlp_res_kernel(x_ref, g_ref, bln_ref, w1_ref, b1_ref, w2_ref, b2_ref, o_ref):
    # out = x + c_proj(QuickGELU(c_fc(LayerNorm(x)))); hidden lives only per-tile.
    x = x_ref[...].astype(jnp.float32)
    mean = jnp.mean(x, axis=-1, keepdims=True)
    var = jnp.mean(jnp.square(x - mean), axis=-1, keepdims=True)
    xn = (x - mean) * lax.rsqrt(var + 1e-5)
    xn = xn * g_ref[...].astype(jnp.float32) + bln_ref[...].astype(jnp.float32)
    h = jnp.dot(xn.astype(jnp.bfloat16), w1_ref[...],
                preferred_element_type=jnp.float32) + b1_ref[...].astype(jnp.float32)
    h = h * jax.nn.sigmoid(1.702 * h)                      # QuickGELU (f32, EUP)
    o = jnp.dot(h.astype(jnp.bfloat16), w2_ref[...],
                preferred_element_type=jnp.float32) + b2_ref[...].astype(jnp.float32)
    o_ref[...] = (x + o).astype(o_ref.dtype)               # residual folded in


def ln_mlp_residual(x, g, b_ln, w1, b1, w2, b2):
    M, D = x.shape
    H = w1.shape[1]
    tm = _pick_tile(M, (256, 128))   # keep the f32 (tm, 4D) hidden a few MiB (v7x VMEM)
    return pl.pallas_call(
        _ln_mlp_res_kernel,
        out_shape=jax.ShapeDtypeStruct((M, D), x.dtype),
        grid=(M // tm,),
        in_specs=[
            pl.BlockSpec((tm, D), lambda i: (i, 0)),
            pl.BlockSpec((1, D), lambda i: (0, 0)),
            pl.BlockSpec((1, D), lambda i: (0, 0)),
            pl.BlockSpec((D, H), lambda i: (0, 0)),
            pl.BlockSpec((1, H), lambda i: (0, 0)),
            pl.BlockSpec((H, D), lambda i: (0, 0)),
            pl.BlockSpec((1, D), lambda i: (0, 0)),
        ],
        out_specs=pl.BlockSpec((tm, D), lambda i: (i, 0)),
        compiler_params=_cparams("parallel"),
    )(x, g.reshape(1, D), b_ln.reshape(1, D), w1, b1.reshape(1, H), w2, b2.reshape(1, D))


def _mha_kernel(*refs, heads, dh, scale, has_mask):
    if has_mask:
        qkv_ref, m_ref, o_ref = refs
    else:
        qkv_ref, o_ref = refs
        m_ref = None
    D = heads * dh
    outs = []
    for h in range(heads):                                 # heads is a compile-time constant
        # scale folded into q: one multiply on [S, dh] instead of [S, S]
        q = qkv_ref[0, :, h * dh:(h + 1) * dh].astype(jnp.float32) * scale
        k = qkv_ref[0, :, D + h * dh:D + (h + 1) * dh]
        v = qkv_ref[0, :, 2 * D + h * dh:2 * D + (h + 1) * dh]
        # q @ k^T via dot_general (no materialized transpose), bf16 operands, f32 acc.
        s = lax.dot_general(q.astype(jnp.bfloat16), k.astype(jnp.bfloat16),
                            (((1,), (1,)), ((), ())),
                            preferred_element_type=jnp.float32)
        if has_mask:
            s = s + m_ref[...].astype(jnp.float32)
        s = s - jnp.max(s, axis=-1, keepdims=True)
        p = jnp.exp(s)
        p = p * pl.reciprocal(jnp.sum(p, axis=-1, keepdims=True), approx=True)
        outs.append(jnp.dot(p.astype(jnp.bfloat16), v.astype(jnp.bfloat16),
                            preferred_element_type=jnp.float32))
    # single lane-dense full-width store
    o_ref[0] = jnp.concatenate(outs, axis=-1).astype(o_ref.dtype)


def multihead_attention(qkv, heads, mask=None):
    """qkv: [B, S, 3*D] packed (q | k | v, heads contiguous inside each). Returns [B, S, D]."""
    B, S, threeD = qkv.shape
    D = threeD // 3
    dh = D // heads
    kern = partial(_mha_kernel, heads=heads, dh=dh,
                   scale=1.0 / math.sqrt(dh), has_mask=mask is not None)
    in_specs = [pl.BlockSpec((1, S, threeD), lambda b: (b, 0, 0))]
    args = [qkv]
    if mask is not None:
        in_specs.append(pl.BlockSpec((S, S), lambda b: (0, 0)))
        args.append(mask.astype(jnp.float32))
    return pl.pallas_call(
        kern,
        out_shape=jax.ShapeDtypeStruct((B, S, D), qkv.dtype),
        grid=(B,),
        in_specs=in_specs,
        out_specs=pl.BlockSpec((1, S, D), lambda b: (b, 0, 0)),
        compiler_params=_cparams("parallel"),
    )(*args)


def _clip_logits_kernel(i_ref, t_ref, s_ref, o_ref):
    # fused: L2-normalize both feature sets + scaled similarity (one launch, f32 math)
    im = i_ref[...].astype(jnp.float32)
    tx = t_ref[...].astype(jnp.float32)
    im = im * lax.rsqrt(jnp.sum(im * im, axis=-1, keepdims=True))
    tx = tx * lax.rsqrt(jnp.sum(tx * tx, axis=-1, keepdims=True))
    logits = lax.dot_general(im, tx, (((1,), (1,)), ((), ())),
                             preferred_element_type=jnp.float32)
    o_ref[...] = (logits * s_ref[...]).astype(o_ref.dtype)


def clip_logits(img, txt, scale):
    Bi, Bt = img.shape[0], txt.shape[0]
    return pl.pallas_call(
        _clip_logits_kernel,
        out_shape=jax.ShapeDtypeStruct((Bi, Bt), img.dtype),
        compiler_params=pltpu.CompilerParams(vmem_limit_bytes=_VMEM_LIMIT_BYTES),
    )(img, txt, scale.reshape(1, 1))


# ------------------------- model (glue) -------------------------

def residual_block(x, p, heads, mask):
    # x: [B, S, D] (batch-first; identical math to PyTorch's [S, B, D] convention)
    B, S, D = x.shape
    x2 = x.reshape(B * S, D)
    qkv = ln_matmul_bias(x2, p["ln1_g"], p["ln1_b"], p["w_in"], p["b_in"])     # LN1 + in_proj
    attn = multihead_attention(qkv.reshape(B, S, 3 * D), heads, mask)          # heads sliced in-kernel
    x2 = matmul_bias_residual(attn.reshape(B * S, D), p["w_out"], p["b_out"], x2)  # out_proj + residual
    x2 = ln_mlp_residual(x2, p["ln2_g"], p["ln2_b"],
                         p["w_fc"], p["b_fc"], p["w_proj"], p["b_proj"])       # LN2 + MLP + residual
    return x2.reshape(B, S, D)


def encode_image(image, vp, cfg):
    B = image.shape[0]
    ps, R, W = cfg["vision_patch_size"], cfg["image_resolution"], cfg["vision_width"]
    g = R // ps
    # conv1 (kernel==stride, no bias) == patch extraction + matmul
    # TODO(synk): express the patch extraction via the matmul LHS index_map instead of a
    # JAX transpose; blocked by the (8,128) lane-tiling constraint for patch sizes < 128.
    patches = image.reshape(B, 3, g, ps, g, ps).transpose(0, 2, 4, 1, 3, 5)
    patches = patches.reshape(B * g * g, 3 * ps * ps)
    x = matmul_bias(patches, vp["patch_w"], vp["patch_b"]).reshape(B, g * g, W)

    cls = jnp.broadcast_to(vp["class_embedding"].reshape(1, 1, W), (B, 1, W))
    x = jnp.concatenate([cls, x], axis=1)                   # [B, 1+g*g, W]
    x = x + vp["positional_embedding"][None]
    S = x.shape[1]
    x = layernorm(x.reshape(B * S, W), vp["ln_pre_g"], vp["ln_pre_b"]).reshape(B, S, W)

    for p in vp["blocks"]:
        x = residual_block(x, p, cfg["vision_heads"], mask=None)   # vision: no attn mask

    # ln_post is per-token, so gathering the CLS token first is equivalent; fuse LN + proj.
    cls_tok = x[:, 0, :]
    zero_bias = jnp.zeros((cfg["embed_dim"],), jnp.float32)
    return ln_matmul_bias(cls_tok, vp["ln_post_g"], vp["ln_post_b"], vp["proj"], zero_bias)


def encode_text(text, tp, cfg):
    B, L = text.shape
    x = jnp.take(tp["token_embedding"], text, axis=0)        # embedding gather (glue)
    x = x + tp["positional_embedding"][None]
    # NOTE: PyTorch's Transformer returns (hidden, attn_probs); only hidden is used downstream.
    for p in tp["blocks"]:
        x = residual_block(x, p, cfg["transformer_heads"], mask=tp["attn_mask"])
    # ln_final is per-token -> gather the EOT token first, then fuse LN + text_projection.
    eot = jnp.argmax(text, axis=-1)
    eot_tok = x[jnp.arange(B), eot]                          # [B, W]
    zero_bias = jnp.zeros((cfg["embed_dim"],), jnp.float32)
    return ln_matmul_bias(eot_tok, tp["ln_final_g"], tp["ln_final_b"],
                          tp["text_projection"], zero_bias)


def clip_forward(params, image, text, cfg):
    image_features = encode_image(image, params["visual"], cfg)
    text_features = encode_text(text, params["text"], cfg)
    logit_scale = jnp.exp(params["logit_scale"])
    logits_per_image = clip_logits(image_features, text_features, logit_scale)
    return logits_per_image, logits_per_image.T


# ------------------------- parameters -------------------------

def init_block(key, width, attn_std, proj_std, fc_std):
    k = jax.random.split(key, 4)
    f32 = jnp.float32
    return dict(
        ln1_g=jnp.ones((width,), f32), ln1_b=jnp.zeros((width,), f32),
        w_in=attn_std * jax.random.normal(k[0], (width, 3 * width), f32),
        b_in=jnp.zeros((3 * width,), f32),
        w_out=proj_std * jax.random.normal(k[1], (width, width), f32),
        b_out=jnp.zeros((width,), f32),
        ln2_g=jnp.ones((width,), f32), ln2_b=jnp.zeros((width,), f32),
        w_fc=fc_std * jax.random.normal(k[2], (width, 4 * width), f32),
        b_fc=jnp.zeros((4 * width,), f32),
        w_proj=proj_std * jax.random.normal(k[3], (4 * width, width), f32),
        b_proj=jnp.zeros((width,), f32),
    )


def init_params(key, cfg):
    f32 = jnp.float32
    vw, ps, R = cfg["vision_width"], cfg["vision_patch_size"], cfg["image_resolution"]
    tw, L = cfg["transformer_width"], cfg["context_length"]
    kv, kt = jax.random.split(key, 2)

    n_tok = (R // ps) ** 2 + 1
    v_scale = vw ** -0.5
    v_attn_std = vw ** -0.5
    v_proj_std = (vw ** -0.5) * ((2 * cfg["vision_layers"]) ** -0.5)
    v_fc_std = (2 * vw) ** -0.5
    kvs = jax.random.split(kv, 4 + cfg["vision_layers"])
    visual = dict(
        patch_w=0.02 * jax.random.normal(kvs[0], (3 * ps * ps, vw), f32),  # conv1 weight (no bias)
        patch_b=jnp.zeros((vw,), f32),
        class_embedding=v_scale * jax.random.normal(kvs[1], (vw,), f32),
        positional_embedding=v_scale * jax.random.normal(kvs[2], (n_tok, vw), f32),
        ln_pre_g=jnp.ones((vw,), f32), ln_pre_b=jnp.zeros((vw,), f32),
        blocks=[init_block(kvs[4 + i], vw, v_attn_std, v_proj_std, v_fc_std)
                for i in range(cfg["vision_layers"])],
        ln_post_g=jnp.ones((vw,), f32), ln_post_b=jnp.zeros((vw,), f32),
        proj=v_scale * jax.random.normal(kvs[3], (vw, cfg["embed_dim"]), f32),
    )

    t_attn_std = tw ** -0.5
    t_proj_std = (tw ** -0.5) * ((2 * cfg["transformer_layers"]) ** -0.5)
    t_fc_std = (2 * tw) ** -0.5
    kts = jax.random.split(kt, 3 + cfg["transformer_layers"])
    attn_mask = jnp.triu(jnp.full((L, L), -jnp.inf, f32), 1)   # build_attention_mask()
    text = dict(
        token_embedding=0.02 * jax.random.normal(kts[0], (cfg["vocab_size"], tw), f32),
        positional_embedding=0.01 * jax.random.normal(kts[1], (L, tw), f32),
        blocks=[init_block(kts[3 + i], tw, t_attn_std, t_proj_std, t_fc_std)
                for i in range(cfg["transformer_layers"])],
        ln_final_g=jnp.ones((tw,), f32), ln_final_b=jnp.zeros((tw,), f32),
        text_projection=(tw ** -0.5) * jax.random.normal(kts[2], (tw, cfg["embed_dim"]), f32),
        attn_mask=attn_mask,
    )

    return dict(visual=visual, text=text,
                logit_scale=jnp.array(math.log(1.0 / 0.07), f32))


def prepare_params(params):
    """Cast matmul weights to bf16 once (MXU-friendly, halves weight HBM traffic).
    LayerNorm params, biases, embeddings and the residual stream stay f32."""
    def cast_block(b):
        b = dict(b)
        for k in ("w_in", "w_out", "w_fc", "w_proj"):
            b[k] = b[k].astype(jnp.bfloat16)
        return b

    v = dict(params["visual"])
    t = dict(params["text"])
    v["patch_w"] = v["patch_w"].astype(jnp.bfloat16)
    v["proj"] = v["proj"].astype(jnp.bfloat16)
    v["blocks"] = [cast_block(b) for b in v["blocks"]]
    t["text_projection"] = t["text_projection"].astype(jnp.bfloat16)
    t["blocks"] = [cast_block(b) for b in t["blocks"]]
    return dict(visual=v, text=t, logit_scale=params["logit_scale"])


# ------------------------- main -------------------------

if __name__ == "__main__":
    cfg = dict(
        embed_dim=32,
        image_resolution=16,
        vision_layers=2,
        vision_width=64,
        vision_patch_size=4,
        context_length=8,
        vocab_size=50,
        transformer_width=32,
        transformer_heads=2,
        transformer_layers=2,
    )
    cfg["vision_heads"] = cfg["vision_width"] // 64   # == 1

    key = jax.random.PRNGKey(0)
    kp, ki, kt = jax.random.split(key, 3)
    params = prepare_params(init_params(kp, cfg))

    image = jax.random.normal(
        ki, (2, 3, cfg["image_resolution"], cfg["image_resolution"]), jnp.float32)
    text = jax.random.randint(kt, (2, cfg["context_length"]), 0, cfg["vocab_size"], jnp.int32)

    forward = jax.jit(partial(clip_forward, cfg=cfg))
    logits_per_image, logits_per_text = forward(params, image, text)
    jax.block_until_ready((logits_per_image, logits_per_text))
    assert logits_per_image.shape == (2, 2) and logits_per_text.shape == (2, 2)
    assert bool(jnp.all(jnp.isfinite(logits_per_image)))
    print("KERNEL_OK")
</pallas_src>

<mosaic_0001>
module attributes {stable_mosaic.version = 11 : i64} {
  func.func @_matmul_bias_kernel(%arg0: i32, %arg1: i32, %arg2: memref<32x48xf32, #tpu.memory_space<vmem>>, %arg3: memref<48x64xbf16, #tpu.memory_space<vmem>>, %arg4: memref<1x64xf32, #tpu.memory_space<vmem>>, %arg5: memref<32x64xf32, #tpu.memory_space<vmem>>) attributes {dimension_semantics = [#tpu.dimension_semantics<parallel>, #tpu.dimension_semantics<parallel>], iteration_bounds = array<i64: 1, 1>, scalar_prefetch = 0 : i64, scratch_operands = 0 : i64, tpu.core_type = #tpu.core_type<tc>, window_params = [{transform_indices = @transform_0, window_bounds = array<i64: 32, 48>}, {transform_indices = @transform_1, window_bounds = array<i64: 48, 64>}, {transform_indices = @transform_2, window_bounds = array<i64: 1, 64>}, {transform_indices = @transform_3, window_bounds = array<i64: 32, 64>}]} {
    %c0 = arith.constant 0 : index
    %c0_0 = arith.constant 0 : index
    %0 = vector.load %arg2[%c0, %c0_0] : memref<32x48xf32, #tpu.memory_space<vmem>>, vector<32x48xf32>
    %1 = arith.truncf %0 : vector<32x48xf32> to vector<32x48xbf16>
    %c0_1 = arith.constant 0 : index
    %c0_2 = arith.constant 0 : index
    %2 = vector.load %arg3[%c0_1, %c0_2] : memref<48x64xbf16, #tpu.memory_space<vmem>>, vector<48x64xbf16>
    %cst = arith.constant dense<0.000000e+00> : vector<32x64xf32>
    %3 = tpu.matmul %1, %2, %cst {dimension_numbers = #tpu.dot_dimension_numbers<[1], [0], [0], [1], [0, 0, 1, 1], [], []>} : vector<32x48xbf16>, vector<48x64xbf16>, vector<32x64xf32> -> vector<32x64xf32>
    %c0_3 = arith.constant 0 : index
    %c0_4 = arith.constant 0 : index
    %4 = vector.load %arg4[%c0_3, %c0_4] : memref<1x64xf32, #tpu.memory_space<vmem>>, vector<1x64xf32>
    %5 = vector.broadcast %4 : vector<1x64xf32> to vector<32x64xf32>
    %6 = arith.addf %3, %5 : vector<32x64xf32>
    %c0_5 = arith.constant 0 : index
    %c0_6 = arith.constant 0 : index
    %7 = vector.load %arg5[%c0_5, %c0_6] : memref<32x64xf32, #tpu.memory_space<vmem>>, vector<32x64xf32>
    tpu.vector_store %arg5[%c0_5, %c0_6], %6 {strides = array<i32>} : memref<32x64xf32, #tpu.memory_space<vmem>>, vector<32x64xf32>,
    return
  }
  func.func @transform_0(%arg0: i32, %arg1: i32) -> (i32, i32) {
    %c0_i32 = arith.constant 0 : i32
    %c0_i32_0 = arith.constant 0 : i32
    return %arg0, %c0_i32 : i32, i32
  }
  func.func @transform_1(%arg0: i32, %arg1: i32) -> (i32, i32) {
    %c0_i32 = arith.constant 0 : i32
    %c0_i32_0 = arith.constant 0 : i32
    return %c0_i32, %arg1 : i32, i32
  }
  func.func @transform_2(%arg0: i32, %arg1: i32) -> (i32, i32) {
    %c0_i32 = arith.constant 0 : i32
    %c0_i32_0 = arith.constant 0 : i32
    return %c0_i32, %arg1 : i32, i32
  }
  func.func @transform_3(%arg0: i32, %arg1: i32) -> (i32, i32) {
    %c0_i32 = arith.constant 0 : i32
    return %arg0, %arg1 : i32, i32
  }
}

module attributes {stable_mosaic.version = 11 : i64} {
  func.func @_ln_matmul_bias_kernel(%arg0: i32, %arg1: i32, %arg2: memref<34x64xf32, #tpu.memory_space<vmem>>, %arg3: memref<1x64xf32, #tpu.memory_space<vmem>>, %arg4: memref<1x64xf32, #tpu.memory_space<vmem>>, %arg5: memref<64x192xbf16, #tpu.memory_space<vmem>>, %arg6: memref<1x192xf32, #tpu.memory_space<vmem>>, %arg7: memref<34x192xf32, #tpu.memory_space<vmem>>) attributes {dimension_semantics = [#tpu.dimension_semantics<parallel>, #tpu.dimension_semantics<parallel>], iteration_bounds = array<i64: 1, 1>, scalar_prefetch = 0 : i64, scratch_operands = 0 : i64, tpu.core_type = #tpu.core_type<tc>, window_params = [{transform_indices = @transform_0, window_bounds = array<i64: 34, 64>}, {pipeline_mode = #tpu.pipeline_mode<synchronous>, transform_indices = @transform_1, window_bounds = array<i64: 1, 64>}, {pipeline_mode = #tpu.pipeline_mode<synchronous>, transform_indices = @transform_2, window_bounds = array<i64: 1, 64>}, {transform_indices = @transform_3, window_bounds = array<i64: 64, 192>}, {transform_indices = @transform_4, window_bounds = array<i64: 1, 192>}, {transform_indices = @transform_5, window_bounds = array<i64: 34, 192>}]} {
    %c0 = arith.constant 0 : index
    %c0_0 = arith.constant 0 : index
    %0 = vector.load %arg2[%c0, %c0_0] : memref<34x64xf32, #tpu.memory_space<vmem>>, vector<34x64xf32>
    %cst = arith.constant dense<0.000000e+00> : vector<34xf32>
    %1 = vector.multi_reduction <add>, %0, %cst [1] : vector<34x64xf32> to vector<34xf32>
    %2 = vector.shape_cast %1 : vector<34xf32> to vector<34x1xf32>
    %cst_1 = arith.constant 6.400000e+01 : f32
    %3 = vector.broadcast %cst_1 : f32 to vector<34x1xf32>
    %4 = arith.divf %2, %3 : vector<34x1xf32>
    %5 = vector.broadcast %4 : vector<34x1xf32> to vector<34x64xf32>
    %6 = arith.subf %0, %5 : vector<34x64xf32>
    %7 = arith.mulf %6, %6 : vector<34x64xf32>
    %cst_2 = arith.constant dense<0.000000e+00> : vector<34xf32>
    %8 = vector.multi_reduction <add>, %7, %cst_2 [1] : vector<34x64xf32> to vector<34xf32>
    %9 = vector.shape_cast %8 : vector<34xf32> to vector<34x1xf32>
    %cst_3 = arith.constant 6.400000e+01 : f32
    %10 = vector.broadcast %cst_3 : f32 to vector<34x1xf32>
    %11 = arith.divf %9, %10 : vector<34x1xf32>
    %12 = vector.broadcast %4 : vector<34x1xf32> to vector<34x64xf32>
    %13 = arith.subf %0, %12 : vector<34x64xf32>
    %cst_4 = arith.constant 9.99999974E-6 : f32
    %14 = vector.broadcast %cst_4 : f32 to vector<34x1xf32>
    %15 = arith.addf %11, %14 : vector<34x1xf32>
    %16 = math.rsqrt %15 : vector<34x1xf32>
    %17 = vector.broadcast %16 : vector<34x1xf32> to vector<34x64xf32>
    %18 = arith.mulf %13, %17 : vector<34x64xf32>
    %c0_5 = arith.constant 0 : index
    %c0_6 = arith.constant 0 : index
    %19 = vector.load %arg3[%c0_5, %c0_6] : memref<1x64xf32, #tpu.memory_space<vmem>>, vector<1x64xf32>
    %20 = vector.broadcast %19 : vector<1x64xf32> to vector<34x64xf32>
    %21 = arith.mulf %18, %20 : vector<34x64xf32>
    %c0_7 = arith.constant 0 : index
    %c0_8 = arith.constant 0 : index
    %22 = vector.load %arg4[%c0_7, %c0_8] : memref<1x64xf32, #tpu.memory_space<vmem>>, vector<1x64xf32>
    %23 = vector.broadcast %22 : vector<1x64xf32> to vector<34x64xf32>
    %24 = arith.addf %21, %23 : vector<34x64xf32>
    %25 = arith.truncf %24 : vector<34x64xf32> to vector<34x64xbf16>
    %c0_9 = arith.constant 0 : index
    %c0_10 = arith.constant 0 : index
    %26 = vector.load %arg5[%c0_9, %c0_10] : memref<64x192xbf16, #tpu.memory_space<vmem>>, vector<64x192xbf16>
    %cst_11 = arith.constant dense<0.000000e+00> : vector<34x192xf32>
    %27 = tpu.matmul %25, %26, %cst_11 {dimension_numbers = #tpu.dot_dimension_numbers<[1], [0], [0], [1], [0, 0, 1, 1], [], []>} : vector<34x64xbf16>, vector<64x192xbf16>, vector<34x192xf32> -> vector<34x192xf32>
    %c0_12 = arith.constant 0 : index
    %c0_13 = arith.constant 0 : index
    %28 = vector.load %arg6[%c0_12, %c0_13] : memref<1x192xf32, #tpu.memory_space<vmem>>, vector<1x192xf32>
    %29 = vector.broadcast %28 : vector<1x192xf32> to vector<34x192xf32>
    %30 = arith.addf %27, %29 : vector<34x192xf32>
    %c0_14 = arith.constant 0 : index
    %c0_15 = arith.constant 0 : index
    %31 = vector.load %arg7[%c0_14, %c0_15] : memref<34x192xf32, #tpu.memory_space<vmem>>, vector<34x192xf32>
    tpu.vector_store %arg7[%c0_14, %c0_15], %30 {strides = array<i32>} : memref<34x192xf32, #tpu.memory_space<vmem>>, vector<34x192xf32>,
    return
  }
  func.func @transform_0(%arg0: i32, %arg1: i32) -> (i32, i32) {
    %c0_i32 = arith.constant 0 : i32
    %c0_i32_0 = arith.constant 0 : i32
    return %arg0, %c0_i32 : i32, i32
  }
  func.func @transform_1(%arg0: i32, %arg1: i32) -> (i32, i32) {
    %c0_i32 = arith.constant 0 : i32
    %c0_i32_0 = arith.constant 0 : i32
    %c0_i32_1 = arith.constant 0 : i32
    return %c0_i32, %c0_i32_0 : i32, i32
  }
  func.func @transform_2(%arg0: i32, %arg1: i32) -> (i32, i32) {
    %c0_i32 = arith.constant 0 : i32
    %c0_i32_0 = arith.constant 0 : i32
    %c0_i32_1 = arith.constant 0 : i32
    return %c0_i32, %c0_i32_0 : i32, i32
  }
  func.func @transform_3(%arg0: i32, %arg1: i32) -> (i32, i32) {
    %c0_i32 = arith.constant 0 : i32
    %c0_i32_0 = arith.constant 0 : i32
    return %c0_i32, %arg1 : i32, i32
  }
  func.func @transform_4(%arg0: i32, %arg1: i32) -> (i32, i32) {
    %c0_i32 = arith.constant 0 : i32
    %c0_i32_0 = arith.constant 0 : i32
    return %c0_i32, %arg1 : i32, i32
  }
  func.func @transform_5(%arg0: i32, %arg1: i32) -> (i32, i32) {
    %c0_i32 = arith.constant 0 : i32
    return %arg0, %arg1 : i32, i32
  }
}

module attributes {stable_mosaic.version = 11 : i64} {
  func.func @_layernorm_kernel(%arg0: i32, %arg1: memref<34x64xf32, #tpu.memory_space<vmem>>, %arg2: memref<1x64xf32, #tpu.memory_space<vmem>>, %arg3: memref<1x64xf32, #tpu.memory_space<vmem>>, %arg4: memref<34x64xf32, #tpu.memory_space<vmem>>) attributes {dimension_semantics = [#tpu.dimension_semantics<parallel>], iteration_bounds = array<i64: 1>, scalar_prefetch = 0 : i64, scratch_operands = 0 : i64, tpu.core_type = #tpu.core_type<tc>, window_params = [{transform_indices = @transform_0, window_bounds = array<i64: 34, 64>}, {pipeline_mode = #tpu.pipeline_mode<synchronous>, transform_indices = @transform_1, window_bounds = array<i64: 1, 64>}, {pipeline_mode = #tpu.pipeline_mode<synchronous>, transform_indices = @transform_2, window_bounds = array<i64: 1, 64>}, {transform_indices = @transform_3, window_bounds = array<i64: 34, 64>}]} {
    %c0 = arith.constant 0 : index
    %c0_0 = arith.constant 0 : index
    %0 = vector.load %arg1[%c0, %c0_0] : memref<34x64xf32, #tpu.memory_space<vmem>>, vector<34x64xf32>
    %cst = arith.constant dense<0.000000e+00> : vector<34xf32>
    %1 = vector.multi_reduction <add>, %0, %cst [1] : vector<34x64xf32> to vector<34xf32>
    %2 = vector.shape_cast %1 : vector<34xf32> to vector<34x1xf32>
    %cst_1 = arith.constant 6.400000e+01 : f32
    %3 = vector.broadcast %cst_1 : f32 to vector<34x1xf32>
    %4 = arith.divf %2, %3 : vector<34x1xf32>
    %5 = vector.broadcast %4 : vector<34x1xf32> to vector<34x64xf32>
    %6 = arith.subf %0, %5 : vector<34x64xf32>
    %7 = arith.mulf %6, %6 : vector<34x64xf32>
    %cst_2 = arith.constant dense<0.000000e+00> : vector<34xf32>
    %8 = vector.multi_reduction <add>, %7, %cst_2 [1] : vector<34x64xf32> to vector<34xf32>
    %9 = vector.shape_cast %8 : vector<34xf32> to vector<34x1xf32>
    %cst_3 = arith.constant 6.400000e+01 : f32
    %10 = vector.broadcast %cst_3 : f32 to vector<34x1xf32>
    %11 = arith.divf %9, %10 : vector<34x1xf32>
    %12 = vector.broadcast %4 : vector<34x1xf32> to vector<34x64xf32>
    %13 = arith.subf %0, %12 : vector<34x64xf32>
    %cst_4 = arith.constant 9.99999974E-6 : f32
    %14 = vector.broadcast %cst_4 : f32 to vector<34x1xf32>
    %15 = arith.addf %11, %14 : vector<34x1xf32>
    %16 = math.rsqrt %15 : vector<34x1xf32>
    %17 = vector.broadcast %16 : vector<34x1xf32> to vector<34x64xf32>
    %18 = arith.mulf %13, %17 : vector<34x64xf32>
    %c0_5 = arith.constant 0 : index
    %c0_6 = arith.constant 0 : index
    %19 = vector.load %arg2[%c0_5, %c0_6] : memref<1x64xf32, #tpu.memory_space<vmem>>, vector<1x64xf32>
    %20 = vector.broadcast %19 : vector<1x64xf32> to vector<34x64xf32>
    %21 = arith.mulf %18, %20 : vector<34x64xf32>
    %c0_7 = arith.constant 0 : index
    %c0_8 = arith.constant 0 : index
    %22 = vector.load %arg3[%c0_7, %c0_8] : memref<1x64xf32, #tpu.memory_space<vmem>>, vector<1x64xf32>
    %23 = vector.broadcast %22 : vector<1x64xf32> to vector<34x64xf32>
    %24 = arith.addf %21, %23 : vector<34x64xf32>
    %c0_9 = arith.constant 0 : index
    %c0_10 = arith.constant 0 : index
    %25 = vector.load %arg4[%c0_9, %c0_10] : memref<34x64xf32, #tpu.memory_space<vmem>>, vector<34x64xf32>
    tpu.vector_store %arg4[%c0_9, %c0_10], %24 {strides = array<i32>} : memref<34x64xf32, #tpu.memory_space<vmem>>, vector<34x64xf32>,
    return
  }
  func.func @transform_0(%arg0: i32) -> (i32, i32) {
    %c0_i32 = arith.constant 0 : i32
    %c0_i32_0 = arith.constant 0 : i32
    return %arg0, %c0_i32 : i32, i32
  }
  func.func @transform_1(%arg0: i32) -> (i32, i32) {
    %c0_i32 = arith.constant 0 : i32
    %c0_i32_0 = arith.constant 0 : i32
    %c0_i32_1 = arith.constant 0 : i32
    return %c0_i32, %c0_i32_0 : i32, i32
  }
  func.func @transform_2(%arg0: i32) -> (i32, i32) {
    %c0_i32 = arith.constant 0 : i32
    %c0_i32_0 = arith.constant 0 : i32
    %c0_i32_1 = arith.constant 0 : i32
    return %c0_i32, %c0_i32_0 : i32, i32
  }
  func.func @transform_3(%arg0: i32) -> (i32, i32) {
    %c0_i32 = arith.constant 0 : i32
    %c0_i32_0 = arith.constant 0 : i32
    return %arg0, %c0_i32 : i32, i32
  }
}

module attributes {stable_mosaic.version = 11 : i64} {
  func.func @_mha_kernel(%arg0: i32, %arg1: memref<1x17x192xf32, #tpu.memory_space<vmem>>, %arg2: memref<1x17x64xf32, #tpu.memory_space<vmem>>) attributes {dimension_semantics = [#tpu.dimension_semantics<parallel>], iteration_bounds = array<i64: 2>, scalar_prefetch = 0 : i64, scratch_operands = 0 : i64, tpu.core_type = #tpu.core_type<tc>, window_params = [{transform_indices = @transform_0, window_bounds = array<i64: 1, 17, 192>}, {transform_indices = @transform_1, window_bounds = array<i64: 1, 17, 64>}]} {
    %c0 = arith.constant 0 : index
    %c0_0 = arith.constant 0 : index
    %c0_1 = arith.constant 0 : index
    %0 = vector.load %arg1[%c0, %c0_0, %c0_1] : memref<1x17x192xf32, #tpu.memory_space<vmem>>, vector<1x17x64xf32>
    %1 = vector.shape_cast %0 : vector<1x17x64xf32> to vector<17x64xf32>
    %cst = arith.constant 1.250000e-01 : f32
    %2 = vector.broadcast %cst : f32 to vector<17x64xf32>
    %3 = arith.mulf %1, %2 : vector<17x64xf32>
    %c0_2 = arith.constant 0 : index
    %c0_3 = arith.constant 0 : index
    %c64 = arith.constant 64 : index
    %4 = vector.load %arg1[%c0_2, %c0_3, %c64] : memref<1x17x192xf32, #tpu.memory_space<vmem>>, vector<1x17x64xf32>
    %5 = vector.shape_cast %4 : vector<1x17x64xf32> to vector<17x64xf32>
    %c0_4 = arith.constant 0 : index
    %c0_5 = arith.constant 0 : index
    %c128 = arith.constant 128 : index
    %6 = vector.load %arg1[%c0_4, %c0_5, %c128] : memref<1x17x192xf32, #tpu.memory_space<vmem>>, vector<1x17x64xf32>
    %7 = vector.shape_cast %6 : vector<1x17x64xf32> to vector<17x64xf32>
    %8 = arith.truncf %3 : vector<17x64xf32> to vector<17x64xbf16>
    %9 = arith.truncf %5 : vector<17x64xf32> to vector<17x64xbf16>
    %cst_6 = arith.constant dense<0.000000e+00> : vector<17x17xf32>
    %10 = tpu.matmul %8, %9, %cst_6 {dimension_numbers = #tpu.dot_dimension_numbers<[1], [1], [0], [0], [0, 0, 1, 0], [], []>} : vector<17x64xbf16>, vector<17x64xbf16>, vector<17x17xf32> -> vector<17x17xf32>
    %cst_7 = arith.constant dense<0xFF800000> : vector<17xf32>
    %11 = vector.multi_reduction <maximumf>, %10, %cst_7 [1] : vector<17x17xf32> to vector<17xf32>
    %12 = vector.shape_cast %11 : vector<17xf32> to vector<17x1xf32>
    %13 = vector.broadcast %12 : vector<17x1xf32> to vector<17x17xf32>
    %14 = arith.subf %10, %13 : vector<17x17xf32>
    %15 = math.exp %14 : vector<17x17xf32>
    %cst_8 = arith.constant dense<0.000000e+00> : vector<17xf32>
    %16 = vector.multi_reduction <add>, %15, %cst_8 [1] : vector<17x17xf32> to vector<17xf32>
    %17 = vector.shape_cast %16 : vector<17xf32> to vector<17x1xf32>
    %18 = tpu.reciprocal %17 {approx = true} : vector<17x1xf32> -> vector<17x1xf32>
    %19 = vector.broadcast %18 : vector<17x1xf32> to vector<17x17xf32>
    %20 = arith.mulf %15, %19 : vector<17x17xf32>
    %21 = arith.truncf %20 : vector<17x17xf32> to vector<17x17xbf16>
    %22 = arith.truncf %7 : vector<17x64xf32> to vector<17x64xbf16>
    %cst_9 = arith.constant dense<0.000000e+00> : vector<17x64xf32>
    %23 = tpu.matmul %21, %22, %cst_9 {dimension_numbers = #tpu.dot_dimension_numbers<[1], [0], [0], [1], [0, 0, 1, 1], [], []>} : vector<17x17xbf16>, vector<17x64xbf16>, vector<17x64xf32> -> vector<17x64xf32>
    %c0_10 = arith.constant 0 : index
    %c0_11 = arith.constant 0 : index
    %c0_12 = arith.constant 0 : index
    %24 = vector.load %arg2[%c0_10, %c0_11, %c0_12] : memref<1x17x64xf32, #tpu.memory_space<vmem>>, vector<1x17x64xf32>
    %25 = vector.shape_cast %24 : vector<1x17x64xf32> to vector<17x64xf32>
    %26 = vector.shape_cast %23 : vector<17x64xf32> to vector<1x17x64xf32>
    tpu.vector_store %arg2[%c0_10, %c0_11, %c0_12], %26 {strides = array<i32>} : memref<1x17x64xf32, #tpu.memory_space<vmem>>, vector<1x17x64xf32>,
    return
  }
  func.func @transform_0(%arg0: i32) -> (i32, i32, i32) {
    %c0_i32 = arith.constant 0 : i32
    %c0_i32_0 = arith.constant 0 : i32
    %c0_i32_1 = arith.constant 0 : i32
    return %arg0, %c0_i32, %c0_i32_0 : i32, i32, i32
  }
  func.func @transform_1(%arg0: i32) -> (i32, i32, i32) {
    %c0_i32 = arith.constant 0 : i32
    %c0_i32_0 = arith.constant 0 : i32
    %c0_i32_1 = arith.constant 0 : i32
    return %arg0, %c0_i32, %c0_i32_0 : i32, i32, i32
  }
}

module attributes {stable_mosaic.version = 11 : i64} {
  func.func @_matmul_bias_res_kernel(%arg0: i32, %arg1: i32, %arg2: memref<34x64xf32, #tpu.memory_space<vmem>>, %arg3: memref<64x64xbf16, #tpu.memory_space<vmem>>, %arg4: memref<1x64xf32, #tpu.memory_space<vmem>>, %arg5: memref<34x64xf32, #tpu.memory_space<vmem>>, %arg6: memref<34x64xf32, #tpu.memory_space<vmem>>) attributes {dimension_semantics = [#tpu.dimension_semantics<parallel>, #tpu.dimension_semantics<parallel>], iteration_bounds = array<i64: 1, 1>, scalar_prefetch = 0 : i64, scratch_operands = 0 : i64, tpu.core_type = #tpu.core_type<tc>, window_params = [{transform_indices = @transform_0, window_bounds = array<i64: 34, 64>}, {transform_indices = @transform_1, window_bounds = array<i64: 64, 64>}, {transform_indices = @transform_2, window_bounds = array<i64: 1, 64>}, {transform_indices = @transform_3, window_bounds = array<i64: 34, 64>}, {transform_indices = @transform_4, window_bounds = array<i64: 34, 64>}]} {
    %c0 = arith.constant 0 : index
    %c0_0 = arith.constant 0 : index
    %0 = vector.load %arg2[%c0, %c0_0] : memref<34x64xf32, #tpu.memory_space<vmem>>, vector<34x64xf32>
    %1 = arith.truncf %0 : vector<34x64xf32> to vector<34x64xbf16>
    %c0_1 = arith.constant 0 : index
    %c0_2 = arith.constant 0 : index
    %2 = vector.load %arg3[%c0_1, %c0_2] : memref<64x64xbf16, #tpu.memory_space<vmem>>, vector<64x64xbf16>
    %cst = arith.constant dense<0.000000e+00> : vector<34x64xf32>
    %3 = tpu.matmul %1, %2, %cst {dimension_numbers = #tpu.dot_dimension_numbers<[1], [0], [0], [1], [0, 0, 1, 1], [], []>} : vector<34x64xbf16>, vector<64x64xbf16>, vector<34x64xf32> -> vector<34x64xf32>
    %c0_3 = arith.constant 0 : index
    %c0_4 = arith.constant 0 : index
    %4 = vector.load %arg4[%c0_3, %c0_4] : memref<1x64xf32, #tpu.memory_space<vmem>>, vector<1x64xf32>
    %5 = vector.broadcast %4 : vector<1x64xf32> to vector<34x64xf32>
    %6 = arith.addf %3, %5 : vector<34x64xf32>
    %c0_5 = arith.constant 0 : index
    %c0_6 = arith.constant 0 : index
    %7 = vector.load %arg5[%c0_5, %c0_6] : memref<34x64xf32, #tpu.memory_space<vmem>>, vector<34x64xf32>
    %8 = arith.addf %6, %7 : vector<34x64xf32>
    %c0_7 = arith.constant 0 : index
    %c0_8 = arith.constant 0 : index
    %9 = vector.load %arg6[%c0_7, %c0_8] : memref<34x64xf32, #tpu.memory_space<vmem>>, vector<34x64xf32>
    tpu.vector_store %arg6[%c0_7, %c0_8], %8 {strides = array<i32>} : memref<34x64xf32, #tpu.memory_space<vmem>>, vector<34x64xf32>,
    return
  }
  func.func @transform_0(%arg0: i32, %arg1: i32) -> (i32, i32) {
    %c0_i32 = arith.constant 0 : i32
    %c0_i32_0 = arith.constant 0 : i32
    return %arg0, %c0_i32 : i32, i32
  }
  func.func @transform_1(%arg0: i32, %arg1: i32) -> (i32, i32) {
    %c0_i32 = arith.constant 0 : i32
    %c0_i32_0 = arith.constant 0 : i32
    return %c0_i32, %arg1 : i32, i32
  }
  func.func @transform_2(%arg0: i32, %arg1: i32) -> (i32, i32) {
    %c0_i32 = arith.constant 0 : i32
    %c0_i32_0 = arith.constant 0 : i32
    return %c0_i32, %arg1 : i32, i32
  }
  func.func @transform_3(%arg0: i32, %arg1: i32) -> (i32, i32) {
    %c0_i32 = arith.constant 0 : i32
    return %arg0, %arg1 : i32, i32
  }
  func.func @transform_4(%arg0: i32, %arg1: i32) -> (i32, i32) {
    %c0_i32 = arith.constant 0 : i32
    return %arg0, %arg1 : i32, i32
  }
}

module attributes {stable_mosaic.version = 11 : i64} {
  func.func @_ln_mlp_res_kernel(%arg0: i32, %arg1: memref<34x64xf32, #tpu.memory_space<vmem>>, %arg2: memref<1x64xf32, #tpu.memory_space<vmem>>, %arg3: memref<1x64xf32, #tpu.memory_space<vmem>>, %arg4: memref<64x256xbf16, #tpu.memory_space<vmem>>, %arg5: memref<1x256xf32, #tpu.memory_space<vmem>>, %arg6: memref<256x64xbf16, #tpu.memory_space<vmem>>, %arg7: memref<1x64xf32, #tpu.memory_space<vmem>>, %arg8: memref<34x64xf32, #tpu.memory_space<vmem>>) attributes {dimension_semantics = [#tpu.dimension_semantics<parallel>], iteration_bounds = array<i64: 1>, scalar_prefetch = 0 : i64, scratch_operands = 0 : i64, tpu.core_type = #tpu.core_type<tc>, window_params = [{transform_indices = @transform_0, window_bounds = array<i64: 34, 64>}, {pipeline_mode = #tpu.pipeline_mode<synchronous>, transform_indices = @transform_1, window_bounds = array<i64: 1, 64>}, {pipeline_mode = #tpu.pipeline_mode<synchronous>, transform_indices = @transform_2, window_bounds = array<i64: 1, 64>}, {pipeline_mode = #tpu.pipeline_mode<synchronous>, transform_indices = @transform_3, window_bounds = array<i64: 64, 256>}, {pipeline_mode = #tpu.pipeline_mode<synchronous>, transform_indices = @transform_4, window_bounds = array<i64: 1, 256>}, {pipeline_mode = #tpu.pipeline_mode<synchronous>, transform_indices = @transform_5, window_bounds = array<i64: 256, 64>}, {pipeline_mode = #tpu.pipeline_mode<synchronous>, transform_indices = @transform_6, window_bounds = array<i64: 1, 64>}, {transform_indices = @transform_7, window_bounds = array<i64: 34, 64>}]} {
    %c0 = arith.constant 0 : index
    %c0_0 = arith.constant 0 : index
    %0 = vector.load %arg1[%c0, %c0_0] : memref<34x64xf32, #tpu.memory_space<vmem>>, vector<34x64xf32>
    %cst = arith.constant dense<0.000000e+00> : vector<34xf32>
    %1 = vector.multi_reduction <add>, %0, %cst [1] : vector<34x64xf32> to vector<34xf32>
    %2 = vector.shape_cast %1 : vector<34xf32> to vector<34x1xf32>
    %cst_1 = arith.constant 6.400000e+01 : f32
    %3 = vector.broadcast %cst_1 : f32 to vector<34x1xf32>
    %4 = arith.divf %2, %3 : vector<34x1xf32>
    %5 = vector.broadcast %4 : vector<34x1xf32> to vector<34x64xf32>
    %6 = arith.subf %0, %5 : vector<34x64xf32>
    %7 = arith.mulf %6, %6 : vector<34x64xf32>
    %cst_2 = arith.constant dense<0.000000e+00> : vector<34xf32>
    %8 = vector.multi_reduction <add>, %7, %cst_2 [1] : vector<34x64xf32> to vector<34xf32>
    %9 = vector.shape_cast %8 : vector<34xf32> to vector<34x1xf32>
    %cst_3 = arith.constant 6.400000e+01 : f32
    %10 = vector.broadcast %cst_3 : f32 to vector<34x1xf32>
    %11 = arith.divf %9, %10 : vector<34x1xf32>
    %12 = vector.broadcast %4 : vector<34x1xf32> to vector<34x64xf32>
    %13 = arith.subf %0, %12 : vector<34x64xf32>
    %cst_4 = arith.constant 9.99999974E-6 : f32
    %14 = vector.broadcast %cst_4 : f32 to vector<34x1xf32>
    %15 = arith.addf %11, %14 : vector<34x1xf32>
    %16 = math.rsqrt %15 : vector<34x1xf32>
    %17 = vector.broadcast %16 : vector<34x1xf32> to vector<34x64xf32>
    %18 = arith.mulf %13, %17 : vector<34x64xf32>
    %c0_5 = arith.constant 0 : index
    %c0_6 = arith.constant 0 : index
    %19 = vector.load %arg2[%c0_5, %c0_6] : memref<1x64xf32, #tpu.memory_space<vmem>>, vector<1x64xf32>
    %20 = vector.broadcast %19 : vector<1x64xf32> to vector<34x64xf32>
    %21 = arith.mulf %18, %20 : vector<34x64xf32>
    %c0_7 = arith.constant 0 : index
    %c0_8 = arith.constant 0 : index
    %22 = vector.load %arg3[%c0_7, %c0_8] : memref<1x64xf32, #tpu.memory_space<vmem>>, vector<1x64xf32>
    %23 = vector.broadcast %22 : vector<1x64xf32> to vector<34x64xf32>
    %24 = arith.addf %21, %23 : vector<34x64xf32>
    %25 = arith.truncf %24 : vector<34x64xf32> to vector<34x64xbf16>
    %c0_9 = arith.constant 0 : index
    %c0_10 = arith.constant 0 : index
    %26 = vector.load %arg4[%c0_9, %c0_10] : memref<64x256xbf16, #tpu.memory_space<vmem>>, vector<64x256xbf16>
    %cst_11 = arith.constant dense<0.000000e+00> : vector<34x256xf32>
    %27 = tpu.matmul %25, %26, %cst_11 {dimension_numbers = #tpu.dot_dimension_numbers<[1], [0], [0], [1], [0, 0, 1, 1], [], []>} : vector<34x64xbf16>, vector<64x256xbf16>, vector<34x256xf32> -> vector<34x256xf32>
    %c0_12 = arith.constant 0 : index
    %c0_13 = arith.constant 0 : index
    %28 = vector.load %arg5[%c0_12, %c0_13] : memref<1x256xf32, #tpu.memory_space<vmem>>, vector<1x256xf32>
    %29 = vector.broadcast %28 : vector<1x256xf32> to vector<34x256xf32>
    %30 = arith.addf %27, %29 : vector<34x256xf32>
    %cst_14 = arith.constant 1.702000e+00 : f32
    %31 = vector.broadcast %cst_14 : f32 to vector<34x256xf32>
    %32 = arith.mulf %31, %30 : vector<34x256xf32>
    %33 = arith.negf %32 : vector<34x256xf32>
    %34 = math.exp %33 : vector<34x256xf32>
    %cst_15 = arith.constant 1.000000e+00 : f32
    %35 = vector.broadcast %cst_15 : f32 to vector<34x256xf32>
    %36 = arith.addf %35, %34 : vector<34x256xf32>
    %37 = arith.divf %35, %36 : vector<34x256xf32>
    %38 = arith.mulf %30, %37 : vector<34x256xf32>
    %39 = arith.truncf %38 : vector<34x256xf32> to vector<34x256xbf16>
    %c0_16 = arith.constant 0 : index
    %c0_17 = arith.constant 0 : index
    %40 = vector.load %arg6[%c0_16, %c0_17] : memref<256x64xbf16, #tpu.memory_space<vmem>>, vector<256x64xbf16>
    %cst_18 = arith.constant dense<0.000000e+00> : vector<34x64xf32>
    %41 = tpu.matmul %39, %40, %cst_18 {dimension_numbers = #tpu.dot_dimension_numbers<[1], [0], [0], [1], [0, 0, 1, 1], [], []>} : vector<34x256xbf16>, vector<256x64xbf16>, vector<34x64xf32> -> vector<34x64xf32>
    %c0_19 = arith.constant 0 : index
    %c0_20 = arith.constant 0 : index
    %42 = vector.load %arg7[%c0_19, %c0_20] : memref<1x64xf32, #tpu.memory_space<vmem>>, vector<1x64xf32>
    %43 = vector.broadcast %42 : vector<1x64xf32> to vector<34x64xf32>
    %44 = arith.addf %41, %43 : vector<34x64xf32>
    %45 = arith.addf %0, %44 : vector<34x64xf32>
    %c0_21 = arith.constant 0 : index
    %c0_22 = arith.constant 0 : index
    %46 = vector.load %arg8[%c0_21, %c0_22] : memref<34x64xf32, #tpu.memory_space<vmem>>, vector<34x64xf32>
    tpu.vector_store %arg8[%c0_21, %c0_22], %45 {strides = array<i32>} : memref<34x64xf32, #tpu.memory_space<vmem>>, vector<34x64xf32>,
    return
  }
  func.func @transform_0(%arg0: i32) -> (i32, i32) {
    %c0_i32 = arith.constant 0 : i32
    %c0_i32_0 = arith.constant 0 : i32
    return %arg0, %c0_i32 : i32, i32
  }
  func.func @transform_1(%arg0: i32) -> (i32, i32) {
    %c0_i32 = arith.constant 0 : i32
    %c0_i32_0 = arith.constant 0 : i32
    %c0_i32_1 = arith.constant 0 : i32
    return %c0_i32, %c0_i32_0 : i32, i32
  }
  func.func @transform_2(%arg0: i32) -> (i32, i32) {
    %c0_i32 = arith.constant 0 : i32
    %c0_i32_0 = arith.constant 0 : i32
    %c0_i32_1 = arith.constant 0 : i32
    return %c0_i32, %c0_i32_0 : i32, i32
  }
  func.func @transform_3(%arg0: i32) -> (i32, i32) {
    %c0_i32 = arith.constant 0 : i32
    %c0_i32_0 = arith.constant 0 : i32
    %c0_i32_1 = arith.constant 0 : i32
    return %c0_i32, %c0_i32_0 : i32, i32
  }
  func.func @transform_4(%arg0: i32) -> (i32, i32) {
    %c0_i32 = arith.constant 0 : i32
    %c0_i32_0 = arith.constant 0 : i32
    %c0_i32_1 = arith.constant 0 : i32
    return %c0_i32, %c0_i32_0 : i32, i32
  }
  func.func @transform_5(%arg0: i32) -> (i32, i32) {
    %c0_i32 = arith.constant 0 : i32
    %c0_i32_0 = arith.constant 0 : i32
    %c0_i32_1 = arith.constant 0 : i32
    return %c0_i32, %c0_i32_0 : i32, i32
  }
  func.func @transform_6(%arg0: i32) -> (i32, i32) {
    %c0_i32 = arith.constant 0 : i32
    %c0_i32_0 = arith.constant 0 : i32
    %c0_i32_1 = arith.constant 0 : i32
    return %c0_i32, %c0_i32_0 : i32, i32
  }
  func.func @transform_7(%arg0: i32) -> (i32, i32) {
    %c0_i32 = arith.constant 0 : i32
    %c0_i32_0 = arith.constant 0 : i32
    return %arg0, %c0_i32 : i32, i32
  }
}

module attributes {stable_mosaic.version = 11 : i64} {
  func.func @_ln_matmul_bias_kernel(%arg0: i32, %arg1: i32, %arg2: memref<2x64xf32, #tpu.memory_space<vmem>>, %arg3: memref<1x64xf32, #tpu.memory_space<vmem>>, %arg4: memref<1x64xf32, #tpu.memory_space<vmem>>, %arg5: memref<64x32xbf16, #tpu.memory_space<vmem>>, %arg6: memref<1x32xf32, #tpu.memory_space<vmem>>, %arg7: memref<2x32xf32, #tpu.memory_space<vmem>>) attributes {dimension_semantics = [#tpu.dimension_semantics<parallel>, #tpu.dimension_semantics<parallel>], iteration_bounds = array<i64: 1, 1>, scalar_prefetch = 0 : i64, scratch_operands = 0 : i64, tpu.core_type = #tpu.core_type<tc>, window_params = [{transform_indices = @transform_0, window_bounds = array<i64: 2, 64>}, {pipeline_mode = #tpu.pipeline_mode<synchronous>, transform_indices = @transform_1, window_bounds = array<i64: 1, 64>}, {pipeline_mode = #tpu.pipeline_mode<synchronous>, transform_indices = @transform_2, window_bounds = array<i64: 1, 64>}, {transform_indices = @transform_3, window_bounds = array<i64: 64, 32>}, {transform_indices = @transform_4, window_bounds = array<i64: 1, 32>}, {transform_indices = @transform_5, window_bounds = array<i64: 2, 32>}]} {
    %c0 = arith.constant 0 : index
    %c0_0 = arith.constant 0 : index
    %0 = vector.load %arg2[%c0, %c0_0] : memref<2x64xf32, #tpu.memory_space<vmem>>, vector<2x64xf32>
    %cst = arith.constant dense<0.000000e+00> : vector<2xf32>
    %1 = vector.multi_reduction <add>, %0, %cst [1] : vector<2x64xf32> to vector<2xf32>
    %2 = vector.shape_cast %1 : vector<2xf32> to vector<2x1xf32>
    %cst_1 = arith.constant 6.400000e+01 : f32
    %3 = vector.broadcast %cst_1 : f32 to vector<2x1xf32>
    %4 = arith.divf %2, %3 : vector<2x1xf32>
    %5 = vector.broadcast %4 : vector<2x1xf32> to vector<2x64xf32>
    %6 = arith.subf %0, %5 : vector<2x64xf32>
    %7 = arith.mulf %6, %6 : vector<2x64xf32>
    %cst_2 = arith.constant dense<0.000000e+00> : vector<2xf32>
    %8 = vector.multi_reduction <add>, %7, %cst_2 [1] : vector<2x64xf32> to vector<2xf32>
    %9 = vector.shape_cast %8 : vector<2xf32> to vector<2x1xf32>
    %cst_3 = arith.constant 6.400000e+01 : f32
    %10 = vector.broadcast %cst_3 : f32 to vector<2x1xf32>
    %11 = arith.divf %9, %10 : vector<2x1xf32>
    %12 = vector.broadcast %4 : vector<2x1xf32> to vector<2x64xf32>
    %13 = arith.subf %0, %12 : vector<2x64xf32>
    %cst_4 = arith.constant 9.99999974E-6 : f32
    %14 = vector.broadcast %cst_4 : f32 to vector<2x1xf32>
    %15 = arith.addf %11, %14 : vector<2x1xf32>
    %16 = math.rsqrt %15 : vector<2x1xf32>
    %17 = vector.broadcast %16 : vector<2x1xf32> to vector<2x64xf32>
    %18 = arith.mulf %13, %17 : vector<2x64xf32>
    %c0_5 = arith.constant 0 : index
    %c0_6 = arith.constant 0 : index
    %19 = vector.load %arg3[%c0_5, %c0_6] : memref<1x64xf32, #tpu.memory_space<vmem>>, vector<1x64xf32>
    %20 = vector.broadcast %19 : vector<1x64xf32> to vector<2x64xf32>
    %21 = arith.mulf %18, %20 : vector<2x64xf32>
    %c0_7 = arith.constant 0 : index
    %c0_8 = arith.constant 0 : index
    %22 = vector.load %arg4[%c0_7, %c0_8] : memref<1x64xf32, #tpu.memory_space<vmem>>, vector<1x64xf32>
    %23 = vector.broadcast %22 : vector<1x64xf32> to vector<2x64xf32>
    %24 = arith.addf %21, %23 : vector<2x64xf32>
    %25 = arith.truncf %24 : vector<2x64xf32> to vector<2x64xbf16>
    %c0_9 = arith.constant 0 : index
    %c0_10 = arith.constant 0 : index
    %26 = vector.load %arg5[%c0_9, %c0_10] : memref<64x32xbf16, #tpu.memory_space<vmem>>, vector<64x32xbf16>
    %cst_11 = arith.constant dense<0.000000e+00> : vector<2x32xf32>
    %27 = tpu.matmul %25, %26, %cst_11 {dimension_numbers = #tpu.dot_dimension_numbers<[1], [0], [0], [1], [0, 0, 1, 1], [], []>} : vector<2x64xbf16>, vector<64x32xbf16>, vector<2x32xf32> -> vector<2x32xf32>
    %c0_12 = arith.constant 0 : index
    %c0_13 = arith.constant 0 : index
    %28 = vector.load %arg6[%c0_12, %c0_13] : memref<1x32xf32, #tpu.memory_space<vmem>>, vector<1x32xf32>
    %29 = vector.broadcast %28 : vector<1x32xf32> to vector<2x32xf32>
    %30 = arith.addf %27, %29 : vector<2x32xf32>
    %c0_14 = arith.constant 0 : index
    %c0_15 = arith.constant 0 : index
    %31 = vector.load %arg7[%c0_14, %c0_15] : memref<2x32xf32, #tpu.memory_space<vmem>>, vector<2x32xf32>
    tpu.vector_store %arg7[%c0_14, %c0_15], %30 {strides = array<i32>} : memref<2x32xf32, #tpu.memory_space<vmem>>, vector<2x32xf32>,
    return
  }
  func.func @transform_0(%arg0: i32, %arg1: i32) -> (i32, i32) {
    %c0_i32 = arith.constant 0 : i32
    %c0_i32_0 = arith.constant 0 : i32
    return %arg0, %c0_i32 : i32, i32
  }
  func.func @transform_1(%arg0: i32, %arg1: i32) -> (i32, i32) {
    %c0_i32 = arith.constant 0 : i32
    %c0_i32_0 = arith.constant 0 : i32
    %c0_i32_1 = arith.constant 0 : i32
    return %c0_i32, %c0_i32_0 : i32, i32
  }
  func.func @transform_2(%arg0: i32, %arg1: i32) -> (i32, i32) {
    %c0_i32 = arith.constant 0 : i32
    %c0_i32_0 = arith.constant 0 : i32
    %c0_i32_1 = arith.constant 0 : i32
    return %c0_i32, %c0_i32_0 : i32, i32
  }
  func.func @transform_3(%arg0: i32, %arg1: i32) -> (i32, i32) {
    %c0_i32 = arith.constant 0 : i32
    %c0_i32_0 = arith.constant 0 : i32
    return %c0_i32, %arg1 : i32, i32
  }
  func.func @transform_4(%arg0: i32, %arg1: i32) -> (i32, i32) {
    %c0_i32 = arith.constant 0 : i32
    %c0_i32_0 = arith.constant 0 : i32
    return %c0_i32, %arg1 : i32, i32
  }
  func.func @transform_5(%arg0: i32, %arg1: i32) -> (i32, i32) {
    %c0_i32 = arith.constant 0 : i32
    return %arg0, %arg1 : i32, i32
  }
}

module attributes {stable_mosaic.version = 11 : i64} {
  func.func @_mha_kernel(%arg0: i32, %arg1: memref<1x8x96xf32, #tpu.memory_space<vmem>>, %arg2: memref<8x8xf32, #tpu.memory_space<vmem>>, %arg3: memref<1x8x32xf32, #tpu.memory_space<vmem>>) attributes {dimension_semantics = [#tpu.dimension_semantics<parallel>], iteration_bounds = array<i64: 2>, scalar_prefetch = 0 : i64, scratch_operands = 0 : i64, tpu.core_type = #tpu.core_type<tc>, window_params = [{transform_indices = @transform_0, window_bounds = array<i64: 1, 8, 96>}, {pipeline_mode = #tpu.pipeline_mode<synchronous>, transform_indices = @transform_1, window_bounds = array<i64: 8, 8>}, {transform_indices = @transform_2, window_bounds = array<i64: 1, 8, 32>}]} {
    %c0 = arith.constant 0 : index
    %c0_0 = arith.constant 0 : index
    %c0_1 = arith.constant 0 : index
    %0 = vector.load %arg1[%c0, %c0_0, %c0_1] : memref<1x8x96xf32, #tpu.memory_space<vmem>>, vector<1x8x16xf32>
    %1 = vector.shape_cast %0 : vector<1x8x16xf32> to vector<8x16xf32>
    %cst = arith.constant 2.500000e-01 : f32
    %2 = vector.broadcast %cst : f32 to vector<8x16xf32>
    %3 = arith.mulf %1, %2 : vector<8x16xf32>
    %c0_2 = arith.constant 0 : index
    %c0_3 = arith.constant 0 : index
    %c32 = arith.constant 32 : index
    %4 = vector.load %arg1[%c0_2, %c0_3, %c32] : memref<1x8x96xf32, #tpu.memory_space<vmem>>, vector<1x8x16xf32>
    %5 = vector.shape_cast %4 : vector<1x8x16xf32> to vector<8x16xf32>
    %c0_4 = arith.constant 0 : index
    %c0_5 = arith.constant 0 : index
    %c64 = arith.constant 64 : index
    %6 = vector.load %arg1[%c0_4, %c0_5, %c64] : memref<1x8x96xf32, #tpu.memory_space<vmem>>, vector<1x8x16xf32>
    %7 = vector.shape_cast %6 : vector<1x8x16xf32> to vector<8x16xf32>
    %8 = arith.truncf %3 : vector<8x16xf32> to vector<8x16xbf16>
    %9 = arith.truncf %5 : vector<8x16xf32> to vector<8x16xbf16>
    %cst_6 = arith.constant dense<0.000000e+00> : vector<8x8xf32>
    %10 = tpu.matmul %8, %9, %cst_6 {dimension_numbers = #tpu.dot_dimension_numbers<[1], [1], [0], [0], [0, 0, 1, 0], [], []>} : vector<8x16xbf16>, vector<8x16xbf16>, vector<8x8xf32> -> vector<8x8xf32>
    %c0_7 = arith.constant 0 : index
    %c0_8 = arith.constant 0 : index
    %11 = vector.load %arg2[%c0_7, %c0_8] : memref<8x8xf32, #tpu.memory_space<vmem>>, vector<8x8xf32>
    %12 = arith.addf %10, %11 : vector<8x8xf32>
    %cst_9 = arith.constant dense<0xFF800000> : vector<8xf32>
    %13 = vector.multi_reduction <maximumf>, %12, %cst_9 [1] : vector<8x8xf32> to vector<8xf32>
    %14 = vector.shape_cast %13 : vector<8xf32> to vector<8x1xf32>
    %15 = vector.broadcast %14 : vector<8x1xf32> to vector<8x8xf32>
    %16 = arith.subf %12, %15 : vector<8x8xf32>
    %17 = math.exp %16 : vector<8x8xf32>
    %cst_10 = arith.constant dense<0.000000e+00> : vector<8xf32>
    %18 = vector.multi_reduction <add>, %17, %cst_10 [1] : vector<8x8xf32> to vector<8xf32>
    %19 = vector.shape_cast %18 : vector<8xf32> to vector<8x1xf32>
    %20 = tpu.reciprocal %19 {approx = true} : vector<8x1xf32> -> vector<8x1xf32>
    %21 = vector.broadcast %20 : vector<8x1xf32> to vector<8x8xf32>
    %22 = arith.mulf %17, %21 : vector<8x8xf32>
    %23 = arith.truncf %22 : vector<8x8xf32> to vector<8x8xbf16>
    %24 = arith.truncf %7 : vector<8x16xf32> to vector<8x16xbf16>
    %cst_11 = arith.constant dense<0.000000e+00> : vector<8x16xf32>
    %25 = tpu.matmul %23, %24, %cst_11 {dimension_numbers = #tpu.dot_dimension_numbers<[1], [0], [0], [1], [0, 0, 1, 1], [], []>} : vector<8x8xbf16>, vector<8x16xbf16>, vector<8x16xf32> -> vector<8x16xf32>
    %c0_12 = arith.constant 0 : index
    %c0_13 = arith.constant 0 : index
    %c16 = arith.constant 16 : index
    %26 = vector.load %arg1[%c0_12, %c0_13, %c16] : memref<1x8x96xf32, #tpu.memory_space<vmem>>, vector<1x8x16xf32>
    %27 = vector.shape_cast %26 : vector<1x8x16xf32> to vector<8x16xf32>
    %cst_14 = arith.constant 2.500000e-01 : f32
    %28 = vector.broadcast %cst_14 : f32 to vector<8x16xf32>
    %29 = arith.mulf %27, %28 : vector<8x16xf32>
    %c0_15 = arith.constant 0 : index
    %c0_16 = arith.constant 0 : index
    %c48 = arith.constant 48 : index
    %30 = vector.load %arg1[%c0_15, %c0_16, %c48] : memref<1x8x96xf32, #tpu.memory_space<vmem>>, vector<1x8x16xf32>
    %31 = vector.shape_cast %30 : vector<1x8x16xf32> to vector<8x16xf32>
    %c0_17 = arith.constant 0 : index
    %c0_18 = arith.constant 0 : index
    %c80 = arith.constant 80 : index
    %32 = vector.load %arg1[%c0_17, %c0_18, %c80] : memref<1x8x96xf32, #tpu.memory_space<vmem>>, vector<1x8x16xf32>
    %33 = vector.shape_cast %32 : vector<1x8x16xf32> to vector<8x16xf32>
    %34 = arith.truncf %29 : vector<8x16xf32> to vector<8x16xbf16>
    %35 = arith.truncf %31 : vector<8x16xf32> to vector<8x16xbf16>
    %cst_19 = arith.constant dense<0.000000e+00> : vector<8x8xf32>
    %36 = tpu.matmul %34, %35, %cst_19 {dimension_numbers = #tpu.dot_dimension_numbers<[1], [1], [0], [0], [0, 0, 1, 0], [], []>} : vector<8x16xbf16>, vector<8x16xbf16>, vector<8x8xf32> -> vector<8x8xf32>
    %c0_20 = arith.constant 0 : index
    %c0_21 = arith.constant 0 : index
    %37 = vector.load %arg2[%c0_20, %c0_21] : memref<8x8xf32, #tpu.memory_space<vmem>>, vector<8x8xf32>
    %38 = arith.addf %36, %37 : vector<8x8xf32>
    %cst_22 = arith.constant dense<0xFF800000> : vector<8xf32>
    %39 = vector.multi_reduction <maximumf>, %38, %cst_22 [1] : vector<8x8xf32> to vector<8xf32>
    %40 = vector.shape_cast %39 : vector<8xf32> to vector<8x1xf32>
    %41 = vector.broadcast %40 : vector<8x1xf32> to vector<8x8xf32>
    %42 = arith.subf %38, %41 : vector<8x8xf32>
    %43 = math.exp %42 : vector<8x8xf32>
    %cst_23 = arith.constant dense<0.000000e+00> : vector<8xf32>
    %44 = vector.multi_reduction <add>, %43, %cst_23 [1] : vector<8x8xf32> to vector<8xf32>
    %45 = vector.shape_cast %44 : vector<8xf32> to vector<8x1xf32>
    %46 = tpu.reciprocal %45 {approx = true} : vector<8x1xf32> -> vector<8x1xf32>
    %47 = vector.broadcast %46 : vector<8x1xf32> to vector<8x8xf32>
    %48 = arith.mulf %43, %47 : vector<8x8xf32>
    %49 = arith.truncf %48 : vector<8x8xf32> to vector<8x8xbf16>
    %50 = arith.truncf %33 : vector<8x16xf32> to vector<8x16xbf16>
    %cst_24 = arith.constant dense<0.000000e+00> : vector<8x16xf32>
    %51 = tpu.matmul %49, %50, %cst_24 {dimension_numbers = #tpu.dot_dimension_numbers<[1], [0], [0], [1], [0, 0, 1, 1], [], []>} : vector<8x8xbf16>, vector<8x16xbf16>, vector<8x16xf32> -> vector<8x16xf32>
    %52 = tpu.concatenate %25, %51 in 1 : vector<8x16xf32>, vector<8x16xf32> -> vector<8x32xf32>
    %c0_25 = arith.constant 0 : index
    %c0_26 = arith.constant 0 : index
    %c0_27 = arith.constant 0 : index
    %53 = vector.load %arg3[%c0_25, %c0_26, %c0_27] : memref<1x8x32xf32, #tpu.memory_space<vmem>>, vector<1x8x32xf32>
    %54 = vector.shape_cast %53 : vector<1x8x32xf32> to vector<8x32xf32>
    %55 = vector.shape_cast %52 : vector<8x32xf32> to vector<1x8x32xf32>
    tpu.vector_store %arg3[%c0_25, %c0_26, %c0_27], %55 {strides = array<i32>} : memref<1x8x32xf32, #tpu.memory_space<vmem>>, vector<1x8x32xf32>,
    return
  }
  func.func @transform_0(%arg0: i32) -> (i32, i32, i32) {
    %c0_i32 = arith.constant 0 : i32
    %c0_i32_0 = arith.constant 0 : i32
    %c0_i32_1 = arith.constant 0 : i32
    return %arg0, %c0_i32, %c0_i32_0 : i32, i32, i32
  }
  func.func @transform_1(%arg0: i32) -> (i32, i32) {
    %c0_i32 = arith.constant 0 : i32
    %c0_i32_0 = arith.constant 0 : i32
    %c0_i32_1 = arith.constant 0 : i32
    return %c0_i32, %c0_i32_0 : i32, i32
  }
  func.func @transform_2(%arg0: i32) -> (i32, i32, i32) {
    %c0_i32 = arith.constant 0 : i32
    %c0_i32_0 = arith.constant 0 : i32
    %c0_i32_1 = arith.constant 0 : i32
    return %arg0, %c0_i32, %c0_i32_0 : i32, i32, i32
  }
}

module attributes {stable_mosaic.version = 11 : i64} {
  func.func @_ln_matmul_bias_kernel(%arg0: i32, %arg1: i32, %arg2: memref<16x32xf32, #tpu.memory_space<vmem>>, %arg3: memref<1x32xf32, #tpu.memory_space<vmem>>, %arg4: memref<1x32xf32, #tpu.memory_space<vmem>>, %arg5: memref<32x96xbf16, #tpu.memory_space<vmem>>, %arg6: memref<1x96xf32, #tpu.memory_space<vmem>>, %arg7: memref<16x96xf32, #tpu.memory_space<vmem>>) attributes {dimension_semantics = [#tpu.dimension_semantics<parallel>, #tpu.dimension_semantics<parallel>], iteration_bounds = array<i64: 1, 1>, scalar_prefetch = 0 : i64, scratch_operands = 0 : i64, tpu.core_type = #tpu.core_type<tc>, window_params = [{transform_indices = @transform_0, window_bounds = array<i64: 16, 32>}, {pipeline_mode = #tpu.pipeline_mode<synchronous>, transform_indices = @transform_1, window_bounds = array<i64: 1, 32>}, {pipeline_mode = #tpu.pipeline_mode<synchronous>, transform_indices = @transform_2, window_bounds = array<i64: 1, 32>}, {transform_indices = @transform_3, window_bounds = array<i64: 32, 96>}, {transform_indices = @transform_4, window_bounds = array<i64: 1, 96>}, {transform_indices = @transform_5, window_bounds = array<i64: 16, 96>}]} {
    %c0 = arith.constant 0 : index
    %c0_0 = arith.constant 0 : index
    %0 = vector.load %arg2[%c0, %c0_0] : memref<16x32xf32, #tpu.memory_space<vmem>>, vector<16x32xf32>
    %cst = arith.constant dense<0.000000e+00> : vector<16xf32>
    %1 = vector.multi_reduction <add>, %0, %cst [1] : vector<16x32xf32> to vector<16xf32>
    %2 = vector.shape_cast %1 : vector<16xf32> to vector<16x1xf32>
    %cst_1 = arith.constant 3.200000e+01 : f32
    %3 = vector.broadcast %cst_1 : f32 to vector<16x1xf32>
    %4 = arith.divf %2, %3 : vector<16x1xf32>
    %5 = vector.broadcast %4 : vector<16x1xf32> to vector<16x32xf32>
    %6 = arith.subf %0, %5 : vector<16x32xf32>
    %7 = arith.mulf %6, %6 : vector<16x32xf32>
    %cst_2 = arith.constant dense<0.000000e+00> : vector<16xf32>
    %8 = vector.multi_reduction <add>, %7, %cst_2 [1] : vector<16x32xf32> to vector<16xf32>
    %9 = vector.shape_cast %8 : vector<16xf32> to vector<16x1xf32>
    %cst_3 = arith.constant 3.200000e+01 : f32
    %10 = vector.broadcast %cst_3 : f32 to vector<16x1xf32>
    %11 = arith.divf %9, %10 : vector<16x1xf32>
    %12 = vector.broadcast %4 : vector<16x1xf32> to vector<16x32xf32>
    %13 = arith.subf %0, %12 : vector<16x32xf32>
    %cst_4 = arith.constant 9.99999974E-6 : f32
    %14 = vector.broadcast %cst_4 : f32 to vector<16x1xf32>
    %15 = arith.addf %11, %14 : vector<16x1xf32>
    %16 = math.rsqrt %15 : vector<16x1xf32>
    %17 = vector.broadcast %16 : vector<16x1xf32> to vector<16x32xf32>
    %18 = arith.mulf %13, %17 : vector<16x32xf32>
    %c0_5 = arith.constant 0 : index
    %c0_6 = arith.constant 0 : index
    %19 = vector.load %arg3[%c0_5, %c0_6] : memref<1x32xf32, #tpu.memory_space<vmem>>, vector<1x32xf32>
    %20 = vector.broadcast %19 : vector<1x32xf32> to vector<16x32xf32>
    %21 = arith.mulf %18, %20 : vector<16x32xf32>
    %c0_7 = arith.constant 0 : index
    %c0_8 = arith.constant 0 : index
    %22 = vector.load %arg4[%c0_7, %c0_8] : memref<1x32xf32, #tpu.memory_space<vmem>>, vector<1x32xf32>
    %23 = vector.broadcast %22 : vector<1x32xf32> to vector<16x32xf32>
    %24 = arith.addf %21, %23 : vector<16x32xf32>
    %25 = arith.truncf %24 : vector<16x32xf32> to vector<16x32xbf16>
    %c0_9 = arith.constant 0 : index
    %c0_10 = arith.constant 0 : index
    %26 = vector.load %arg5[%c0_9, %c0_10] : memref<32x96xbf16, #tpu.memory_space<vmem>>, vector<32x96xbf16>
    %cst_11 = arith.constant dense<0.000000e+00> : vector<16x96xf32>
    %27 = tpu.matmul %25, %26, %cst_11 {dimension_numbers = #tpu.dot_dimension_numbers<[1], [0], [0], [1], [0, 0, 1, 1], [], []>} : vector<16x32xbf16>, vector<32x96xbf16>, vector<16x96xf32> -> vector<16x96xf32>
    %c0_12 = arith.constant 0 : index
    %c0_13 = arith.constant 0 : index
    %28 = vector.load %arg6[%c0_12, %c0_13] : memref<1x96xf32, #tpu.memory_space<vmem>>, vector<1x96xf32>
    %29 = vector.broadcast %28 : vector<1x96xf32> to vector<16x96xf32>
    %30 = arith.addf %27, %29 : vector<16x96xf32>
    %c0_14 = arith.constant 0 : index
    %c0_15 = arith.constant 0 : index
    %31 = vector.load %arg7[%c0_14, %c0_15] : memref<16x96xf32, #tpu.memory_space<vmem>>, vector<16x96xf32>
    tpu.vector_store %arg7[%c0_14, %c0_15], %30 {strides = array<i32>} : memref<16x96xf32, #tpu.memory_space<vmem>>, vector<16x96xf32>,
    return
  }
  func.func @transform_0(%arg0: i32, %arg1: i32) -> (i32, i32) {
    %c0_i32 = arith.constant 0 : i32
    %c0_i32_0 = arith.constant 0 : i32
    return %arg0, %c0_i32 : i32, i32
  }
  func.func @transform_1(%arg0: i32, %arg1: i32) -> (i32, i32) {
    %c0_i32 = arith.constant 0 : i32
    %c0_i32_0 = arith.constant 0 : i32
    %c0_i32_1 = arith.constant 0 : i32
    return %c0_i32, %c0_i32_0 : i32, i32
  }
  func.func @transform_2(%arg0: i32, %arg1: i32) -> (i32, i32) {
    %c0_i32 = arith.constant 0 : i32
    %c0_i32_0 = arith.constant 0 : i32
    %c0_i32_1 = arith.constant 0 : i32
    return %c0_i32, %c0_i32_0 : i32, i32
  }
  func.func @transform_3(%arg0: i32, %arg1: i32) -> (i32, i32) {
    %c0_i32 = arith.constant 0 : i32
    %c0_i32_0 = arith.constant 0 : i32
    return %c0_i32, %arg1 : i32, i32
  }
  func.func @transform_4(%arg0: i32, %arg1: i32) -> (i32, i32) {
    %c0_i32 = arith.constant 0 : i32
    %c0_i32_0 = arith.constant 0 : i32
    return %c0_i32, %arg1 : i32, i32
  }
  func.func @transform_5(%arg0: i32, %arg1: i32) -> (i32, i32) {
    %c0_i32 = arith.constant 0 : i32
    return %arg0, %arg1 : i32, i32
  }
}

module attributes {stable_mosaic.version = 11 : i64} {
  func.func @_matmul_bias_res_kernel(%arg0: i32, %arg1: i32, %arg2: memref<16x32xf32, #tpu.memory_space<vmem>>, %arg3: memref<32x32xbf16, #tpu.memory_space<vmem>>, %arg4: memref<1x32xf32, #tpu.memory_space<vmem>>, %arg5: memref<16x32xf32, #tpu.memory_space<vmem>>, %arg6: memref<16x32xf32, #tpu.memory_space<vmem>>) attributes {dimension_semantics = [#tpu.dimension_semantics<parallel>, #tpu.dimension_semantics<parallel>], iteration_bounds = array<i64: 1, 1>, scalar_prefetch = 0 : i64, scratch_operands = 0 : i64, tpu.core_type = #tpu.core_type<tc>, window_params = [{transform_indices = @transform_0, window_bounds = array<i64: 16, 32>}, {transform_indices = @transform_1, window_bounds = array<i64: 32, 32>}, {transform_indices = @transform_2, window_bounds = array<i64: 1, 32>}, {transform_indices = @transform_3, window_bounds = array<i64: 16, 32>}, {transform_indices = @transform_4, window_bounds = array<i64: 16, 32>}]} {
    %c0 = arith.constant 0 : index
    %c0_0 = arith.constant 0 : index
    %0 = vector.load %arg2[%c0, %c0_0] : memref<16x32xf32, #tpu.memory_space<vmem>>, vector<16x32xf32>
    %1 = arith.truncf %0 : vector<16x32xf32> to vector<16x32xbf16>
    %c0_1 = arith.constant 0 : index
    %c0_2 = arith.constant 0 : index
    %2 = vector.load %arg3[%c0_1, %c0_2] : memref<32x32xbf16, #tpu.memory_space<vmem>>, vector<32x32xbf16>
    %cst = arith.constant dense<0.000000e+00> : vector<16x32xf32>
    %3 = tpu.matmul %1, %2, %cst {dimension_numbers = #tpu.dot_dimension_numbers<[1], [0], [0], [1], [0, 0, 1, 1], [], []>} : vector<16x32xbf16>, vector<32x32xbf16>, vector<16x32xf32> -> vector<16x32xf32>
    %c0_3 = arith.constant 0 : index
    %c0_4 = arith.constant 0 : index
    %4 = vector.load %arg4[%c0_3, %c0_4] : memref<1x32xf32, #tpu.memory_space<vmem>>, vector<1x32xf32>
    %5 = vector.broadcast %4 : vector<1x32xf32> to vector<16x32xf32>
    %6 = arith.addf %3, %5 : vector<16x32xf32>
    %c0_5 = arith.constant 0 : index
    %c0_6 = arith.constant 0 : index
    %7 = vector.load %arg5[%c0_5, %c0_6] : memref<16x32xf32, #tpu.memory_space<vmem>>, vector<16x32xf32>
    %8 = arith.addf %6, %7 : vector<16x32xf32>
    %c0_7 = arith.constant 0 : index
    %c0_8 = arith.constant 0 : index
    %9 = vector.load %arg6[%c0_7, %c0_8] : memref<16x32xf32, #tpu.memory_space<vmem>>, vector<16x32xf32>
    tpu.vector_store %arg6[%c0_7, %c0_8], %8 {strides = array<i32>} : memref<16x32xf32, #tpu.memory_space<vmem>>, vector<16x32xf32>,
    return
  }
  func.func @transform_0(%arg0: i32, %arg1: i32) -> (i32, i32) {
    %c0_i32 = arith.constant 0 : i32
    %c0_i32_0 = arith.constant 0 : i32
    return %arg0, %c0_i32 : i32, i32
  }
  func.func @transform_1(%arg0: i32, %arg1: i32) -> (i32, i32) {
    %c0_i32 = arith.constant 0 : i32
    %c0_i32_0 = arith.constant 0 : i32
    return %c0_i32, %arg1 : i32, i32
  }
  func.func @transform_2(%arg0: i32, %arg1: i32) -> (i32, i32) {
    %c0_i32 = arith.constant 0 : i32
    %c0_i32_0 = arith.constant 0 : i32
    return %c0_i32, %arg1 : i32, i32
  }
  func.func @transform_3(%arg0: i32, %arg1: i32) -> (i32, i32) {
    %c0_i32 = arith.constant 0 : i32
    return %arg0, %arg1 : i32, i32
  }
  func.func @transform_4(%arg0: i32, %arg1: i32) -> (i32, i32) {
    %c0_i32 = arith.constant 0 : i32
    return %arg0, %arg1 : i32, i32
  }
}

module attributes {stable_mosaic.version = 11 : i64} {
  func.func @_ln_mlp_res_kernel(%arg0: i32, %arg1: memref<16x32xf32, #tpu.memory_space<vmem>>, %arg2: memref<1x32xf32, #tpu.memory_space<vmem>>, %arg3: memref<1x32xf32, #tpu.memory_space<vmem>>, %arg4: memref<32x128xbf16, #tpu.memory_space<vmem>>, %arg5: memref<1x128xf32, #tpu.memory_space<vmem>>, %arg6: memref<128x32xbf16, #tpu.memory_space<vmem>>, %arg7: memref<1x32xf32, #tpu.memory_space<vmem>>, %arg8: memref<16x32xf32, #tpu.memory_space<vmem>>) attributes {dimension_semantics = [#tpu.dimension_semantics<parallel>], iteration_bounds = array<i64: 1>, scalar_prefetch = 0 : i64, scratch_operands = 0 : i64, tpu.core_type = #tpu.core_type<tc>, window_params = [{transform_indices = @transform_0, window_bounds = array<i64: 16, 32>}, {pipeline_mode = #tpu.pipeline_mode<synchronous>, transform_indices = @transform_1, window_bounds = array<i64: 1, 32>}, {pipeline_mode = #tpu.pipeline_mode<synchronous>, transform_indices = @transform_2, window_bounds = array<i64: 1, 32>}, {pipeline_mode = #tpu.pipeline_mode<synchronous>, transform_indices = @transform_3, window_bounds = array<i64: 32, 128>}, {pipeline_mode = #tpu.pipeline_mode<synchronous>, transform_indices = @transform_4, window_bounds = array<i64: 1, 128>}, {pipeline_mode = #tpu.pipeline_mode<synchronous>, transform_indices = @transform_5, window_bounds = array<i64: 128, 32>}, {pipeline_mode = #tpu.pipeline_mode<synchronous>, transform_indices = @transform_6, window_bounds = array<i64: 1, 32>}, {transform_indices = @transform_7, window_bounds = array<i64: 16, 32>}]} {
    %c0 = arith.constant 0 : index
    %c0_0 = arith.constant 0 : index
    %0 = vector.load %arg1[%c0, %c0_0] : memref<16x32xf32, #tpu.memory_space<vmem>>, vector<16x32xf32>
    %cst = arith.constant dense<0.000000e+00> : vector<16xf32>
    %1 = vector.multi_reduction <add>, %0, %cst [1] : vector<16x32xf32> to vector<16xf32>
    %2 = vector.shape_cast %1 : vector<16xf32> to vector<16x1xf32>
    %cst_1 = arith.constant 3.200000e+01 : f32
    %3 = vector.broadcast %cst_1 : f32 to vector<16x1xf32>
    %4 = arith.divf %2, %3 : vector<16x1xf32>
    %5 = vector.broadcast %4 : vector<16x1xf32> to vector<16x32xf32>
    %6 = arith.subf %0, %5 : vector<16x32xf32>
    %7 = arith.mulf %6, %6 : vector<16x32xf32>
    %cst_2 = arith.constant dense<0.000000e+00> : vector<16xf32>
    %8 = vector.multi_reduction <add>, %7, %cst_2 [1] : vector<16x32xf32> to vector<16xf32>
    %9 = vector.shape_cast %8 : vector<16xf32> to vector<16x1xf32>
    %cst_3 = arith.constant 3.200000e+01 : f32
    %10 = vector.broadcast %cst_3 : f32 to vector<16x1xf32>
    %11 = arith.divf %9, %10 : vector<16x1xf32>
    %12 = vector.broadcast %4 : vector<16x1xf32> to vector<16x32xf32>
    %13 = arith.subf %0, %12 : vector<16x32xf32>
    %cst_4 = arith.constant 9.99999974E-6 : f32
    %14 = vector.broadcast %cst_4 : f32 to vector<16x1xf32>
    %15 = arith.addf %11, %14 : vector<16x1xf32>
    %16 = math.rsqrt %15 : vector<16x1xf32>
    %17 = vector.broadcast %16 : vector<16x1xf32> to vector<16x32xf32>
    %18 = arith.mulf %13, %17 : vector<16x32xf32>
    %c0_5 = arith.constant 0 : index
    %c0_6 = arith.constant 0 : index
    %19 = vector.load %arg2[%c0_5, %c0_6] : memref<1x32xf32, #tpu.memory_space<vmem>>, vector<1x32xf32>
    %20 = vector.broadcast %19 : vector<1x32xf32> to vector<16x32xf32>
    %21 = arith.mulf %18, %20 : vector<16x32xf32>
    %c0_7 = arith.constant 0 : index
    %c0_8 = arith.constant 0 : index
    %22 = vector.load %arg3[%c0_7, %c0_8] : memref<1x32xf32, #tpu.memory_space<vmem>>, vector<1x32xf32>
    %23 = vector.broadcast %22 : vector<1x32xf32> to vector<16x32xf32>
    %24 = arith.addf %21, %23 : vector<16x32xf32>
    %25 = arith.truncf %24 : vector<16x32xf32> to vector<16x32xbf16>
    %c0_9 = arith.constant 0 : index
    %c0_10 = arith.constant 0 : index
    %26 = vector.load %arg4[%c0_9, %c0_10] : memref<32x128xbf16, #tpu.memory_space<vmem>>, vector<32x128xbf16>
    %cst_11 = arith.constant dense<0.000000e+00> : vector<16x128xf32>
    %27 = tpu.matmul %25, %26, %cst_11 {dimension_numbers = #tpu.dot_dimension_numbers<[1], [0], [0], [1], [0, 0, 1, 1], [], []>} : vector<16x32xbf16>, vector<32x128xbf16>, vector<16x128xf32> -> vector<16x128xf32>
    %c0_12 = arith.constant 0 : index
    %c0_13 = arith.constant 0 : index
    %28 = vector.load %arg5[%c0_12, %c0_13] : memref<1x128xf32, #tpu.memory_space<vmem>>, vector<1x128xf32>
    %29 = vector.broadcast %28 : vector<1x128xf32> to vector<16x128xf32>
    %30 = arith.addf %27, %29 : vector<16x128xf32>
    %cst_14 = arith.constant 1.702000e+00 : f32
    %31 = vector.broadcast %cst_14 : f32 to vector<16x128xf32>
    %32 = arith.mulf %31, %30 : vector<16x128xf32>
    %33 = arith.negf %32 : vector<16x128xf32>
    %34 = math.exp %33 : vector<16x128xf32>
    %cst_15 = arith.constant 1.000000e+00 : f32
    %35 = vector.broadcast %cst_15 : f32 to vector<16x128xf32>
    %36 = arith.addf %35, %34 : vector<16x128xf32>
    %37 = arith.divf %35, %36 : vector<16x128xf32>
    %38 = arith.mulf %30, %37 : vector<16x128xf32>
    %39 = arith.truncf %38 : vector<16x128xf32> to vector<16x128xbf16>
    %c0_16 = arith.constant 0 : index
    %c0_17 = arith.constant 0 : index
    %40 = vector.load %arg6[%c0_16, %c0_17] : memref<128x32xbf16, #tpu.memory_space<vmem>>, vector<128x32xbf16>
    %cst_18 = arith.constant dense<0.000000e+00> : vector<16x32xf32>
    %41 = tpu.matmul %39, %40, %cst_18 {dimension_numbers = #tpu.dot_dimension_numbers<[1], [0], [0], [1], [0, 0, 1, 1], [], []>} : vector<16x128xbf16>, vector<128x32xbf16>, vector<16x32xf32> -> vector<16x32xf32>
    %c0_19 = arith.constant 0 : index
    %c0_20 = arith.constant 0 : index
    %42 = vector.load %arg7[%c0_19, %c0_20] : memref<1x32xf32, #tpu.memory_space<vmem>>, vector<1x32xf32>
    %43 = vector.broadcast %42 : vector<1x32xf32> to vector<16x32xf32>
    %44 = arith.addf %41, %43 : vector<16x32xf32>
    %45 = arith.addf %0, %44 : vector<16x32xf32>
    %c0_21 = arith.constant 0 : index
    %c0_22 = arith.constant 0 : index
    %46 = vector.load %arg8[%c0_21, %c0_22] : memref<16x32xf32, #tpu.memory_space<vmem>>, vector<16x32xf32>
    tpu.vector_store %arg8[%c0_21, %c0_22], %45 {strides = array<i32>} : memref<16x32xf32, #tpu.memory_space<vmem>>, vector<16x32xf32>,
    return
  }
  func.func @transform_0(%arg0: i32) -> (i32, i32) {
    %c0_i32 = arith.constant 0 : i32
    %c0_i32_0 = arith.constant 0 : i32
    return %arg0, %c0_i32 : i32, i32
  }
  func.func @transform_1(%arg0: i32) -> (i32, i32) {
    %c0_i32 = arith.constant 0 : i32
    %c0_i32_0 = arith.constant 0 : i32
    %c0_i32_1 = arith.constant 0 : i32
    return %c0_i32, %c0_i32_0 : i32, i32
  }
  func.func @transform_2(%arg0: i32) -> (i32, i32) {
    %c0_i32 = arith.constant 0 : i32
    %c0_i32_0 = arith.constant 0 : i32
    %c0_i32_1 = arith.constant 0 : i32
    return %c0_i32, %c0_i32_0 : i32, i32
  }
  func.func @transform_3(%arg0: i32) -> (i32, i32) {
    %c0_i32 = arith.constant 0 : i32
    %c0_i32_0 = arith.constant 0 : i32
    %c0_i32_1 = arith.constant 0 : i32
    return %c0_i32, %c0_i32_0 : i32, i32
  }
  func.func @transform_4(%arg0: i32) -> (i32, i32) {
    %c0_i32 = arith.constant 0 : i32
    %c0_i32_0 = arith.constant 0 : i32
    %c0_i32_1 = arith.constant 0 : i32
    return %c0_i32, %c0_i32_0 : i32, i32
  }
  func.func @transform_5(%arg0: i32) -> (i32, i32) {
    %c0_i32 = arith.constant 0 : i32
    %c0_i32_0 = arith.constant 0 : i32
    %c0_i32_1 = arith.constant 0 : i32
    return %c0_i32, %c0_i32_0 : i32, i32
  }
  func.func @transform_6(%arg0: i32) -> (i32, i32) {
    %c0_i32 = arith.constant 0 : i32
    %c0_i32_0 = arith.constant 0 : i32
    %c0_i32_1 = arith.constant 0 : i32
    return %c0_i32, %c0_i32_0 : i32, i32
  }
  func.func @transform_7(%arg0: i32) -> (i32, i32) {
    %c0_i32 = arith.constant 0 : i32
    %c0_i32_0 = arith.constant 0 : i32
    return %arg0, %c0_i32 : i32, i32
  }
}

module attributes {stable_mosaic.version = 11 : i64} {
  func.func @_clip_logits_kernel(%arg0: memref<2x32xf32, #tpu.memory_space<vmem>>, %arg1: memref<2x32xf32, #tpu.memory_space<vmem>>, %arg2: memref<1x1xf32, #tpu.memory_space<vmem>>, %arg3: memref<2x2xf32, #tpu.memory_space<vmem>>) attributes {dimension_semantics = [], scalar_prefetch = 0 : i64, scratch_operands = 0 : i64, tpu.core_type = #tpu.core_type<tc>} {
    %c0 = arith.constant 0 : index
    %c0_0 = arith.constant 0 : index
    %0 = vector.load %arg0[%c0, %c0_0] : memref<2x32xf32, #tpu.memory_space<vmem>>, vector<2x32xf32>
    %c0_1 = arith.constant 0 : index
    %c0_2 = arith.constant 0 : index
    %1 = vector.load %arg1[%c0_1, %c0_2] : memref<2x32xf32, #tpu.memory_space<vmem>>, vector<2x32xf32>
    %2 = arith.mulf %0, %0 : vector<2x32xf32>
    %cst = arith.constant dense<0.000000e+00> : vector<2xf32>
    %3 = vector.multi_reduction <add>, %2, %cst [1] : vector<2x32xf32> to vector<2xf32>
    %4 = vector.shape_cast %3 : vector<2xf32> to vector<2x1xf32>
    %5 = math.rsqrt %4 : vector<2x1xf32>
    %6 = vector.broadcast %5 : vector<2x1xf32> to vector<2x32xf32>
    %7 = arith.mulf %0, %6 : vector<2x32xf32>
    %8 = arith.mulf %1, %1 : vector<2x32xf32>
    %cst_3 = arith.constant dense<0.000000e+00> : vector<2xf32>
    %9 = vector.multi_reduction <add>, %8, %cst_3 [1] : vector<2x32xf32> to vector<2xf32>
    %10 = vector.shape_cast %9 : vector<2xf32> to vector<2x1xf32>
    %11 = math.rsqrt %10 : vector<2x1xf32>
    %12 = vector.broadcast %11 : vector<2x1xf32> to vector<2x32xf32>
    %13 = arith.mulf %1, %12 : vector<2x32xf32>
    %cst_4 = arith.constant dense<0.000000e+00> : vector<2x2xf32>
    %14 = tpu.matmul %7, %13, %cst_4 {dimension_numbers = #tpu.dot_dimension_numbers<[1], [1], [0], [0], [0, 0, 1, 0], [], []>} : vector<2x32xf32>, vector<2x32xf32>, vector<2x2xf32> -> vector<2x2xf32>
    %c0_5 = arith.constant 0 : index
    %c0_6 = arith.constant 0 : index
    %15 = vector.load %arg2[%c0_5, %c0_6] : memref<1x1xf32, #tpu.memory_space<vmem>>, vector<1x1xf32>
    %16 = vector.broadcast %15 : vector<1x1xf32> to vector<2x2xf32>
    %17 = arith.mulf %14, %16 : vector<2x2xf32>
    %c0_7 = arith.constant 0 : index
    %c0_8 = arith.constant 0 : index
    %18 = vector.load %arg3[%c0_7, %c0_8] : memref<2x2xf32, #tpu.memory_space<vmem>>, vector<2x2xf32>
    tpu.vector_store %arg3[%c0_7, %c0_8], %17 {strides = array<i32>} : memref<2x2xf32, #tpu.memory_space<vmem>>, vector<2x2xf32>,
    return
  }
}

module attributes {stable_mosaic.version = 11 : i64} {
  func.func @_ln_matmul_bias_kernel(%arg0: i32, %arg1: i32, %arg2: memref<2x32xf32, #tpu.memory_space<vmem>>, %arg3: memref<1x32xf32, #tpu.memory_space<vmem>>, %arg4: memref<1x32xf32, #tpu.memory_space<vmem>>, %arg5: memref<32x32xbf16, #tpu.memory_space<vmem>>, %arg6: memref<1x32xf32, #tpu.memory_space<vmem>>, %arg7: memref<2x32xf32, #tpu.memory_space<vmem>>) attributes {dimension_semantics = [#tpu.dimension_semantics<parallel>, #tpu.dimension_semantics<parallel>], iteration_bounds = array<i64: 1, 1>, scalar_prefetch = 0 : i64, scratch_operands = 0 : i64, tpu.core_type = #tpu.core_type<tc>, window_params = [{transform_indices = @transform_0, window_bounds = array<i64: 2, 32>}, {pipeline_mode = #tpu.pipeline_mode<synchronous>, transform_indices = @transform_1, window_bounds = array<i64: 1, 32>}, {pipeline_mode = #tpu.pipeline_mode<synchronous>, transform_indices = @transform_2, window_bounds = array<i64: 1, 32>}, {transform_indices = @transform_3, window_bounds = array<i64: 32, 32>}, {transform_indices = @transform_4, window_bounds = array<i64: 1, 32>}, {transform_indices = @transform_5, window_bounds = array<i64: 2, 32>}]} {
    %c0 = arith.constant 0 : index
    %c0_0 = arith.constant 0 : index
    %0 = vector.load %arg2[%c0, %c0_0] : memref<2x32xf32, #tpu.memory_space<vmem>>, vector<2x32xf32>
    %cst = arith.constant dense<0.000000e+00> : vector<2xf32>
    %1 = vector.multi_reduction <add>, %0, %cst [1] : vector<2x32xf32> to vector<2xf32>
    %2 = vector.shape_cast %1 : vector<2xf32> to vector<2x1xf32>
    %cst_1 = arith.constant 3.200000e+01 : f32
    %3 = vector.broadcast %cst_1 : f32 to vector<2x1xf32>
    %4 = arith.divf %2, %3 : vector<2x1xf32>
    %5 = vector.broadcast %4 : vector<2x1xf32> to vector<2x32xf32>
    %6 = arith.subf %0, %5 : vector<2x32xf32>
    %7 = arith.mulf %6, %6 : vector<2x32xf32>
    %cst_2 = arith.constant dense<0.000000e+00> : vector<2xf32>
    %8 = vector.multi_reduction <add>, %7, %cst_2 [1] : vector<2x32xf32> to vector<2xf32>
    %9 = vector.shape_cast %8 : vector<2xf32> to vector<2x1xf32>
    %cst_3 = arith.constant 3.200000e+01 : f32
    %10 = vector.broadcast %cst_3 : f32 to vector<2x1xf32>
    %11 = arith.divf %9, %10 : vector<2x1xf32>
    %12 = vector.broadcast %4 : vector<2x1xf32> to vector<2x32xf32>
    %13 = arith.subf %0, %12 : vector<2x32xf32>
    %cst_4 = arith.constant 9.99999974E-6 : f32
    %14 = vector.broadcast %cst_4 : f32 to vector<2x1xf32>
    %15 = arith.addf %11, %14 : vector<2x1xf32>
    %16 = math.rsqrt %15 : vector<2x1xf32>
    %17 = vector.broadcast %16 : vector<2x1xf32> to vector<2x32xf32>
    %18 = arith.mulf %13, %17 : vector<2x32xf32>
    %c0_5 = arith.constant 0 : index
    %c0_6 = arith.constant 0 : index
    %19 = vector.load %arg3[%c0_5, %c0_6] : memref<1x32xf32, #tpu.memory_space<vmem>>, vector<1x32xf32>
    %20 = vector.broadcast %19 : vector<1x32xf32> to vector<2x32xf32>
    %21 = arith.mulf %18, %20 : vector<2x32xf32>
    %c0_7 = arith.constant 0 : index
    %c0_8 = arith.constant 0 : index
    %22 = vector.load %arg4[%c0_7, %c0_8] : memref<1x32xf32, #tpu.memory_space<vmem>>, vector<1x32xf32>
    %23 = vector.broadcast %22 : vector<1x32xf32> to vector<2x32xf32>
    %24 = arith.addf %21, %23 : vector<2x32xf32>
    %25 = arith.truncf %24 : vector<2x32xf32> to vector<2x32xbf16>
    %c0_9 = arith.constant 0 : index
    %c0_10 = arith.constant 0 : index
    %26 = vector.load %arg5[%c0_9, %c0_10] : memref<32x32xbf16, #tpu.memory_space<vmem>>, vector<32x32xbf16>
    %cst_11 = arith.constant dense<0.000000e+00> : vector<2x32xf32>
    %27 = tpu.matmul %25, %26, %cst_11 {dimension_numbers = #tpu.dot_dimension_numbers<[1], [0], [0], [1], [0, 0, 1, 1], [], []>} : vector<2x32xbf16>, vector<32x32xbf16>, vector<2x32xf32> -> vector<2x32xf32>
    %c0_12 = arith.constant 0 : index
    %c0_13 = arith.constant 0 : index
    %28 = vector.load %arg6[%c0_12, %c0_13] : memref<1x32xf32, #tpu.memory_space<vmem>>, vector<1x32xf32>
    %29 = vector.broadcast %28 : vector<1x32xf32> to vector<2x32xf32>
    %30 = arith.addf %27, %29 : vector<2x32xf32>
    %c0_14 = arith.constant 0 : index
    %c0_15 = arith.constant 0 : index
    %31 = vector.load %arg7[%c0_14, %c0_15] : memref<2x32xf32, #tpu.memory_space<vmem>>, vector<2x32xf32>
    tpu.vector_store %arg7[%c0_14, %c0_15], %30 {strides = array<i32>} : memref<2x32xf32, #tpu.memory_space<vmem>>, vector<2x32xf32>,
    return
  }
  func.func @transform_0(%arg0: i32, %arg1: i32) -> (i32, i32) {
    %c0_i32 = arith.constant 0 : i32
    %c0_i32_0 = arith.constant 0 : i32
    return %arg0, %c0_i32 : i32, i32
  }
  func.func @transform_1(%arg0: i32, %arg1: i32) -> (i32, i32) {
    %c0_i32 = arith.constant 0 : i32
    %c0_i32_0 = arith.constant 0 : i32
    %c0_i32_1 = arith.constant 0 : i32
    return %c0_i32, %c0_i32_0 : i32, i32
  }
  func.func @transform_2(%arg0: i32, %arg1: i32) -> (i32, i32) {
    %c0_i32 = arith.constant 0 : i32
    %c0_i32_0 = arith.constant 0 : i32
    %c0_i32_1 = arith.constant 0 : i32
    return %c0_i32, %c0_i32_0 : i32, i32
  }
  func.func @transform_3(%arg0: i32, %arg1: i32) -> (i32, i32) {
    %c0_i32 = arith.constant 0 : i32
    %c0_i32_0 = arith.constant 0 : i32
    return %c0_i32, %arg1 : i32, i32
  }
  func.func @transform_4(%arg0: i32, %arg1: i32) -> (i32, i32) {
    %c0_i32 = arith.constant 0 : i32
    %c0_i32_0 = arith.constant 0 : i32
    return %c0_i32, %arg1 : i32, i32
  }
  func.func @transform_5(%arg0: i32, %arg1: i32) -> (i32, i32) {
    %c0_i32 = arith.constant 0 : i32
    return %arg0, %arg1 : i32, i32
  }
}

</mosaic_0001>

<llo_original>
// kernel: clip_forward.23
$region0: #{clip_forward.23}
  #allocation0 [shape = 'u32[]', space=smem, size = 0x4, offset = 0x4, fixed_abs, tag = 'smem constant byte address 0x4 - core index']
  #allocation1 [shape = 'u32[72,128]{1,0:T(1,128)}', space=vmem, size = 0x9000, scoped, tag = 'internal scratch']
  %s0 = inlined_call_operand.vmem [shape: f32[34,64], index: 0, kind: input, shape index: {}]
  %s1 = inlined_call_operand.vmem [shape: f32[1,64], index: 1, kind: input, shape index: {}]
  %s2 = inlined_call_operand.vmem [shape: f32[1,64], index: 2, kind: input, shape index: {}]
  %s3 = inlined_call_operand.vmem [shape: bf16[64,192], index: 3, kind: input, shape index: {}]
  %s4 = inlined_call_operand.vmem [shape: f32[1,192], index: 4, kind: input, shape index: {}]
  %s5 = inlined_call_operand.vmem [shape: f32[34,192], index: 5, kind: output, shape index: {}]
  %s6 = sld [smem:[#allocation0]]
  $region30: #{clip_forward.23} parent=0
    _
  %s8 = ssub.s32 1, %s6
  %s9 = scalar_select 0, %s8, %s6
  // Predicated region
  $region2: #{clip_forward.23} parent=0 // pred_check
    _
  $region3: #{clip_forward.23} parent=0 // pred_check_branch
    %11 = sbr.rel (0) target = $region5
  $region4: #{clip_forward.23} parent=0 // pred_region
    _
  $region5: #{clip_forward.23} parent=0 // pred_fallthru
    _
  // Predicated region
  $region6: #{clip_forward.23} parent=0 // pred_check
    _
  $region7: #{clip_forward.23} parent=0 // pred_check_branch
    %13 = sbr.rel (0) target = $region9
  $region8: #{clip_forward.23} parent=0 // pred_region
    _
  $region9: #{clip_forward.23} parent=0 // pred_fallthru
    _
  // Predicated region
  $region10: #{clip_forward.23} parent=0 // pred_check
    _
  $region11: #{clip_forward.23} parent=0 // pred_check_branch
    %15 = sbr.rel (0) target = $region13
  $region12: #{clip_forward.23} parent=0 // pred_region
    _
  $region13: #{clip_forward.23} parent=0 // pred_fallthru
    _
  // Predicated region
  $region14: #{clip_forward.23} parent=0 // pred_check
    _
  $region15: #{clip_forward.23} parent=0 // pred_check_branch
    %17 = sbr.rel (0) target = $region17
  $region16: #{clip_forward.23} parent=0 // pred_region
    _
  $region17: #{clip_forward.23} parent=0 // pred_fallthru
    _
  // Predicated region
  $region18: #{clip_forward.23} parent=0 // pred_check
    _
  $region19: #{clip_forward.23} parent=0 // pred_check_branch
    %19 = sbr.rel (0) target = $region21
  $region20: #{clip_forward.23} parent=0 // pred_region
    _
  $region21: #{clip_forward.23} parent=0 // pred_fallthru
    _
  %v21 = vld [vmem:[%s0] sm:$0xff]
  %v22 = vld [vmem:[%s0 + $0x8] sm:$0xff]
  %v23 = vld [vmem:[%s0 + $0x10] sm:$0xff]
  %v24 = vld [vmem:[%s0 + $0x18] sm:$0xff]
  %v25 = vld [vmem:[%s0 + $0x20] sm:$0x3]
  %vm26 = vcmask 523264
  %v27 = vsel %vm26, %v21, 0.0
  %28 = vadd.xlane.f32.xlu0 %v27
  %v29 = vpop.xlane.xlu0 %28
  %v30 = vsel %vm26, %v22, 0.0
  %31 = vadd.xlane.f32.xlu0 %v30
  %v32 = vpop.xlane.xlu0 %31
  %v33 = vsel %vm26, %v23, 0.0
  %34 = vadd.xlane.f32.xlu0 %v33
  %v35 = vpop.xlane.xlu0 %34
  %v36 = vsel %vm26, %v24, 0.0
  %37 = vadd.xlane.f32.xlu0 %v36
  %v38 = vpop.xlane.xlu0 %37
  %vm39 = vcmask 517120
  %v40 = vsel %vm39, %v25, 0.0
  %41 = vadd.xlane.f32.xlu0 %v40
  %v42 = vpop.xlane.xlu0 %41
  %v43 = vrcp.pop 64.0
  %v44 = vmul.f32 64.0, %v43
  %v45 = vsub.f32 1.0, %v44
  %v46 = vmul.f32 %v43, %v45
  %v47 = vadd.f32 %v43, %v46
  %vm48 = vweird.f32 %v43
  %v49 = vsel %vm48, %v43, %v47
  %v50 = vmul.f32 %v29, %v49
  %v51 = vmul.f32 %v32, %v49
  %v52 = vmul.f32 %v35, %v49
  %v53 = vmul.f32 %v38, %v49
  %v54 = vmul.f32 %v42, %v49
  %v55 = vsub.f32 %v21, %v50
  %v56 = vsub.f32 %v22, %v51
  %v57 = vsub.f32 %v23, %v52
  %v58 = vsub.f32 %v24, %v53
  %v59 = vsub.f32 %v25, %v54
  %v60 = vmul.f32 %v55, %v55
  %v61 = vmul.f32 %v56, %v56
  %v62 = vmul.f32 %v57, %v57
  %v63 = vmul.f32 %v58, %v58
  %v64 = vmul.f32 %v59, %v59
  %v65 = vsel %vm26, %v60, 0.0
  %66 = vadd.xlane.f32.xlu0 %v65
  %v67 = vpop.xlane.xlu0 %66
  %v68 = vsel %vm26, %v61, 0.0
  %69 = vadd.xlane.f32.xlu0 %v68
  %v70 = vpop.xlane.xlu0 %69
  %v71 = vsel %vm26, %v62, 0.0
  %72 = vadd.xlane.f32.xlu0 %v71
  %v73 = vpop.xlane.xlu0 %72
  %v74 = vsel %vm26, %v63, 0.0
  %75 = vadd.xlane.f32.xlu0 %v74
  %v76 = vpop.xlane.xlu0 %75
  %v77 = vsel %vm39, %v64, 0.0
  %78 = vadd.xlane.f32.xlu0 %v77
  %v79 = vpop.xlane.xlu0 %78
  %v80 = vmul.f32 %v67, %v49
  %v81 = vmul.f32 %v70, %v49
  %v82 = vmul.f32 %v73, %v49
  %v83 = vmul.f32 %v76, %v49
  %v84 = vmul.f32 %v79, %v49
  %v85 = vadd.f32 %v80, 1e-05
  %v86 = vadd.f32 %v81, 1e-05
  %v87 = vadd.f32 %v82, 1e-05
  %v88 = vadd.f32 %v83, 1e-05
  %v89 = vadd.f32 %v84, 1e-05
  %v90 = vrsqrt.pop %v85
  %v91 = vmul.f32 %v90, %v85
  %v92 = vmul.f32 %v91, %v90
  %v93 = vmul.f32 0.5, %v92
  %v94 = vsub.f32 1.5, %v93
  %v95 = vmul.f32 %v90, %v94
  %vm96 = vweird.f32 %v85
  %vm97 = vweird.f32 %v90
  %vm98 = vmor %vm96, %vm97
  %v99 = vsel %vm98, %v90, %v95
  %v100 = vrsqrt.pop %v86
  %v101 = vmul.f32 %v100, %v86
  %v102 = vmul.f32 %v101, %v100
  %v103 = vmul.f32 0.5, %v102
  %v104 = vsub.f32 1.5, %v103
  %v105 = vmul.f32 %v100, %v104
  %vm106 = vweird.f32 %v86
  %vm107 = vweird.f32 %v100
  %vm108 = vmor %vm106, %vm107
  %v109 = vsel %vm108, %v100, %v105
  %v110 = vrsqrt.pop %v87
  %v111 = vmul.f32 %v110, %v87
  %v112 = vmul.f32 %v111, %v110
  %v113 = vmul.f32 0.5, %v112
  %v114 = vsub.f32 1.5, %v113
  %v115 = vmul.f32 %v110, %v114
  %vm116 = vweird.f32 %v87
  %vm117 = vweird.f32 %v110
  %vm118 = vmor %vm116, %vm117
  %v119 = vsel %vm118, %v110, %v115
  %v120 = vrsqrt.pop %v88
  %v121 = vmul.f32 %v120, %v88
  %v122 = vmul.f32 %v121, %v120
  %v123 = vmul.f32 0.5, %v122
  %v124 = vsub.f32 1.5, %v123
  %v125 = vmul.f32 %v120, %v124
  %vm126 = vweird.f32 %v88
  %vm127 = vweird.f32 %v120
  %vm128 = vmor %vm126, %vm127
  %v129 = vsel %vm128, %v120, %v125
  %v130 = vrsqrt.pop %v89
  %v131 = vmul.f32 %v130, %v89
  %v132 = vmul.f32 %v131, %v130
  %v133 = vmul.f32 0.5, %v132
  %v134 = vsub.f32 1.5, %v133
  %v135 = vmul.f32 %v130, %v134
  %vm136 = vweird.f32 %v89
  %vm137 = vweird.f32 %v130
  %vm138 = vmor %vm136, %vm137
  %v139 = vsel %vm138, %v130, %v135
  %v140 = vmul.f32 %v55, %v99
  %v141 = vmul.f32 %v56, %v109
  %v142 = vmul.f32 %v57, %v119
  %v143 = vmul.f32 %v58, %v129
  %v144 = vmul.f32 %v59, %v139
  %v145 = vld [vmem:[%s1] sm:$0x1]
  %v147 = vperm.slane %v145, 0
  %v149 = vmul.f32 %v140, %v147
  %v150 = vmul.f32 %v141, %v147
  %v151 = vmul.f32 %v142, %v147
  %v152 = vmul.f32 %v143, %v147
  %v153 = vmul.f32 %v144, %v147
  %v154 = vld [vmem:[%s2] sm:$0x1]
  %v156 = vperm.slane %v154, 0
  %v158 = vadd.f32 %v149, %v156
  %v159 = vadd.f32 %v150, %v156
  %v160 = vadd.f32 %v151, %v156
  %v161 = vadd.f32 %v152, %v156
  %v162 = vadd.f32 %v153, %v156
  %v163 = vpack.c.bf16 %v159, %v158
  %v164 = vpack.c.bf16 %v161, %v160
  %v165 = vpack.c.bf16 %v162, %v162
  %v166 = vld [vmem:[%s3] sm:$0xff]
  %v167 = vld [vmem:[%s3 + $0x8] sm:$0xff]
  %v168 = vld [vmem:[%s3 + $0x10] sm:$0xff]
  %v169 = vld [vmem:[%s3 + $0x18] sm:$0xff]
  %v170 = vld [vmem:[%s3 + $0x20] sm:$0xff]
  %v171 = vld [vmem:[%s3 + $0x28] sm:$0xff]
  %v172 = vld [vmem:[%s3 + $0x30] sm:$0xff]
  %v173 = vld [vmem:[%s3 + $0x38] sm:$0xff]
  %v174 = vld [vmem:[%s4] sm:$0x3]
  %v176 = vperm.slane %v174, 0
  %v177 = vperm.slane %v174, 1
  %v188 = vunpack.c.l.b16 %v166
  %v189 = vunpack.c.h.b16 %v166
  %v190 = vunpack.c.l.b16 %v167
  %v191 = vunpack.c.h.b16 %v167
  %v192 = vunpack.c.l.b16 %v168
  %v193 = vunpack.c.h.b16 %v168
  %v194 = vunpack.c.l.b16 %v169
  %v195 = vunpack.c.h.b16 %v169
  %v196 = vunpack.c.l.b16 %v170
  %v197 = vunpack.c.h.b16 %v170
  %v198 = vunpack.c.l.b16 %v171
  %v199 = vunpack.c.h.b16 %v171
  %v200 = vunpack.c.l.b16 %v172
  %v201 = vunpack.c.h.b16 %v172
  %v202 = vunpack.c.l.b16 %v173
  %v203 = vunpack.c.h.b16 %v173
  %v204 = vpack.c.b16 %v190, %v188
  %v205 = vpack.c.b16 %v191, %v189
  %v206 = vpack.c.b16 %v194, %v192
  %v207 = vpack.c.b16 %v195, %v193
  %v208 = vpack.c.b16 %v198, %v196
  %v209 = vpack.c.b16 %v199, %v197
  %v210 = vpack.c.b16 %v202, %v200
  %v211 = vpack.c.b16 %v203, %v201
  %v221 = vsel %vm26, %v163, 0
  %v224 = vsel %vm26, %v164, 0
  %v227 = vsel %vm26, %v165, 0
  %229 = vmatpush.bf16.msra.mxu0 0
  %230 = vmatpush.bf16.msra.mxu0 0
  %231 = vmatpush.bf16.msra.mxu0 0
  %232 = vmatpush.bf16.msra.mxu0 0
  %233 = vmatpush.bf16.msra.mxu0 %v210
  %234 = vmatpush.bf16.msra.mxu0 %v208
  %235 = vmatpush.bf16.msra.mxu0 %v206
  %236 = vmatpush.bf16.msra.mxu0 %v204
  %237 = vmatmul.bf16.gmra.mxu0 %v221
  %v238 = vpop.f32.mrf.mxu0
  %v239 = vadd.f32 %v176, %v238
  %v240 = vpop.f32.mrf.mxu0
  %v241 = vadd.f32 %v176, %v240
  %242 = vmatmul.bf16.gmra.mxu0 %v224
  %v243 = vpop.f32.mrf.mxu0
  %v244 = vadd.f32 %v176, %v243
  %v245 = vpop.f32.mrf.mxu0
  %v246 = vadd.f32 %v176, %v245
  %247 = vmatmul.bf16.gmra.mxu0 %v227
  %v248 = vpop.f32.mrf.mxu0
  %v249 = vadd.f32 %v176, %v248
  %v250 = vpop.f32.mrf.mxu0
  %251 = vdwg.mxu0
  %252 = vmatpush.bf16.msra.mxu0 0
  %253 = vmatpush.bf16.msra.mxu0 0
  %254 = vmatpush.bf16.msra.mxu0 0
  %255 = vmatpush.bf16.msra.mxu0 0
  %256 = vmatpush.bf16.msra.mxu0 %v211
  %257 = vmatpush.bf16.msra.mxu0 %v209
  %258 = vmatpush.bf16.msra.mxu0 %v207
  %259 = vmatpush.bf16.msra.mxu0 %v205
  %260 = vmatmul.bf16.gmra.mxu0 %v221
  %v261 = vpop.f32.mrf.mxu0
  %v262 = vadd.f32 %v177, %v261
  %v263 = vpop.f32.mrf.mxu0
  %v264 = vadd.f32 %v177, %v263
  %265 = vmatmul.bf16.gmra.mxu0 %v224
  %v266 = vpop.f32.mrf.mxu0
  %v267 = vadd.f32 %v177, %v266
  %v268 = vpop.f32.mrf.mxu0
  %v269 = vadd.f32 %v177, %v268
  %270 = vmatmul.bf16.gmra.mxu0 %v227
  %v271 = vpop.f32.mrf.mxu0
  %v272 = vadd.f32 %v177, %v271
  %v273 = vpop.f32.mrf.mxu0
  %274 = vdwg.mxu0
  %275 = vst [vmem:[%s5] sm:$0xff] %v239
  %276 = vst.msk [vmem:[%s5 + $0x8] sm:$0xff] %vm26, %v262
  %277 = vst [vmem:[%s5 + $0x10] sm:$0xff] %v241
  %278 = vst.msk [vmem:[%s5 + $0x18] sm:$0xff] %vm26, %v264
  %279 = vst [vmem:[%s5 + $0x20] sm:$0xff] %v244
  %280 = vst.msk [vmem:[%s5 + $0x28] sm:$0xff] %vm26, %v267
  %281 = vst [vmem:[%s5 + $0x30] sm:$0xff] %v246
  %282 = vst.msk [vmem:[%s5 + $0x38] sm:$0xff] %vm26, %v269
  %283 = vst [vmem:[%s5 + $0x40] sm:$0x3] %v249
  %284 = vst.msk [vmem:[%s5 + $0x48] sm:$0x3] %vm39, %v272
  // Predicated region
  $region22: #{clip_forward.23} parent=0 // pred_check
    _
  $region23: #{clip_forward.23} parent=0 // pred_check_branch
    %286 = sbr.rel (0) target = $region25
  $region24: #{clip_forward.23} parent=0 // pred_region
    _
  $region25: #{clip_forward.23} parent=0 // pred_fallthru
    _
  // Predicated region
  $region26: #{clip_forward.23} parent=0 // pred_check
    _
  $region27: #{clip_forward.23} parent=0 // pred_check_branch
    %288 = sbr.rel (0) target = $region29
  $region28: #{clip_forward.23} parent=0 // pred_region
    _
  $region29: #{clip_forward.23} parent=0 // pred_fallthru
    _

// kernel: clip_forward.22
$region0: #{clip_forward.22}
  #allocation0 [shape = 'u32[]', space=smem, size = 0x4, offset = 0x4, fixed_abs, tag = 'smem constant byte address 0x4 - core index']
  #allocation1 [shape = 'u32[72,128]{1,0:T(1,128)}', space=vmem, size = 0x9000, scoped, tag = 'internal scratch']
  %s0 = inlined_call_operand.vmem [shape: f32[34,64], index: 0, kind: input, shape index: {}]
  %s1 = inlined_call_operand.vmem [shape: f32[1,64], index: 1, kind: input, shape index: {}]
  %s2 = inlined_call_operand.vmem [shape: f32[1,64], index: 2, kind: input, shape index: {}]
  %s3 = inlined_call_operand.vmem [shape: f32[34,64], index: 3, kind: output, shape index: {}]
  %s4 = sld [smem:[#allocation0]]
  $region22: #{clip_forward.22} parent=0
    _
  %s6 = ssub.s32 1, %s4
  %s7 = scalar_select 0, %s6, %s4
  // Predicated region
  $region2: #{clip_forward.22} parent=0 // pred_check
    _
  $region3: #{clip_forward.22} parent=0 // pred_check_branch
    %9 = sbr.rel (0) target = $region5
  $region4: #{clip_forward.22} parent=0 // pred_region
    _
  $region5: #{clip_forward.22} parent=0 // pred_fallthru
    _
  // Predicated region
  $region6: #{clip_forward.22} parent=0 // pred_check
    _
  $region7: #{clip_forward.22} parent=0 // pred_check_branch
    %11 = sbr.rel (0) target = $region9
  $region8: #{clip_forward.22} parent=0 // pred_region
    _
  $region9: #{clip_forward.22} parent=0 // pred_fallthru
    _
  // Predicated region
  $region10: #{clip_forward.22} parent=0 // pred_check
    _
  $region11: #{clip_forward.22} parent=0 // pred_check_branch
    %13 = sbr.rel (0) target = $region13
  $region12: #{clip_forward.22} parent=0 // pred_region
    _
  $region13: #{clip_forward.22} parent=0 // pred_fallthru
    _
  %v14 = vld [vmem:[%s0] sm:$0xff]
  %v15 = vld [vmem:[%s0 + $0x8] sm:$0xff]
  %v16 = vld [vmem:[%s0 + $0x10] sm:$0xff]
  %v17 = vld [vmem:[%s0 + $0x18] sm:$0xff]
  %v18 = vld [vmem:[%s0 + $0x20] sm:$0x3]
  %vm19 = vcmask 523264
  %v20 = vsel %vm19, %v14, 0.0
  %21 = vadd.xlane.f32.xlu0 %v20
  %v22 = vpop.xlane.xlu0 %21
  %v23 = vsel %vm19, %v15, 0.0
  %24 = vadd.xlane.f32.xlu0 %v23
  %v25 = vpop.xlane.xlu0 %24
  %v26 = vsel %vm19, %v16, 0.0
  %27 = vadd.xlane.f32.xlu0 %v26
  %v28 = vpop.xlane.xlu0 %27
  %v29 = vsel %vm19, %v17, 0.0
  %30 = vadd.xlane.f32.xlu0 %v29
  %v31 = vpop.xlane.xlu0 %30
  %vm32 = vcmask 517120
  %v33 = vsel %vm32, %v18, 0.0
  %34 = vadd.xlane.f32.xlu0 %v33
  %v35 = vpop.xlane.xlu0 %34
  %v36 = vrcp.pop 64.0
  %v37 = vmul.f32 64.0, %v36
  %v38 = vsub.f32 1.0, %v37
  %v39 = vmul.f32 %v36, %v38
  %v40 = vadd.f32 %v36, %v39
  %vm41 = vweird.f32 %v36
  %v42 = vsel %vm41, %v36, %v40
  %v43 = vmul.f32 %v22, %v42
  %v44 = vmul.f32 %v25, %v42
  %v45 = vmul.f32 %v28, %v42
  %v46 = vmul.f32 %v31, %v42
  %v47 = vmul.f32 %v35, %v42
  %v48 = vsub.f32 %v14, %v43
  %v49 = vsub.f32 %v15, %v44
  %v50 = vsub.f32 %v16, %v45
  %v51 = vsub.f32 %v17, %v46
  %v52 = vsub.f32 %v18, %v47
  %v53 = vmul.f32 %v48, %v48
  %v54 = vmul.f32 %v49, %v49
  %v55 = vmul.f32 %v50, %v50
  %v56 = vmul.f32 %v51, %v51
  %v57 = vmul.f32 %v52, %v52
  %v58 = vsel %vm19, %v53, 0.0
  %59 = vadd.xlane.f32.xlu0 %v58
  %v60 = vpop.xlane.xlu0 %59
  %v61 = vsel %vm19, %v54, 0.0
  %62 = vadd.xlane.f32.xlu0 %v61
  %v63 = vpop.xlane.xlu0 %62
  %v64 = vsel %vm19, %v55, 0.0
  %65 = vadd.xlane.f32.xlu0 %v64
  %v66 = vpop.xlane.xlu0 %65
  %v67 = vsel %vm19, %v56, 0.0
  %68 = vadd.xlane.f32.xlu0 %v67
  %v69 = vpop.xlane.xlu0 %68
  %v70 = vsel %vm32, %v57, 0.0
  %71 = vadd.xlane.f32.xlu0 %v70
  %v72 = vpop.xlane.xlu0 %71
  %v73 = vmul.f32 %v60, %v42
  %v74 = vmul.f32 %v63, %v42
  %v75 = vmul.f32 %v66, %v42
  %v76 = vmul.f32 %v69, %v42
  %v77 = vmul.f32 %v72, %v42
  %v78 = vadd.f32 %v73, 1e-05
  %v79 = vadd.f32 %v74, 1e-05
  %v80 = vadd.f32 %v75, 1e-05
  %v81 = vadd.f32 %v76, 1e-05
  %v82 = vadd.f32 %v77, 1e-05
  %v83 = vrsqrt.pop %v78
  %v84 = vmul.f32 %v83, %v78
  %v85 = vmul.f32 %v84, %v83
  %v86 = vmul.f32 0.5, %v85
  %v87 = vsub.f32 1.5, %v86
  %v88 = vmul.f32 %v83, %v87
  %vm89 = vweird.f32 %v78
  %vm90 = vweird.f32 %v83
  %vm91 = vmor %vm89, %vm90
  %v92 = vsel %vm91, %v83, %v88
  %v93 = vrsqrt.pop %v79
  %v94 = vmul.f32 %v93, %v79
  %v95 = vmul.f32 %v94, %v93
  %v96 = vmul.f32 0.5, %v95
  %v97 = vsub.f32 1.5, %v96
  %v98 = vmul.f32 %v93, %v97
  %vm99 = vweird.f32 %v79
  %vm100 = vweird.f32 %v93
  %vm101 = vmor %vm99, %vm100
  %v102 = vsel %vm101, %v93, %v98
  %v103 = vrsqrt.pop %v80
  %v104 = vmul.f32 %v103, %v80
  %v105 = vmul.f32 %v104, %v103
  %v106 = vmul.f32 0.5, %v105
  %v107 = vsub.f32 1.5, %v106
  %v108 = vmul.f32 %v103, %v107
  %vm109 = vweird.f32 %v80
  %vm110 = vweird.f32 %v103
  %vm111 = vmor %vm109, %vm110
  %v112 = vsel %vm111, %v103, %v108
  %v113 = vrsqrt.pop %v81
  %v114 = vmul.f32 %v113, %v81
  %v115 = vmul.f32 %v114, %v113
  %v116 = vmul.f32 0.5, %v115
  %v117 = vsub.f32 1.5, %v116
  %v118 = vmul.f32 %v113, %v117
  %vm119 = vweird.f32 %v81
  %vm120 = vweird.f32 %v113
  %vm121 = vmor %vm119, %vm120
  %v122 = vsel %vm121, %v113, %v118
  %v123 = vrsqrt.pop %v82
  %v124 = vmul.f32 %v123, %v82
  %v125 = vmul.f32 %v124, %v123
  %v126 = vmul.f32 0.5, %v125
  %v127 = vsub.f32 1.5, %v126
  %v128 = vmul.f32 %v123, %v127
  %vm129 = vweird.f32 %v82
  %vm130 = vweird.f32 %v123
  %vm131 = vmor %vm129, %vm130
  %v132 = vsel %vm131, %v123, %v128
  %v133 = vmul.f32 %v48, %v92
  %v134 = vmul.f32 %v49, %v102
  %v135 = vmul.f32 %v50, %v112
  %v136 = vmul.f32 %v51, %v122
  %v137 = vmul.f32 %v52, %v132
  %v138 = vld [vmem:[%s1] sm:$0x1]
  %v140 = vperm.slane %v138, 0
  %v142 = vmul.f32 %v133, %v140
  %v143 = vmul.f32 %v134, %v140
  %v144 = vmul.f32 %v135, %v140
  %v145 = vmul.f32 %v136, %v140
  %v146 = vmul.f32 %v137, %v140
  %v147 = vld [vmem:[%s2] sm:$0x1]
  %v149 = vperm.slane %v147, 0
  %v151 = vadd.f32 %v142, %v149
  %v152 = vadd.f32 %v143, %v149
  %v153 = vadd.f32 %v144, %v149
  %v154 = vadd.f32 %v145, %v149
  %v155 = vadd.f32 %v146, %v149
  %156 = vst.msk [vmem:[%s3] sm:$0xff] %vm19, %v151
  %157 = vst.msk [vmem:[%s3 + $0x8] sm:$0xff] %vm19, %v152
  %158 = vst.msk [vmem:[%s3 + $0x10] sm:$0xff] %vm19, %v153
  %159 = vst.msk [vmem:[%s3 + $0x18] sm:$0xff] %vm19, %v154
  %160 = vst.msk [vmem:[%s3 + $0x20] sm:$0x3] %vm32, %v155
  // Predicated region
  $region14: #{clip_forward.22} parent=0 // pred_check
    _
  $region15: #{clip_forward.22} parent=0 // pred_check_branch
    %162 = sbr.rel (0) target = $region17
  $region16: #{clip_forward.22} parent=0 // pred_region
    _
  $region17: #{clip_forward.22} parent=0 // pred_fallthru
    _
  // Predicated region
  $region18: #{clip_forward.22} parent=0 // pred_check
    _
  $region19: #{clip_forward.22} parent=0 // pred_check_branch
    %164 = sbr.rel (0) target = $region21
  $region20: #{clip_forward.22} parent=0 // pred_region
    _
  $region21: #{clip_forward.22} parent=0 // pred_fallthru
    _

// kernel: clip_forward.21
$region0: #{clip_forward.21}
  #allocation0 [shape = 'u32[]', space=smem, size = 0x4, offset = 0x4, fixed_abs, tag = 'smem constant byte address 0x4 - core index']
  #allocation1 [shape = 'u32[72,128]{1,0:T(1,128)}', space=vmem, size = 0x9000, scoped, tag = 'internal scratch']
  %s0 = inlined_call_operand.vmem [shape: f32[32,48], index: 0, kind: input, shape index: {}]
  %s1 = inlined_call_operand.vmem [shape: bf16[48,64], index: 1, kind: input, shape index: {}]
  %s2 = inlined_call_operand.vmem [shape: f32[1,64], index: 2, kind: input, shape index: {}]
  %s3 = inlined_call_operand.vmem [shape: f32[32,64], index: 3, kind: output, shape index: {}]
  %s4 = sld [smem:[#allocation0]]
  $region22: #{clip_forward.21} parent=0
    _
  %s6 = ssub.s32 1, %s4
  %s7 = scalar_select 0, %s6, %s4
  // Predicated region
  $region2: #{clip_forward.21} parent=0 // pred_check
    _
  $region3: #{clip_forward.21} parent=0 // pred_check_branch
    %9 = sbr.rel (0) target = $region5
  $region4: #{clip_forward.21} parent=0 // pred_region
    _
  $region5: #{clip_forward.21} parent=0 // pred_fallthru
    _
  // Predicated region
  $region6: #{clip_forward.21} parent=0 // pred_check
    _
  $region7: #{clip_forward.21} parent=0 // pred_check_branch
    %11 = sbr.rel (0) target = $region9
  $region8: #{clip_forward.21} parent=0 // pred_region
    _
  $region9: #{clip_forward.21} parent=0 // pred_fallthru
    _
  // Predicated region
  $region10: #{clip_forward.21} parent=0 // pred_check
    _
  $region11: #{clip_forward.21} parent=0 // pred_check_branch
    %13 = sbr.rel (0) target = $region13
  $region12: #{clip_forward.21} parent=0 // pred_region
    _
  $region13: #{clip_forward.21} parent=0 // pred_fallthru
    _
  %v15 = vld [vmem:[%s0] sm:$0xff]
  %v16 = vld [vmem:[%s0 + $0x8] sm:$0xff]
  %v17 = vld [vmem:[%s0 + $0x10] sm:$0xff]
  %v18 = vld [vmem:[%s0 + $0x18] sm:$0xff]
  %v19 = vpack.c.bf16 %v16, %v15
  %v20 = vpack.c.bf16 %v18, %v17
  %v21 = vld [vmem:[%s1] sm:$0xf]
  %v22 = vld [vmem:[%s1 + $0x4] sm:$0xf]
  %v23 = vld [vmem:[%s1 + $0x8] sm:$0xf]
  %v24 = vld [vmem:[%s1 + $0xc] sm:$0xf]
  %v25 = vld [vmem:[%s1 + $0x10] sm:$0xf]
  %v26 = vld [vmem:[%s1 + $0x14] sm:$0xf]
  %v27 = vld [vmem:[%s2] sm:$0x1]
  %v29 = vperm.slane %v27, 0
  %v37 = vunpack.c.l.b16 %v21
  %v38 = vunpack.c.l.b16 %v22
  %v39 = vunpack.c.l.b16 %v23
  %v40 = vunpack.c.l.b16 %v24
  %v41 = vunpack.c.l.b16 %v25
  %v42 = vunpack.c.l.b16 %v26
  %v43 = vpack.c.b16 %v38, %v37
  %v44 = vpack.c.b16 %v40, %v39
  %v45 = vpack.c.b16 %v42, %v41
  %vm49 = vcmask 392192
  %v51 = vsel %vm49, %v19, 0
  %v54 = vsel %vm49, %v20, 0
  %56 = vmatpush.bf16.msra.mxu0 0
  %57 = vmatpush.bf16.msra.mxu0 0
  %58 = vmatpush.bf16.msra.mxu0 0
  %59 = vmatpush.bf16.msra.mxu0 0
  %60 = vmatpush.bf16.msra.mxu0 0
  %61 = vmatpush.bf16.msra.mxu0 %v45
  %62 = vmatpush.bf16.msra.mxu0 %v44
  %63 = vmatpush.bf16.msra.mxu0 %v43
  %64 = vmatmul.bf16.gmra.mxu0 %v51
  %v65 = vpop.f32.mrf.mxu0
  %v66 = vadd.f32 %v29, %v65
  %v67 = vpop.f32.mrf.mxu0
  %v68 = vadd.f32 %v29, %v67
  %69 = vmatmul.bf16.gmra.mxu0 %v54
  %v70 = vpop.f32.mrf.mxu0
  %v71 = vadd.f32 %v29, %v70
  %v72 = vpop.f32.mrf.mxu0
  %v73 = vadd.f32 %v29, %v72
  %74 = vdwg.mxu0
  %vm75 = vcmask 523264
  %76 = vst.msk [vmem:[%s3] sm:$0xff] %vm75, %v66
  %77 = vst.msk [vmem:[%s3 + $0x8] sm:$0xff] %vm75, %v68
  %78 = vst.msk [vmem:[%s3 + $0x10] sm:$0xff] %vm75, %v71
  %79 = vst.msk [vmem:[%s3 + $0x18] sm:$0xff] %vm75, %v73
  // Predicated region
  $region14: #{clip_forward.21} parent=0 // pred_check
    _
  $region15: #{clip_forward.21} parent=0 // pred_check_branch
    %81 = sbr.rel (0) target = $region17
  $region16: #{clip_forward.21} parent=0 // pred_region
    _
  $region17: #{clip_forward.21} parent=0 // pred_fallthru
    _
  // Predicated region
  $region18: #{clip_forward.21} parent=0 // pred_check
    _
  $region19: #{clip_forward.21} parent=0 // pred_check_branch
    %83 = sbr.rel (0) target = $region21
  $region20: #{clip_forward.21} parent=0 // pred_region
    _
  $region21: #{clip_forward.21} parent=0 // pred_fallthru
    _

// kernel: clip_forward.24
$region0: #{clip_forward.24}
  #allocation0 [shape = 'u32[]', space=smem, size = 0x4, offset = 0x4, fixed_abs, tag = 'smem constant byte address 0x4 - core index']
  #allocation1 [shape = 'u32[72,128]{1,0:T(1,128)}', space=vmem, size = 0x9000, scoped, tag = 'internal scratch']
  %s0 = inlined_call_operand.vmem [shape: f32[2,17,192], index: 0, kind: input, shape index: {}]
  %s1 = inlined_call_operand.vmem [shape: f32[2,17,64], index: 1, kind: output, shape index: {}]
  %s2 = sld [smem:[#allocation0]]
  $region37: #{clip_forward.24} parent=0
    _
  %s4 = ssub.s32 1, %s2
  %s5 = scalar_select 0, %s4, %s2
  loop: start=0, step=1, limit=4
  $region2: #{clip_forward.24} parent=0 // loop_pre_header
    _
  $region3: #{clip_forward.24} parent=0 // loop_header
    %s7 = sphi 0, %s11
    %p8 = scmp.ge.s32.totalorder %s7, 4
    %s17 = sphi 0, %s19
    %s20 = sphi 0, %s17
    %s21 = sphi 0, %s20
    %s37 = sphi 0, %s21
    %s43 = sphi 0, %s45
    %s46 = sphi 0, %s43
    %s47 = sphi 0, %s46
    %s63 = sphi 0, %s47
  $region4: #{clip_forward.24} parent=0 // loop_header_branch
    %10 = sbr.rel (%p8) target = $region8
  $region5: #{clip_forward.24} parent=0 // loop_body
    %s12 = ssub.s32 %s7, 1
    %s13 = ssub.s32 %s7, 2
    %s14 = sadd.s32 %s7, 1
    %s15 = ssub.s32 %s7, %s14
    %p16 = scmp.eq.s32.totalorder %s15, 0
    %s18 = sadd.s32 %s17, 1
    %s19 = scalar_select %p16, %s17, %s18
    %p22 = pneg %p16
    %p23 = scmp.eq.s32.totalorder %s7, 1
    %p24 = por %p22, %p23
    %p25 = scmp.ne.s32.totalorder %s17, %s20
    %p26 = scmp.eq.s32.totalorder %s7, 0
    %p27 = por %p25, %p26
    %p28 = scmp.ne.s32.totalorder %s17, %s20
    %p29 = scmp.eq.s32.totalorder %s12, 1
    %p30 = por %p28, %p29
    %p31 = scmp.ne.s32.totalorder %s20, %s21
    %p32 = scmp.eq.s32.totalorder %s12, 0
    %p33 = por %p31, %p32
    %p34 = scmp.ne.s32.totalorder %s20, %s21
    %p35 = scmp.eq.s32.totalorder %s13, 1
    %p36 = por %p34, %p35
    %p38 = scmp.ne.s32.totalorder %s21, %s37
    %p39 = scmp.eq.s32.totalorder %s13, 0
    %p40 = por %p38, %p39
    %s41 = ssub.s32 %s7, %s14
    %p42 = scmp.eq.s32.totalorder %s41, 0
    %s44 = sadd.s32 %s43, 1
    %s45 = scalar_select %p42, %s43, %s44
    %p48 = pneg %p42
    %p49 = scmp.eq.s32.totalorder %s7, 1
    %p50 = por %p48, %p49
    %p51 = scmp.ne.s32.totalorder %s43, %s46
    %p52 = scmp.eq.s32.totalorder %s7, 0
    %p53 = por %p51, %p52
    %p54 = scmp.ne.s32.totalorder %s43, %s46
    %p55 = scmp.eq.s32.totalorder %s12, 1
    %p56 = por %p54, %p55
    %p57 = scmp.ne.s32.totalorder %s46, %s47
    %p58 = scmp.eq.s32.totalorder %s12, 0
    %p59 = por %p57, %p58
    %p60 = scmp.ne.s32.totalorder %s46, %s47
    %p61 = scmp.eq.s32.totalorder %s13, 1
    %p62 = por %p60, %p61
    %p64 = scmp.ne.s32.totalorder %s47, %s63
    %p65 = scmp.eq.s32.totalorder %s13, 0
    %p66 = por %p64, %p65
    %p67 = scmp.le.s32.totalorder 1, %s7
    %p68 = scmp.lt.s32.totalorder %s7, 3
    %p69 = pnand %p67, %p68
    %p70 = pneg %p69
    // Predicated region
    $region9: #{clip_forward.24} parent=5 // pred_check
      _
    $region10: #{clip_forward.24} parent=5 // pred_check_branch
      %72 = sbr.rel (%p69) target = $region12
    $region11: #{clip_forward.24} parent=5 // pred_region
      %s73 = ssub.s32 %s7, 1
    $region12: #{clip_forward.24} parent=5 // pred_fallthru
      _
    %p74 = scmp.lt.s32.totalorder %s7, 2
    // Predicated region
    $region13: #{clip_forward.24} parent=5 // pred_check
      %p75 = pneg %p74
    $region14: #{clip_forward.24} parent=5 // pred_check_branch
      %77 = sbr.rel (%p75) target = $region16
    $region15: #{clip_forward.24} parent=5 // pred_region
      // Predicated region
      $region17: #{clip_forward.24} parent=15 // pred_check
        %p78 = pneg %p27
      $region18: #{clip_forward.24} parent=15 // pred_check_branch
        %80 = sbr.rel (%p78) target = $region20
      $region19: #{clip_forward.24} parent=15 // pred_region
        %p81 = scmp.lt.s32.totalorder %s7, 1
        %s82 = scalar_select %p81, %s7, 1
        %s83 = smul.addr %s82, 6
        %s84 = smul.addr %s83, 8
        %s85 = scalar_lea.vmem %s0, %s84
      $region20: #{clip_forward.24} parent=15 // pred_fallthru
        _
    $region16: #{clip_forward.24} parent=5 // pred_fallthru
      _
    %p86 = scmp.le.s32.totalorder 1, %s7
    %p87 = scmp.lt.s32.totalorder %s7, 3
    %p88 = pnand %p86, %p87
    %p89 = pneg %p88
    // Predicated region
    $region21: #{clip_forward.24} parent=5 // pred_check
      _
    $region22: #{clip_forward.24} parent=5 // pred_check_branch
      %91 = sbr.rel (%p88) target = $region24
    $region23: #{clip_forward.24} parent=5 // pred_region
      %s92 = ssub.s32 %s7, 1
      %p93 = scmp.lt.s32.totalorder %s12, 1
      %s94 = scalar_select %p93, %s12, 1
      %s95 = smul.addr %s94, 6
      %s96 = smul.addr %s95, 8
      %s97 = scalar_lea.vmem %s0, %s96
      %p98 = pneg %p33
      %p99 = pneg %p30
      %p100 = pneg %p59
      %p101 = pneg %p56
      %p102 = scmp.lt.s32.totalorder %s12, 1
      %s103 = scalar_select %p102, %s12, 1
      %s104 = smul.addr %s103, 3
      %s105 = smul.addr %s104, 8
      %s106 = scalar_lea.vmem %s1, %s105
      %p107 = scmp.lt.s32.totalorder %s12, 1
      %s108 = scalar_select %p107, %s12, 1
      %s109 = smul.addr %s108, 6
      %s110 = smul.addr %s109, 8
      %s111 = scalar_lea.vmem %s0, %s110
      %p112 = scmp.lt.s32.totalorder %s12, 1
      %s113 = scalar_select %p112, %s12, 1
      %s114 = smul.addr %s113, 3
      %s115 = smul.addr %s114, 8
      %s116 = scalar_lea.vmem %s1, %s115
      %v118 = vld [vmem:[%s111] sm:$0xff]
      %v119 = vld [vmem:[%s111 + $0x10] sm:$0xff]
      %v120 = vld [vmem:[%s111 + $0x20] sm:$0x1]
      %v121 = vmul.f32 %v118, 0.125
      %v122 = vmul.f32 %v119, 0.125
      %v123 = vmul.f32 %v120, 0.125
      %v124 = vld [vmem:[%s111 + $0x8] sm:$0xff]
      %v125 = vld [vmem:[%s111 + $0x18] sm:$0xff]
      %v126 = vld [vmem:[%s111 + $0x28] sm:$0x1]
      %v127 = vpack.c.bf16 %v122, %v121
      %v128 = vpack.c.bf16 %v123, %v123
      %v129 = vpack.c.bf16 %v119, %v118
      %v130 = vpack.c.bf16 %v120, %v120
      %133 = vrot.lane.b32.xlu0 %v129, 64
      %v134 = vpop.permute.xlu0 %133
      %135 = vrot.lane.b32.xlu0 %v130, 64
      %v136 = vpop.permute.xlu0 %135
      %vm137 = vcmask 523264
      %v139 = vsel %vm137, %v127, 0
      %v142 = vsel %vm137, %v128, 0
      %v145 = vsel %vm137, %v134, 0
      %v148 = vsel %vm137, %v136, 0
      %150 = vmatpush.bf16.xpose.msra.mxu0 0
      %151 = vmatpush.bf16.xpose.msra.mxu0 0
      %152 = vmatpush.bf16.xpose.msra.mxu0 0
      %153 = vmatpush.bf16.xpose.msra.mxu0 0
      %154 = vmatpush.bf16.xpose.msra.mxu0 0
      %155 = vmatpush.bf16.xpose.msra.mxu0 0
      %156 = vmatpush.bf16.xpose.msra.mxu0 %v148
      %157 = vmatpush.bf16.xpose.msra.mxu0 %v145
      %158 = vmatmul.bf16.gmra.mxu0 %v139
      %v159 = vpop.f32.mrf.mxu0
      %v160 = vadd.f32 0.0, %v159
      %v161 = vpop.f32.mrf.mxu0
      %v162 = vadd.f32 0.0, %v161
      %163 = vmatmul.bf16.gmra.mxu0 %v142
      %v164 = vpop.f32.mrf.mxu0
      %v165 = vadd.f32 0.0, %v164
      %v166 = vpop.f32.mrf.mxu0
      %167 = vdwg.mxu0
      %vm168 = vcmask 138240
      %v169 = vsel %vm168, %v160, -inf
      %170 = vmax.xlane.f32.xlu0 %v169
      %v171 = vpop.xlane.xlu0 %170
      %v172 = vsel %vm168, %v162, -inf
      %173 = vmax.xlane.f32.xlu0 %v172
      %v174 = vpop.xlane.xlu0 %173
      %vm175 = vcmask 131072
      %v176 = vsel %vm175, %v165, -inf
      %177 = vmax.xlane.f32.xlu0 %v176
      %v178 = vpop.xlane.xlu0 %177
      %v179 = vsub.f32 %v160, %v171
      %v180 = vsub.f32 %v162, %v174
      %v181 = vsub.f32 %v165, %v178
      %v182 = vmul.f32 %v179, 1.442695
      %v183 = vpow.pop %v182
      %v184 = vmul.f32 %v180, 1.442695
      %v185 = vpow.pop %v184
      %v186 = vmul.f32 %v181, 1.442695
      %v187 = vpow.pop %v186
      %v188 = vsel %vm168, %v183, 0.0
      %189 = vadd.xlane.f32.xlu0 %v188
      %v190 = vpop.xlane.xlu0 %189
      %v191 = vsel %vm168, %v185, 0.0
      %192 = vadd.xlane.f32.xlu0 %v191
      %v193 = vpop.xlane.xlu0 %192
      %v194 = vsel %vm175, %v187, 0.0
      %195 = vadd.xlane.f32.xlu0 %v194
      %v196 = vpop.xlane.xlu0 %195
      %v197 = vrcp.pop %v190
      %v198 = vrcp.pop %v193
      %v199 = vrcp.pop %v196
      %v200 = vmul.f32 %v183, %v197
      %v201 = vmul.f32 %v185, %v198
      %v202 = vmul.f32 %v187, %v199
      %v203 = vpack.c.bf16 %v201, %v200
      %v204 = vpack.c.bf16 %v202, %v202
      %v205 = vpack.c.bf16 %v125, %v124
      %v206 = vpack.c.bf16 %v126, %v126
      %v208 = vsel %vm168, %v203, 0
      %v211 = vsel %vm168, %v204, 0
      %vm213 = vcmask 1040384
      %v214 = vsel 0, 4294967295, 65535
      %v215 = vsel %vm213, %v214, 0
      %v217 = vand.u32 %v206, %v215
      %219 = vmatpush.bf16.msra.mxu0 0
      %220 = vmatpush.bf16.msra.mxu0 0
      %221 = vmatpush.bf16.msra.mxu0 0
      %222 = vmatpush.bf16.msra.mxu0 0
      %223 = vmatpush.bf16.msra.mxu0 0
      %224 = vmatpush.bf16.msra.mxu0 0
      %225 = vmatpush.bf16.msra.mxu0 %v217
      %226 = vmatpush.bf16.msra.mxu0 %v205
      %227 = vmatmul.bf16.gmra.mxu0 %v208
      %v228 = vpop.f32.mrf.mxu0
      %v229 = vadd.f32 0.0, %v228
      %v230 = vpop.f32.mrf.mxu0
      %v231 = vadd.f32 0.0, %v230
      %232 = vmatmul.bf16.gmra.mxu0 %v211
      %v233 = vpop.f32.mrf.mxu0
      %v234 = vadd.f32 0.0, %v233
      %v235 = vpop.f32.mrf.mxu0
      %236 = vdwg.mxu0
      %237 = vst.msk [vmem:[%s116] sm:$0xff] %vm137, %v229
      %238 = vst.msk [vmem:[%s116 + $0x8] sm:$0xff] %vm137, %v231
      %vm239 = vcmask 516096
      %240 = vst.msk [vmem:[%s116 + $0x10] sm:$0x1] %vm239, %v234
      %p241 = scmp.lt.s32.totalorder %s12, 1
      %s242 = scalar_select %p241, %s12, 1
      %s243 = smul.addr %s242, 3
      %s244 = smul.addr %s243, 8
      %s245 = scalar_lea.vmem %s1, %s244
      // Predicated region
      $region25: #{clip_forward.24} parent=23 // pred_check
        %p246 = pneg %p56
      $region26: #{clip_forward.24} parent=23 // pred_check_branch
        %248 = sbr.rel (%p246) target = $region28
      $region27: #{clip_forward.24} parent=23 // pred_region
        _
      $region28: #{clip_forward.24} parent=23 // pred_fallthru
        _
    $region24: #{clip_forward.24} parent=5 // pred_fallthru
      _
    %p249 = scmp.le.s32.totalorder 2, %s7
    // Predicated region
    $region29: #{clip_forward.24} parent=5 // pred_check
      %p250 = pneg %p249
    $region30: #{clip_forward.24} parent=5 // pred_check_branch
      %252 = sbr.rel (%p250) target = $region32
    $region31: #{clip_forward.24} parent=5 // pred_region
      %s253 = ssub.s32 %s7, 2
      // Predicated region
      $region33: #{clip_forward.24} parent=31 // pred_check
        %p254 = pneg %p62
      $region34: #{clip_forward.24} parent=31 // pred_check_branch
        %256 = sbr.rel (%p254) target = $region36
      $region35: #{clip_forward.24} parent=31 // pred_region
        %p257 = scmp.lt.s32.totalorder %s13, 1
        %s258 = scalar_select %p257, %s13, 1
        %s259 = smul.addr %s258, 3
        %s260 = smul.addr %s259, 8
        %s261 = scalar_lea.vmem %s1, %s260
      $region36: #{clip_forward.24} parent=31 // pred_fallthru
        _
    $region32: #{clip_forward.24} parent=5 // pred_fallthru
      _
  $region6: #{clip_forward.24} parent=0 // loop_footer
    %s11 = sadd.s32 1, %s7
  $region7: #{clip_forward.24} parent=0 // loop_footer_branch
    %6 = sbr.rel target = $region3
  $region8: #{clip_forward.24} parent=0 // loop_exit
    _

// kernel: clip_forward.25
$region0: #{clip_forward.25}
  #allocation0 [shape = 'u32[]', space=smem, size = 0x4, offset = 0x4, fixed_abs, tag = 'smem constant byte address 0x4 - core index']
  #allocation1 [shape = 'u32[72,128]{1,0:T(1,128)}', space=vmem, size = 0x9000, scoped, tag = 'internal scratch']
  %s0 = inlined_call_operand.vmem [shape: f32[34,64], index: 0, kind: input, shape index: {}]
  %s1 = inlined_call_operand.vmem [shape: bf16[64,64], index: 1, kind: input, shape index: {}]
  %s2 = inlined_call_operand.vmem [shape: f32[1,64], index: 2, kind: input, shape index: {}]
  %s3 = inlined_call_operand.vmem [shape: f32[34,64], index: 3, kind: input, shape index: {}]
  %s4 = inlined_call_operand.vmem [shape: f32[34,64], index: 4, kind: output, shape index: {}]
  %s5 = sld [smem:[#allocation0]]
  $region26: #{clip_forward.25} parent=0
    _
  %s7 = ssub.s32 1, %s5
  %s8 = scalar_select 0, %s7, %s5
  // Predicated region
  $region2: #{clip_forward.25} parent=0 // pred_check
    _
  $region3: #{clip_forward.25} parent=0 // pred_check_branch
    %10 = sbr.rel (0) target = $region5
  $region4: #{clip_forward.25} parent=0 // pred_region
    _
  $region5: #{clip_forward.25} parent=0 // pred_fallthru
    _
  // Predicated region
  $region6: #{clip_forward.25} parent=0 // pred_check
    _
  $region7: #{clip_forward.25} parent=0 // pred_check_branch
    %12 = sbr.rel (0) target = $region9
  $region8: #{clip_forward.25} parent=0 // pred_region
    _
  $region9: #{clip_forward.25} parent=0 // pred_fallthru
    _
  // Predicated region
  $region10: #{clip_forward.25} parent=0 // pred_check
    _
  $region11: #{clip_forward.25} parent=0 // pred_check_branch
    %14 = sbr.rel (0) target = $region13
  $region12: #{clip_forward.25} parent=0 // pred_region
    _
  $region13: #{clip_forward.25} parent=0 // pred_fallthru
    _
  // Predicated region
  $region14: #{clip_forward.25} parent=0 // pred_check
    _
  $region15: #{clip_forward.25} parent=0 // pred_check_branch
    %16 = sbr.rel (0) target = $region17
  $region16: #{clip_forward.25} parent=0 // pred_region
    _
  $region17: #{clip_forward.25} parent=0 // pred_fallthru
    _
  %v18 = vld [vmem:[%s0] sm:$0xff]
  %v19 = vld [vmem:[%s0 + $0x8] sm:$0xff]
  %v20 = vld [vmem:[%s0 + $0x10] sm:$0xff]
  %v21 = vld [vmem:[%s0 + $0x18] sm:$0xff]
  %v22 = vld [vmem:[%s0 + $0x20] sm:$0x3]
  %v23 = vpack.c.bf16 %v19, %v18
  %v24 = vpack.c.bf16 %v21, %v20
  %v25 = vpack.c.bf16 %v22, %v22
  %v26 = vld [vmem:[%s1] sm:$0xf]
  %v27 = vld [vmem:[%s1 + $0x4] sm:$0xf]
  %v28 = vld [vmem:[%s1 + $0x8] sm:$0xf]
  %v29 = vld [vmem:[%s1 + $0xc] sm:$0xf]
  %v30 = vld [vmem:[%s1 + $0x10] sm:$0xf]
  %v31 = vld [vmem:[%s1 + $0x14] sm:$0xf]
  %v32 = vld [vmem:[%s1 + $0x18] sm:$0xf]
  %v33 = vld [vmem:[%s1 + $0x1c] sm:$0xf]
  %v34 = vld [vmem:[%s2] sm:$0x1]
  %v36 = vperm.slane %v34, 0
  %v46 = vunpack.c.l.b16 %v26
  %v47 = vunpack.c.l.b16 %v27
  %v48 = vunpack.c.l.b16 %v28
  %v49 = vunpack.c.l.b16 %v29
  %v50 = vunpack.c.l.b16 %v30
  %v51 = vunpack.c.l.b16 %v31
  %v52 = vunpack.c.l.b16 %v32
  %v53 = vunpack.c.l.b16 %v33
  %v54 = vpack.c.b16 %v47, %v46
  %v55 = vpack.c.b16 %v49, %v48
  %v56 = vpack.c.b16 %v51, %v50
  %v57 = vpack.c.b16 %v53, %v52
  %vm62 = vcmask 523264
  %v64 = vsel %vm62, %v23, 0
  %v67 = vsel %vm62, %v24, 0
  %v70 = vsel %vm62, %v25, 0
  %72 = vmatpush.bf16.msra.mxu0 0
  %73 = vmatpush.bf16.msra.mxu0 0
  %74 = vmatpush.bf16.msra.mxu0 0
  %75 = vmatpush.bf16.msra.mxu0 0
  %76 = vmatpush.bf16.msra.mxu0 %v57
  %77 = vmatpush.bf16.msra.mxu0 %v56
  %78 = vmatpush.bf16.msra.mxu0 %v55
  %79 = vmatpush.bf16.msra.mxu0 %v54
  %80 = vmatmul.bf16.gmra.mxu0 %v64
  %v81 = vpop.f32.mrf.mxu0
  %v82 = vadd.f32 %v36, %v81
  %v83 = vpop.f32.mrf.mxu0
  %v84 = vadd.f32 %v36, %v83
  %85 = vmatmul.bf16.gmra.mxu0 %v67
  %v86 = vpop.f32.mrf.mxu0
  %v87 = vadd.f32 %v36, %v86
  %v88 = vpop.f32.mrf.mxu0
  %v89 = vadd.f32 %v36, %v88
  %90 = vmatmul.bf16.gmra.mxu0 %v70
  %v91 = vpop.f32.mrf.mxu0
  %v92 = vadd.f32 %v36, %v91
  %v93 = vpop.f32.mrf.mxu0
  %94 = vdwg.mxu0
  %v95 = vld [vmem:[%s3] sm:$0xff]
  %v96 = vld [vmem:[%s3 + $0x8] sm:$0xff]
  %v97 = vld [vmem:[%s3 + $0x10] sm:$0xff]
  %v98 = vld [vmem:[%s3 + $0x18] sm:$0xff]
  %v99 = vld [vmem:[%s3 + $0x20] sm:$0x3]
  %v100 = vadd.f32 %v82, %v95
  %v101 = vadd.f32 %v84, %v96
  %v102 = vadd.f32 %v87, %v97
  %v103 = vadd.f32 %v89, %v98
  %v104 = vadd.f32 %v92, %v99
  %105 = vst.msk [vmem:[%s4] sm:$0xff] %vm62, %v100
  %106 = vst.msk [vmem:[%s4 + $0x8] sm:$0xff] %vm62, %v101
  %107 = vst.msk [vmem:[%s4 + $0x10] sm:$0xff] %vm62, %v102
  %108 = vst.msk [vmem:[%s4 + $0x18] sm:$0xff] %vm62, %v103
  %vm109 = vcmask 517120
  %110 = vst.msk [vmem:[%s4 + $0x20] sm:$0x3] %vm109, %v104
  // Predicated region
  $region18: #{clip_forward.25} parent=0 // pred_check
    _
  $region19: #{clip_forward.25} parent=0 // pred_check_branch
    %112 = sbr.rel (0) target = $region21
  $region20: #{clip_forward.25} parent=0 // pred_region
    _
  $region21: #{clip_forward.25} parent=0 // pred_fallthru
    _
  // Predicated region
  $region22: #{clip_forward.25} parent=0 // pred_check
    _
  $region23: #{clip_forward.25} parent=0 // pred_check_branch
    %114 = sbr.rel (0) target = $region25
  $region24: #{clip_forward.25} parent=0 // pred_region
    _
  $region25: #{clip_forward.25} parent=0 // pred_fallthru
    _

// kernel: clip_forward.26
$region0: #{clip_forward.26}
  #allocation0 [shape = 'u32[]', space=smem, size = 0x4, offset = 0x4, fixed_abs, tag = 'smem constant byte address 0x4 - core index']
  #allocation1 [shape = 'u32[72,128]{1,0:T(1,128)}', space=vmem, size = 0x9000, scoped, tag = 'internal scratch']
  %s0 = inlined_call_operand.vmem [shape: f32[34,64], index: 0, kind: input, shape index: {}]
  %s1 = inlined_call_operand.vmem [shape: f32[1,64], index: 1, kind: input, shape index: {}]
  %s2 = inlined_call_operand.vmem [shape: f32[1,64], index: 2, kind: input, shape index: {}]
  %s3 = inlined_call_operand.vmem [shape: bf16[64,256], index: 3, kind: input, shape index: {}]
  %s4 = inlined_call_operand.vmem [shape: f32[1,256], index: 4, kind: input, shape index: {}]
  %s5 = inlined_call_operand.vmem [shape: bf16[256,64], index: 5, kind: input, shape index: {}]
  %s6 = inlined_call_operand.vmem [shape: f32[1,64], index: 6, kind: input, shape index: {}]
  %s7 = inlined_call_operand.vmem [shape: f32[34,64], index: 7, kind: output, shape index: {}]
  %s8 = sld [smem:[#allocation0]]
  $region38: #{clip_forward.26} parent=0
    _
  %s10 = ssub.s32 1, %s8
  %s11 = scalar_select 0, %s10, %s8
  // Predicated region
  $region2: #{clip_forward.26} parent=0 // pred_check
    _
  $region3: #{clip_forward.26} parent=0 // pred_check_branch
    %13 = sbr.rel (0) target = $region5
  $region4: #{clip_forward.26} parent=0 // pred_region
    _
  $region5: #{clip_forward.26} parent=0 // pred_fallthru
    _
  // Predicated region
  $region6: #{clip_forward.26} parent=0 // pred_check
    _
  $region7: #{clip_forward.26} parent=0 // pred_check_branch
    %15 = sbr.rel (0) target = $region9
  $region8: #{clip_forward.26} parent=0 // pred_region
    _
  $region9: #{clip_forward.26} parent=0 // pred_fallthru
    _
  // Predicated region
  $region10: #{clip_forward.26} parent=0 // pred_check
    _
  $region11: #{clip_forward.26} parent=0 // pred_check_branch
    %17 = sbr.rel (0) target = $region13
  $region12: #{clip_forward.26} parent=0 // pred_region
    _
  $region13: #{clip_forward.26} parent=0 // pred_fallthru
    _
  // Predicated region
  $region14: #{clip_forward.26} parent=0 // pred_check
    _
  $region15: #{clip_forward.26} parent=0 // pred_check_branch
    %19 = sbr.rel (0) target = $region17
  $region16: #{clip_forward.26} parent=0 // pred_region
    _
  $region17: #{clip_forward.26} parent=0 // pred_fallthru
    _
  // Predicated region
  $region18: #{clip_forward.26} parent=0 // pred_check
    _
  $region19: #{clip_forward.26} parent=0 // pred_check_branch
    %21 = sbr.rel (0) target = $region21
  $region20: #{clip_forward.26} parent=0 // pred_region
    _
  $region21: #{clip_forward.26} parent=0 // pred_fallthru
    _
  // Predicated region
  $region22: #{clip_forward.26} parent=0 // pred_check
    _
  $region23: #{clip_forward.26} parent=0 // pred_check_branch
    %23 = sbr.rel (0) target = $region25
  $region24: #{clip_forward.26} parent=0 // pred_region
    _
  $region25: #{clip_forward.26} parent=0 // pred_fallthru
    _
  // Predicated region
  $region26: #{clip_forward.26} parent=0 // pred_check
    _
  $region27: #{clip_forward.26} parent=0 // pred_check_branch
    %25 = sbr.rel (0) target = $region29
  $region28: #{clip_forward.26} parent=0 // pred_region
    _
  $region29: #{clip_forward.26} parent=0 // pred_fallthru
    _
  %v27 = vld [vmem:[%s0] sm:$0xff]
  %v28 = vld [vmem:[%s0 + $0x8] sm:$0xff]
  %v29 = vld [vmem:[%s0 + $0x10] sm:$0xff]
  %v30 = vld [vmem:[%s0 + $0x18] sm:$0xff]
  %v31 = vld [vmem:[%s0 + $0x20] sm:$0x3]
  %vm32 = vcmask 523264
  %v33 = vsel %vm32, %v27, 0.0
  %34 = vadd.xlane.f32.xlu0 %v33
  %v35 = vpop.xlane.xlu0 %34
  %v36 = vsel %vm32, %v28, 0.0
  %37 = vadd.xlane.f32.xlu0 %v36
  %v38 = vpop.xlane.xlu0 %37
  %v39 = vsel %vm32, %v29, 0.0
  %40 = vadd.xlane.f32.xlu0 %v39
  %v41 = vpop.xlane.xlu0 %40
  %v42 = vsel %vm32, %v30, 0.0
  %43 = vadd.xlane.f32.xlu0 %v42
  %v44 = vpop.xlane.xlu0 %43
  %vm45 = vcmask 517120
  %v46 = vsel %vm45, %v31, 0.0
  %47 = vadd.xlane.f32.xlu0 %v46
  %v48 = vpop.xlane.xlu0 %47
  %v49 = vrcp.pop 64.0
  %v50 = vmul.f32 64.0, %v49
  %v51 = vsub.f32 1.0, %v50
  %v52 = vmul.f32 %v49, %v51
  %v53 = vadd.f32 %v49, %v52
  %vm54 = vweird.f32 %v49
  %v55 = vsel %vm54, %v49, %v53
  %v56 = vmul.f32 %v35, %v55
  %v57 = vmul.f32 %v38, %v55
  %v58 = vmul.f32 %v41, %v55
  %v59 = vmul.f32 %v44, %v55
  %v60 = vmul.f32 %v48, %v55
  %v61 = vsub.f32 %v27, %v56
  %v62 = vsub.f32 %v28, %v57
  %v63 = vsub.f32 %v29, %v58
  %v64 = vsub.f32 %v30, %v59
  %v65 = vsub.f32 %v31, %v60
  %v66 = vmul.f32 %v61, %v61
  %v67 = vmul.f32 %v62, %v62
  %v68 = vmul.f32 %v63, %v63
  %v69 = vmul.f32 %v64, %v64
  %v70 = vmul.f32 %v65, %v65
  %v71 = vsel %vm32, %v66, 0.0
  %72 = vadd.xlane.f32.xlu0 %v71
  %v73 = vpop.xlane.xlu0 %72
  %v74 = vsel %vm32, %v67, 0.0
  %75 = vadd.xlane.f32.xlu0 %v74
  %v76 = vpop.xlane.xlu0 %75
  %v77 = vsel %vm32, %v68, 0.0
  %78 = vadd.xlane.f32.xlu0 %v77
  %v79 = vpop.xlane.xlu0 %78
  %v80 = vsel %vm32, %v69, 0.0
  %81 = vadd.xlane.f32.xlu0 %v80
  %v82 = vpop.xlane.xlu0 %81
  %v83 = vsel %vm45, %v70, 0.0
  %84 = vadd.xlane.f32.xlu0 %v83
  %v85 = vpop.xlane.xlu0 %84
  %v86 = vmul.f32 %v73, %v55
  %v87 = vmul.f32 %v76, %v55
  %v88 = vmul.f32 %v79, %v55
  %v89 = vmul.f32 %v82, %v55
  %v90 = vmul.f32 %v85, %v55
  %v91 = vadd.f32 %v86, 1e-05
  %v92 = vadd.f32 %v87, 1e-05
  %v93 = vadd.f32 %v88, 1e-05
  %v94 = vadd.f32 %v89, 1e-05
  %v95 = vadd.f32 %v90, 1e-05
  %v96 = vrsqrt.pop %v91
  %v97 = vmul.f32 %v96, %v91
  %v98 = vmul.f32 %v97, %v96
  %v99 = vmul.f32 0.5, %v98
  %v100 = vsub.f32 1.5, %v99
  %v101 = vmul.f32 %v96, %v100
  %vm102 = vweird.f32 %v91
  %vm103 = vweird.f32 %v96
  %vm104 = vmor %vm102, %vm103
  %v105 = vsel %vm104, %v96, %v101
  %v106 = vrsqrt.pop %v92
  %v107 = vmul.f32 %v106, %v92
  %v108 = vmul.f32 %v107, %v106
  %v109 = vmul.f32 0.5, %v108
  %v110 = vsub.f32 1.5, %v109
  %v111 = vmul.f32 %v106, %v110
  %vm112 = vweird.f32 %v92
  %vm113 = vweird.f32 %v106
  %vm114 = vmor %vm112, %vm113
  %v115 = vsel %vm114, %v106, %v111
  %v116 = vrsqrt.pop %v93
  %v117 = vmul.f32 %v116, %v93
  %v118 = vmul.f32 %v117, %v116
  %v119 = vmul.f32 0.5, %v118
  %v120 = vsub.f32 1.5, %v119
  %v121 = vmul.f32 %v116, %v120
  %vm122 = vweird.f32 %v93
  %vm123 = vweird.f32 %v116
  %vm124 = vmor %vm122, %vm123
  %v125 = vsel %vm124, %v116, %v121
  %v126 = vrsqrt.pop %v94
  %v127 = vmul.f32 %v126, %v94
  %v128 = vmul.f32 %v127, %v126
  %v129 = vmul.f32 0.5, %v128
  %v130 = vsub.f32 1.5, %v129
  %v131 = vmul.f32 %v126, %v130
  %vm132 = vweird.f32 %v94
  %vm133 = vweird.f32 %v126
  %vm134 = vmor %vm132, %vm133
  %v135 = vsel %vm134, %v126, %v131
  %v136 = vrsqrt.pop %v95
  %v137 = vmul.f32 %v136, %v95
  %v138 = vmul.f32 %v137, %v136
  %v139 = vmul.f32 0.5, %v138
  %v140 = vsub.f32 1.5, %v139
  %v141 = vmul.f32 %v136, %v140
  %vm142 = vweird.f32 %v95
  %vm143 = vweird.f32 %v136
  %vm144 = vmor %vm142, %vm143
  %v145 = vsel %vm144, %v136, %v141
  %v146 = vmul.f32 %v61, %v105
  %v147 = vmul.f32 %v62, %v115
  %v148 = vmul.f32 %v63, %v125
  %v149 = vmul.f32 %v64, %v135
  %v150 = vmul.f32 %v65, %v145
  %v151 = vld [vmem:[%s1] sm:$0x1]
  %v153 = vperm.slane %v151, 0
  %v155 = vmul.f32 %v146, %v153
  %v156 = vmul.f32 %v147, %v153
  %v157 = vmul.f32 %v148, %v153
  %v158 = vmul.f32 %v149, %v153
  %v159 = vmul.f32 %v150, %v153
  %v160 = vld [vmem:[%s2] sm:$0x1]
  %v162 = vperm.slane %v160, 0
  %v164 = vadd.f32 %v155, %v162
  %v165 = vadd.f32 %v156, %v162
  %v166 = vadd.f32 %v157, %v162
  %v167 = vadd.f32 %v158, %v162
  %v168 = vadd.f32 %v159, %v162
  %v169 = vpack.c.bf16 %v165, %v164
  %v170 = vpack.c.bf16 %v167, %v166
  %v171 = vpack.c.bf16 %v168, %v168
  %v172 = vld [vmem:[%s3] sm:$0xff]
  %v173 = vld [vmem:[%s3 + $0x8] sm:$0xff]
  %v174 = vld [vmem:[%s3 + $0x10] sm:$0xff]
  %v175 = vld [vmem:[%s3 + $0x18] sm:$0xff]
  %v176 = vld [vmem:[%s3 + $0x20] sm:$0xff]
  %v177 = vld [vmem:[%s3 + $0x28] sm:$0xff]
  %v178 = vld [vmem:[%s3 + $0x30] sm:$0xff]
  %v179 = vld [vmem:[%s3 + $0x38] sm:$0xff]
  %v180 = vld [vmem:[%s4] sm:$0x3]
  %v182 = vperm.slane %v180, 0
  %v183 = vperm.slane %v180, 1
  %v194 = vunpack.c.l.b16 %v172
  %v195 = vunpack.c.h.b16 %v172
  %v196 = vunpack.c.l.b16 %v173
  %v197 = vunpack.c.h.b16 %v173
  %v198 = vunpack.c.l.b16 %v174
  %v199 = vunpack.c.h.b16 %v174
  %v200 = vunpack.c.l.b16 %v175
  %v201 = vunpack.c.h.b16 %v175
  %v202 = vunpack.c.l.b16 %v176
  %v203 = vunpack.c.h.b16 %v176
  %v204 = vunpack.c.l.b16 %v177
  %v205 = vunpack.c.h.b16 %v177
  %v206 = vunpack.c.l.b16 %v178
  %v207 = vunpack.c.h.b16 %v178
  %v208 = vunpack.c.l.b16 %v179
  %v209 = vunpack.c.h.b16 %v179
  %v210 = vpack.c.b16 %v196, %v194
  %v211 = vpack.c.b16 %v197, %v195
  %v212 = vpack.c.b16 %v200, %v198
  %v213 = vpack.c.b16 %v201, %v199
  %v214 = vpack.c.b16 %v204, %v202
  %v215 = vpack.c.b16 %v205, %v203
  %v216 = vpack.c.b16 %v208, %v206
  %v217 = vpack.c.b16 %v209, %v207
  %v227 = vsel %vm32, %v169, 0
  %v230 = vsel %vm32, %v170, 0
  %v233 = vsel %vm32, %v171, 0
  %235 = vmatpush.bf16.msra.mxu0 0
  %236 = vmatpush.bf16.msra.mxu0 0
  %237 = vmatpush.bf16.msra.mxu0 0
  %238 = vmatpush.bf16.msra.mxu0 0
  %239 = vmatpush.bf16.msra.mxu0 %v216
  %240 = vmatpush.bf16.msra.mxu0 %v214
  %241 = vmatpush.bf16.msra.mxu0 %v212
  %242 = vmatpush.bf16.msra.mxu0 %v210
  %243 = vmatmul.bf16.gmra.mxu0 %v227
  %v244 = vpop.f32.mrf.mxu0
  %v245 = vadd.f32 %v182, %v244
  %v246 = vpop.f32.mrf.mxu0
  %v247 = vadd.f32 %v182, %v246
  %248 = vmatmul.bf16.gmra.mxu0 %v230
  %v249 = vpop.f32.mrf.mxu0
  %v250 = vadd.f32 %v182, %v249
  %v251 = vpop.f32.mrf.mxu0
  %v252 = vadd.f32 %v182, %v251
  %253 = vmatmul.bf16.gmra.mxu0 %v233
  %v254 = vpop.f32.mrf.mxu0
  %v255 = vadd.f32 %v182, %v254
  %v256 = vpop.f32.mrf.mxu0
  %257 = vdwg.mxu0
  %258 = vmatpush.bf16.msra.mxu0 0
  %259 = vmatpush.bf16.msra.mxu0 0
  %260 = vmatpush.bf16.msra.mxu0 0
  %261 = vmatpush.bf16.msra.mxu0 0
  %262 = vmatpush.bf16.msra.mxu0 %v217
  %263 = vmatpush.bf16.msra.mxu0 %v215
  %264 = vmatpush.bf16.msra.mxu0 %v213
  %265 = vmatpush.bf16.msra.mxu0 %v211
  %266 = vmatmul.bf16.gmra.mxu0 %v227
  %v267 = vpop.f32.mrf.mxu0
  %v268 = vadd.f32 %v183, %v267
  %v269 = vpop.f32.mrf.mxu0
  %v270 = vadd.f32 %v183, %v269
  %271 = vmatmul.bf16.gmra.mxu0 %v230
  %v272 = vpop.f32.mrf.mxu0
  %v273 = vadd.f32 %v183, %v272
  %v274 = vpop.f32.mrf.mxu0
  %v275 = vadd.f32 %v183, %v274
  %276 = vmatmul.bf16.gmra.mxu0 %v233
  %v277 = vpop.f32.mrf.mxu0
  %v278 = vadd.f32 %v183, %v277
  %v279 = vpop.f32.mrf.mxu0
  %280 = vdwg.mxu0
  %v281 = vmul.f32 %v245, 1.702
  %v282 = vmul.f32 %v268, 1.702
  %v283 = vmul.f32 %v247, 1.702
  %v284 = vmul.f32 %v270, 1.702
  %v285 = vmul.f32 %v250, 1.702
  %v286 = vmul.f32 %v273, 1.702
  %v287 = vmul.f32 %v252, 1.702
  %v288 = vmul.f32 %v275, 1.702
  %v289 = vmul.f32 %v255, 1.702
  %v290 = vmul.f32 %v278, 1.702
  %v291 = vxor.u32 %v281, 2147483648
  %v292 = vxor.u32 %v282, 2147483648
  %v293 = vxor.u32 %v283, 2147483648
  %v294 = vxor.u32 %v284, 2147483648
  %v295 = vxor.u32 %v285, 2147483648
  %v296 = vxor.u32 %v286, 2147483648
  %v297 = vxor.u32 %v287, 2147483648
  %v298 = vxor.u32 %v288, 2147483648
  %v299 = vxor.u32 %v289, 2147483648
  %v300 = vxor.u32 %v290, 2147483648
  %v301 = vmul.f32 %v291, 1.442695
  %v302 = vpow.pop %v301
  %v303 = vmul.f32 %v292, 1.442695
  %v304 = vpow.pop %v303
  %v305 = vmul.f32 %v293, 1.442695
  %v306 = vpow.pop %v305
  %v307 = vmul.f32 %v294, 1.442695
  %v308 = vpow.pop %v307
  %v309 = vmul.f32 %v295, 1.442695
  %v310 = vpow.pop %v309
  %v311 = vmul.f32 %v296, 1.442695
  %v312 = vpow.pop %v311
  %v313 = vmul.f32 %v297, 1.442695
  %v314 = vpow.pop %v313
  %v315 = vmul.f32 %v298, 1.442695
  %v316 = vpow.pop %v315
  %v317 = vmul.f32 %v299, 1.442695
  %v318 = vpow.pop %v317
  %v319 = vmul.f32 %v300, 1.442695
  %v320 = vpow.pop %v319
  %v321 = vadd.f32 %v302, 1.0
  %v322 = vadd.f32 %v304, 1.0
  %v323 = vadd.f32 %v306, 1.0
  %v324 = vadd.f32 %v308, 1.0
  %v325 = vadd.f32 %v310, 1.0
  %v326 = vadd.f32 %v312, 1.0
  %v327 = vadd.f32 %v314, 1.0
  %v328 = vadd.f32 %v316, 1.0
  %v329 = vadd.f32 %v318, 1.0
  %v330 = vadd.f32 %v320, 1.0
  %v331 = vrcp.pop %v321
  %v332 = vmul.f32 %v321, %v331
  %v333 = vsub.f32 1.0, %v332
  %v334 = vmul.f32 %v331, %v333
  %v335 = vadd.f32 %v331, %v334
  %vm336 = vweird.f32 %v321
  %vm337 = vweird.f32 %v331
  %vm338 = vmor %vm336, %vm337
  %v339 = vsel %vm338, %v331, %v335
  %v340 = vand.u32 2147483647, %v321
  %vm341 = vcmp.eq.f32.partialorder %v340, 8.507059e+37
  %v342 = vand.u32 %v321, 2147483648
  %v343 = vor.u32 1.1754944e-38, %v342
  %v344 = vsel %vm341, %v343, %v339
  %v345 = vmul.f32 1.0, %v344
  %v346 = vrcp.pop %v322
  %v347 = vmul.f32 %v322, %v346
  %v348 = vsub.f32 1.0, %v347
  %v349 = vmul.f32 %v346, %v348
  %v350 = vadd.f32 %v346, %v349
  %vm351 = vweird.f32 %v322
  %vm352 = vweird.f32 %v346
  %vm353 = vmor %vm351, %vm352
  %v354 = vsel %vm353, %v346, %v350
  %v355 = vand.u32 2147483647, %v322
  %vm356 = vcmp.eq.f32.partialorder %v355, 8.507059e+37
  %v357 = vand.u32 %v322, 2147483648
  %v358 = vor.u32 1.1754944e-38, %v357
  %v359 = vsel %vm356, %v358, %v354
  %v360 = vmul.f32 1.0, %v359
  %v361 = vrcp.pop %v323
  %v362 = vmul.f32 %v323, %v361
  %v363 = vsub.f32 1.0, %v362
  %v364 = vmul.f32 %v361, %v363
  %v365 = vadd.f32 %v361, %v364
  %vm366 = vweird.f32 %v323
  %vm367 = vweird.f32 %v361
  %vm368 = vmor %vm366, %vm367
  %v369 = vsel %vm368, %v361, %v365
  %v370 = vand.u32 2147483647, %v323
  %vm371 = vcmp.eq.f32.partialorder %v370, 8.507059e+37
  %v372 = vand.u32 %v323, 2147483648
  %v373 = vor.u32 1.1754944e-38, %v372
  %v374 = vsel %vm371, %v373, %v369
  %v375 = vmul.f32 1.0, %v374
  %v376 = vrcp.pop %v324
  %v377 = vmul.f32 %v324, %v376
  %v378 = vsub.f32 1.0, %v377
  %v379 = vmul.f32 %v376, %v378
  %v380 = vadd.f32 %v376, %v379
  %vm381 = vweird.f32 %v324
  %vm382 = vweird.f32 %v376
  %vm383 = vmor %vm381, %vm382
  %v384 = vsel %vm383, %v376, %v380
  %v385 = vand.u32 2147483647, %v324
  %vm386 = vcmp.eq.f32.partialorder %v385, 8.507059e+37
  %v387 = vand.u32 %v324, 2147483648
  %v388 = vor.u32 1.1754944e-38, %v387
  %v389 = vsel %vm386, %v388, %v384
  %v390 = vmul.f32 1.0, %v389
  %v391 = vrcp.pop %v325
  %v392 = vmul.f32 %v325, %v391
  %v393 = vsub.f32 1.0, %v392
  %v394 = vmul.f32 %v391, %v393
  %v395 = vadd.f32 %v391, %v394
  %vm396 = vweird.f32 %v325
  %vm397 = vweird.f32 %v391
  %vm398 = vmor %vm396, %vm397
  %v399 = vsel %vm398, %v391, %v395
  %v400 = vand.u32 2147483647, %v325
  %vm401 = vcmp.eq.f32.partialorder %v400, 8.507059e+37
  %v402 = vand.u32 %v325, 2147483648
  %v403 = vor.u32 1.1754944e-38, %v402
  %v404 = vsel %vm401, %v403, %v399
  %v405 = vmul.f32 1.0, %v404
  %v406 = vrcp.pop %v326
  %v407 = vmul.f32 %v326, %v406
  %v408 = vsub.f32 1.0, %v407
  %v409 = vmul.f32 %v406, %v408
  %v410 = vadd.f32 %v406, %v409
  %vm411 = vweird.f32 %v326
  %vm412 = vweird.f32 %v406
  %vm413 = vmor %vm411, %vm412
  %v414 = vsel %vm413, %v406, %v410
  %v415 = vand.u32 2147483647, %v326
  %vm416 = vcmp.eq.f32.partialorder %v415, 8.507059e+37
  %v417 = vand.u32 %v326, 2147483648
  %v418 = vor.u32 1.1754944e-38, %v417
  %v419 = vsel %vm416, %v418, %v414
  %v420 = vmul.f32 1.0, %v419
  %v421 = vrcp.pop %v327
  %v422 = vmul.f32 %v327, %v421
  %v423 = vsub.f32 1.0, %v422
  %v424 = vmul.f32 %v421, %v423
  %v425 = vadd.f32 %v421, %v424
  %vm426 = vweird.f32 %v327
  %vm427 = vweird.f32 %v421
  %vm428 = vmor %vm426, %vm427
  %v429 = vsel %vm428, %v421, %v425
  %v430 = vand.u32 2147483647, %v327
  %vm431 = vcmp.eq.f32.partialorder %v430, 8.507059e+37
  %v432 = vand.u32 %v327, 2147483648
  %v433 = vor.u32 1.1754944e-38, %v432
  %v434 = vsel %vm431, %v433, %v429
  %v435 = vmul.f32 1.0, %v434
  %v436 = vrcp.pop %v328
  %v437 = vmul.f32 %v328, %v436
  %v438 = vsub.f32 1.0, %v437
  %v439 = vmul.f32 %v436, %v438
  %v440 = vadd.f32 %v436, %v439
  %vm441 = vweird.f32 %v328
  %vm442 = vweird.f32 %v436
  %vm443 = vmor %vm441, %vm442
  %v444 = vsel %vm443, %v436, %v440
  %v445 = vand.u32 2147483647, %v328
  %vm446 = vcmp.eq.f32.partialorder %v445, 8.507059e+37
  %v447 = vand.u32 %v328, 2147483648
  %v448 = vor.u32 1.1754944e-38, %v447
  %v449 = vsel %vm446, %v448, %v444
  %v450 = vmul.f32 1.0, %v449
  %v451 = vrcp.pop %v329
  %v452 = vmul.f32 %v329, %v451
  %v453 = vsub.f32 1.0, %v452
  %v454 = vmul.f32 %v451, %v453
  %v455 = vadd.f32 %v451, %v454
  %vm456 = vweird.f32 %v329
  %vm457 = vweird.f32 %v451
  %vm458 = vmor %vm456, %vm457
  %v459 = vsel %vm458, %v451, %v455
  %v460 = vand.u32 2147483647, %v329
  %vm461 = vcmp.eq.f32.partialorder %v460, 8.507059e+37
  %v462 = vand.u32 %v329, 2147483648
  %v463 = vor.u32 1.1754944e-38, %v462
  %v464 = vsel %vm461, %v463, %v459
  %v465 = vmul.f32 1.0, %v464
  %v466 = vrcp.pop %v330
  %v467 = vmul.f32 %v330, %v466
  %v468 = vsub.f32 1.0, %v467
  %v469 = vmul.f32 %v466, %v468
  %v470 = vadd.f32 %v466, %v469
  %vm471 = vweird.f32 %v330
  %vm472 = vweird.f32 %v466
  %vm473 = vmor %vm471, %vm472
  %v474 = vsel %vm473, %v466, %v470
  %v475 = vand.u32 2147483647, %v330
  %vm476 = vcmp.eq.f32.partialorder %v475, 8.507059e+37
  %v477 = vand.u32 %v330, 2147483648
  %v478 = vor.u32 1.1754944e-38, %v477
  %v479 = vsel %vm476, %v478, %v474
  %v480 = vmul.f32 1.0, %v479
  %v481 = vmul.f32 %v245, %v345
  %v482 = vmul.f32 %v268, %v360
  %v483 = vmul.f32 %v247, %v375
  %v484 = vmul.f32 %v270, %v390
  %v485 = vmul.f32 %v250, %v405
  %v486 = vmul.f32 %v273, %v420
  %v487 = vmul.f32 %v252, %v435
  %v488 = vmul.f32 %v275, %v450
  %v489 = vmul.f32 %v255, %v465
  %v490 = vmul.f32 %v278, %v480
  %v491 = vpack.c.bf16 %v483, %v481
  %v492 = vpack.c.bf16 %v484, %v482
  %v493 = vpack.c.bf16 %v487, %v485
  %v494 = vpack.c.bf16 %v488, %v486
  %v495 = vpack.c.bf16 %v489, %v489
  %v496 = vpack.c.bf16 %v490, %v490
  %v497 = vld [vmem:[%s5] sm:$0xf]
  %v498 = vld [vmem:[%s5 + $0x4] sm:$0xf]
  %v499 = vld [vmem:[%s5 + $0x8] sm:$0xf]
  %v500 = vld [vmem:[%s5 + $0xc] sm:$0xf]
  %v501 = vld [vmem:[%s5 + $0x10] sm:$0xf]
  %v502 = vld [vmem:[%s5 + $0x14] sm:$0xf]
  %v503 = vld [vmem:[%s5 + $0x18] sm:$0xf]
  %v504 = vld [vmem:[%s5 + $0x1c] sm:$0xf]
  %v505 = vld [vmem:[%s5 + $0x20] sm:$0xf]
  %v506 = vld [vmem:[%s5 + $0x24] sm:$0xf]
  %v507 = vld [vmem:[%s5 + $0x28] sm:$0xf]
  %v508 = vld [vmem:[%s5 + $0x2c] sm:$0xf]
  %v509 = vld [vmem:[%s5 + $0x30] sm:$0xf]
  %v510 = vld [vmem:[%s5 + $0x34] sm:$0xf]
  %v511 = vld [vmem:[%s5 + $0x38] sm:$0xf]
  %v512 = vld [vmem:[%s5 + $0x3c] sm:$0xf]
  %v513 = vld [vmem:[%s5 + $0x40] sm:$0xf]
  %v514 = vld [vmem:[%s5 + $0x44] sm:$0xf]
  %v515 = vld [vmem:[%s5 + $0x48] sm:$0xf]
  %v516 = vld [vmem:[%s5 + $0x4c] sm:$0xf]
  %v517 = vld [vmem:[%s5 + $0x50] sm:$0xf]
  %v518 = vld [vmem:[%s5 + $0x54] sm:$0xf]
  %v519 = vld [vmem:[%s5 + $0x58] sm:$0xf]
  %v520 = vld [vmem:[%s5 + $0x5c] sm:$0xf]
  %v521 = vld [vmem:[%s5 + $0x60] sm:$0xf]
  %v522 = vld [vmem:[%s5 + $0x64] sm:$0xf]
  %v523 = vld [vmem:[%s5 + $0x68] sm:$0xf]
  %v524 = vld [vmem:[%s5 + $0x6c] sm:$0xf]
  %v525 = vld [vmem:[%s5 + $0x70] sm:$0xf]
  %v526 = vld [vmem:[%s5 + $0x74] sm:$0xf]
  %v527 = vld [vmem:[%s5 + $0x78] sm:$0xf]
  %v528 = vld [vmem:[%s5 + $0x7c] sm:$0xf]
  %v529 = vld [vmem:[%s6] sm:$0x1]
  %v531 = vperm.slane %v529, 0
  %v565 = vunpack.c.l.b16 %v497
  %v566 = vunpack.c.l.b16 %v498
  %v567 = vunpack.c.l.b16 %v499
  %v568 = vunpack.c.l.b16 %v500
  %v569 = vunpack.c.l.b16 %v501
  %v570 = vunpack.c.l.b16 %v502
  %v571 = vunpack.c.l.b16 %v503
  %v572 = vunpack.c.l.b16 %v504
  %v573 = vunpack.c.l.b16 %v505
  %v574 = vunpack.c.l.b16 %v506
  %v575 = vunpack.c.l.b16 %v507
  %v576 = vunpack.c.l.b16 %v508
  %v577 = vunpack.c.l.b16 %v509
  %v578 = vunpack.c.l.b16 %v510
  %v579 = vunpack.c.l.b16 %v511
  %v580 = vunpack.c.l.b16 %v512
  %v581 = vunpack.c.l.b16 %v513
  %v582 = vunpack.c.l.b16 %v514
  %v583 = vunpack.c.l.b16 %v515
  %v584 = vunpack.c.l.b16 %v516
  %v585 = vunpack.c.l.b16 %v517
  %v586 = vunpack.c.l.b16 %v518
  %v587 = vunpack.c.l.b16 %v519
  %v588 = vunpack.c.l.b16 %v520
  %v589 = vunpack.c.l.b16 %v521
  %v590 = vunpack.c.l.b16 %v522
  %v591 = vunpack.c.l.b16 %v523
  %v592 = vunpack.c.l.b16 %v524
  %v593 = vunpack.c.l.b16 %v525
  %v594 = vunpack.c.l.b16 %v526
  %v595 = vunpack.c.l.b16 %v527
  %v596 = vunpack.c.l.b16 %v528
  %v597 = vpack.c.b16 %v566, %v565
  %v598 = vpack.c.b16 %v568, %v567
  %v599 = vpack.c.b16 %v570, %v569
  %v600 = vpack.c.b16 %v572, %v571
  %v601 = vpack.c.b16 %v574, %v573
  %v602 = vpack.c.b16 %v576, %v575
  %v603 = vpack.c.b16 %v578, %v577
  %v604 = vpack.c.b16 %v580, %v579
  %v605 = vpack.c.b16 %v582, %v581
  %v606 = vpack.c.b16 %v584, %v583
  %v607 = vpack.c.b16 %v586, %v585
  %v608 = vpack.c.b16 %v588, %v587
  %v609 = vpack.c.b16 %v590, %v589
  %v610 = vpack.c.b16 %v592, %v591
  %v611 = vpack.c.b16 %v594, %v593
  %v612 = vpack.c.b16 %v596, %v595
  %629 = vmatpush.bf16.msra.mxu0 %v604
  %630 = vmatpush.bf16.msra.mxu0 %v603
  %631 = vmatpush.bf16.msra.mxu0 %v602
  %632 = vmatpush.bf16.msra.mxu0 %v601
  %633 = vmatpush.bf16.msra.mxu0 %v600
  %634 = vmatpush.bf16.msra.mxu0 %v599
  %635 = vmatpush.bf16.msra.mxu0 %v598
  %636 = vmatpush.bf16.msra.mxu0 %v597
  %637 = vmatmul.bf16.gmra.mxu0 %v491
  %v638 = vpop.f32.mrf.mxu0
  %v639 = vadd.f32 %v531, %v638
  %v640 = vpop.f32.mrf.mxu0
  %v641 = vadd.f32 %v531, %v640
  %642 = vmatmul.bf16.gmra.mxu0 %v493
  %v643 = vpop.f32.mrf.mxu0
  %v644 = vadd.f32 %v531, %v643
  %v645 = vpop.f32.mrf.mxu0
  %v646 = vadd.f32 %v531, %v645
  %647 = vmatmul.bf16.gmra.mxu0 %v495
  %v648 = vpop.f32.mrf.mxu0
  %v649 = vadd.f32 %v531, %v648
  %v650 = vpop.f32.mrf.mxu0
  %651 = vdwg.mxu0
  %652 = vmatpush.bf16.msra.mxu0 %v612
  %653 = vmatpush.bf16.msra.mxu0 %v611
  %654 = vmatpush.bf16.msra.mxu0 %v610
  %655 = vmatpush.bf16.msra.mxu0 %v609
  %656 = vmatpush.bf16.msra.mxu0 %v608
  %657 = vmatpush.bf16.msra.mxu0 %v607
  %658 = vmatpush.bf16.msra.mxu0 %v606
  %659 = vmatpush.bf16.msra.mxu0 %v605
  %660 = vmatmul.bf16.gmra.mxu0 %v492
  %v661 = vpop.f32.mrf.mxu0
  %v662 = vadd.f32 %v639, %v661
  %v663 = vpop.f32.mrf.mxu0
  %v664 = vadd.f32 %v641, %v663
  %665 = vmatmul.bf16.gmra.mxu0 %v494
  %v666 = vpop.f32.mrf.mxu0
  %v667 = vadd.f32 %v644, %v666
  %v668 = vpop.f32.mrf.mxu0
  %v669 = vadd.f32 %v646, %v668
  %670 = vmatmul.bf16.gmra.mxu0 %v496
  %v671 = vpop.f32.mrf.mxu0
  %v672 = vadd.f32 %v649, %v671
  %v673 = vpop.f32.mrf.mxu0
  %674 = vdwg.mxu0
  %v675 = vadd.f32 %v27, %v662
  %v676 = vadd.f32 %v28, %v664
  %v677 = vadd.f32 %v29, %v667
  %v678 = vadd.f32 %v30, %v669
  %v679 = vadd.f32 %v31, %v672
  %680 = vst.msk [vmem:[%s7] sm:$0xff] %vm32, %v675
  %681 = vst.msk [vmem:[%s7 + $0x8] sm:$0xff] %vm32, %v676
  %682 = vst.msk [vmem:[%s7 + $0x10] sm:$0xff] %vm32, %v677
  %683 = vst.msk [vmem:[%s7 + $0x18] sm:$0xff] %vm32, %v678
  %684 = vst.msk [vmem:[%s7 + $0x20] sm:$0x3] %vm45, %v679
  // Predicated region
  $region30: #{clip_forward.26} parent=0 // pred_check
    _
  $region31: #{clip_forward.26} parent=0 // pred_check_branch
    %686 = sbr.rel (0) target = $region33
  $region32: #{clip_forward.26} parent=0 // pred_region
    _
  $region33: #{clip_forward.26} parent=0 // pred_fallthru
    _
  // Predicated region
  $region34: #{clip_forward.26} parent=0 // pred_check
    _
  $region35: #{clip_forward.26} parent=0 // pred_check_branch
    %688 = sbr.rel (0) target = $region37
  $region36: #{clip_forward.26} parent=0 // pred_region
    _
  $region37: #{clip_forward.26} parent=0 // pred_fallthru
    _

// kernel: clip_forward.31
$region0: #{clip_forward.31}
  #allocation0 [shape = 'u32[]', space=smem, size = 0x4, offset = 0x4, fixed_abs, tag = 'smem constant byte address 0x4 - core index']
  #allocation1 [shape = 'u32[72,128]{1,0:T(1,128)}', space=vmem, size = 0x9000, scoped, tag = 'internal scratch']
  %s0 = inlined_call_operand.vmem [shape: f32[2,64], index: 0, kind: input, shape index: {}]
  %s1 = inlined_call_operand.vmem [shape: f32[1,64], index: 1, kind: input, shape index: {}]
  %s2 = inlined_call_operand.vmem [shape: f32[1,64], index: 2, kind: input, shape index: {}]
  %s3 = inlined_call_operand.vmem [shape: bf16[64,32], index: 3, kind: input, shape index: {}]
  %s4 = inlined_call_operand.vmem [shape: f32[1,32], index: 4, kind: input, shape index: {}]
  %s5 = inlined_call_operand.vmem [shape: f32[2,32], index: 5, kind: output, shape index: {}]
  %s6 = sld [smem:[#allocation0]]
  $region30: #{clip_forward.31} parent=0
    _
  %s8 = ssub.s32 1, %s6
  %s9 = scalar_select 0, %s8, %s6
  // Predicated region
  $region2: #{clip_forward.31} parent=0 // pred_check
    _
  $region3: #{clip_forward.31} parent=0 // pred_check_branch
    %11 = sbr.rel (0) target = $region5
  $region4: #{clip_forward.31} parent=0 // pred_region
    _
  $region5: #{clip_forward.31} parent=0 // pred_fallthru
    _
  // Predicated region
  $region6: #{clip_forward.31} parent=0 // pred_check
    _
  $region7: #{clip_forward.31} parent=0 // pred_check_branch
    %13 = sbr.rel (0) target = $region9
  $region8: #{clip_forward.31} parent=0 // pred_region
    _
  $region9: #{clip_forward.31} parent=0 // pred_fallthru
    _
  // Predicated region
  $region10: #{clip_forward.31} parent=0 // pred_check
    _
  $region11: #{clip_forward.31} parent=0 // pred_check_branch
    %15 = sbr.rel (0) target = $region13
  $region12: #{clip_forward.31} parent=0 // pred_region
    _
  $region13: #{clip_forward.31} parent=0 // pred_fallthru
    _
  // Predicated region
  $region14: #{clip_forward.31} parent=0 // pred_check
    _
  $region15: #{clip_forward.31} parent=0 // pred_check_branch
    %17 = sbr.rel (0) target = $region17
  $region16: #{clip_forward.31} parent=0 // pred_region
    _
  $region17: #{clip_forward.31} parent=0 // pred_fallthru
    _
  // Predicated region
  $region18: #{clip_forward.31} parent=0 // pred_check
    _
  $region19: #{clip_forward.31} parent=0 // pred_check_branch
    %19 = sbr.rel (0) target = $region21
  $region20: #{clip_forward.31} parent=0 // pred_region
    _
  $region21: #{clip_forward.31} parent=0 // pred_fallthru
    _
  %v21 = vld [vmem:[%s0] sm:$0x3]
  %vm22 = vcmask 517120
  %v23 = vsel %vm22, %v21, 0.0
  %24 = vadd.xlane.f32.xlu0 %v23
  %v25 = vpop.xlane.xlu0 %24
  %v26 = vrcp.pop 64.0
  %v27 = vmul.f32 64.0, %v26
  %v28 = vsub.f32 1.0, %v27
  %v29 = vmul.f32 %v26, %v28
  %v30 = vadd.f32 %v26, %v29
  %vm31 = vweird.f32 %v26
  %v32 = vsel %vm31, %v26, %v30
  %v33 = vmul.f32 %v25, %v32
  %v34 = vsub.f32 %v21, %v33
  %v35 = vmul.f32 %v34, %v34
  %v36 = vsel %vm22, %v35, 0.0
  %37 = vadd.xlane.f32.xlu0 %v36
  %v38 = vpop.xlane.xlu0 %37
  %v39 = vmul.f32 %v38, %v32
  %v40 = vadd.f32 %v39, 1e-05
  %v41 = vrsqrt.pop %v40
  %v42 = vmul.f32 %v41, %v40
  %v43 = vmul.f32 %v42, %v41
  %v44 = vmul.f32 0.5, %v43
  %v45 = vsub.f32 1.5, %v44
  %v46 = vmul.f32 %v41, %v45
  %vm47 = vweird.f32 %v40
  %vm48 = vweird.f32 %v41
  %vm49 = vmor %vm47, %vm48
  %v50 = vsel %vm49, %v41, %v46
  %v51 = vmul.f32 %v34, %v50
  %v52 = vld [vmem:[%s1] sm:$0x1]
  %v54 = vperm.slane %v52, 0
  %v56 = vmul.f32 %v51, %v54
  %v57 = vld [vmem:[%s2] sm:$0x1]
  %v59 = vperm.slane %v57, 0
  %v61 = vadd.f32 %v56, %v59
  %v62 = vpack.c.bf16 %v61, %v61
  %v63 = vld [vmem:[%s3] sm:$0xf]
  %v64 = vld [vmem:[%s3 + $0x4] sm:$0xf]
  %v65 = vld [vmem:[%s3 + $0x8] sm:$0xf]
  %v66 = vld [vmem:[%s3 + $0xc] sm:$0xf]
  %v67 = vld [vmem:[%s3 + $0x10] sm:$0xf]
  %v68 = vld [vmem:[%s3 + $0x14] sm:$0xf]
  %v69 = vld [vmem:[%s3 + $0x18] sm:$0xf]
  %v70 = vld [vmem:[%s3 + $0x1c] sm:$0xf]
  %v71 = vld [vmem:[%s4] sm:$0x1]
  %v73 = vperm.slane %v71, 0
  %v83 = vunpack.c.l.b16 %v63
  %v84 = vunpack.c.l.b16 %v64
  %v85 = vunpack.c.l.b16 %v65
  %v86 = vunpack.c.l.b16 %v66
  %v87 = vunpack.c.l.b16 %v67
  %v88 = vunpack.c.l.b16 %v68
  %v89 = vunpack.c.l.b16 %v69
  %v90 = vunpack.c.l.b16 %v70
  %v91 = vpack.c.b16 %v84, %v83
  %v92 = vpack.c.b16 %v86, %v85
  %v93 = vpack.c.b16 %v88, %v87
  %v94 = vpack.c.b16 %v90, %v89
  %vm99 = vcmask 523264
  %v101 = vsel %vm99, %v62, 0
  %103 = vmatpush.bf16.msra.mxu0 0
  %104 = vmatpush.bf16.msra.mxu0 0
  %105 = vmatpush.bf16.msra.mxu0 0
  %106 = vmatpush.bf16.msra.mxu0 0
  %107 = vmatpush.bf16.msra.mxu0 %v94
  %108 = vmatpush.bf16.msra.mxu0 %v93
  %109 = vmatpush.bf16.msra.mxu0 %v92
  %110 = vmatpush.bf16.msra.mxu0 %v91
  %111 = vmatmul.bf16.gmra.mxu0 %v101
  %v112 = vpop.f32.mrf.mxu0
  %v113 = vadd.f32 %v73, %v112
  %v114 = vpop.f32.mrf.mxu0
  %115 = vdwg.mxu0
  %vm116 = vcmask 254976
  %117 = vst.msk [vmem:[%s5] sm:$0x3] %vm116, %v113
  // Predicated region
  $region22: #{clip_forward.31} parent=0 // pred_check
    _
  $region23: #{clip_forward.31} parent=0 // pred_check_branch
    %119 = sbr.rel (0) target = $region25
  $region24: #{clip_forward.31} parent=0 // pred_region
    _
  $region25: #{clip_forward.31} parent=0 // pred_fallthru
    _
  // Predicated region
  $region26: #{clip_forward.31} parent=0 // pred_check
    _
  $region27: #{clip_forward.31} parent=0 // pred_check_branch
    %121 = sbr.rel (0) target = $region29
  $region28: #{clip_forward.31} parent=0 // pred_region
    _
  $region29: #{clip_forward.31} parent=0 // pred_fallthru
    _

// kernel: clip_forward.32
$region0: #{clip_forward.32}
  #allocation0 [shape = 'u32[]', space=smem, size = 0x4, offset = 0x4, fixed_abs, tag = 'smem constant byte address 0x4 - core index']
  #allocation1 [shape = 'u32[72,128]{1,0:T(1,128)}', space=vmem, size = 0x9000, scoped, tag = 'internal scratch']
  %s0 = inlined_call_operand.vmem [shape: f32[16,32], index: 0, kind: input, shape index: {}]
  %s1 = inlined_call_operand.vmem [shape: f32[1,32], index: 1, kind: input, shape index: {}]
  %s2 = inlined_call_operand.vmem [shape: f32[1,32], index: 2, kind: input, shape index: {}]
  %s3 = inlined_call_operand.vmem [shape: bf16[32,96], index: 3, kind: input, shape index: {}]
  %s4 = inlined_call_operand.vmem [shape: f32[1,96], index: 4, kind: input, shape index: {}]
  %s5 = inlined_call_operand.vmem [shape: f32[16,96], index: 5, kind: output, shape index: {}]
  %s6 = sld [smem:[#allocation0]]
  $region30: #{clip_forward.32} parent=0
    _
  %s8 = ssub.s32 1, %s6
  %s9 = scalar_select 0, %s8, %s6
  // Predicated region
  $region2: #{clip_forward.32} parent=0 // pred_check
    _
  $region3: #{clip_forward.32} parent=0 // pred_check_branch
    %11 = sbr.rel (0) target = $region5
  $region4: #{clip_forward.32} parent=0 // pred_region
    _
  $region5: #{clip_forward.32} parent=0 // pred_fallthru
    _
  // Predicated region
  $region6: #{clip_forward.32} parent=0 // pred_check
    _
  $region7: #{clip_forward.32} parent=0 // pred_check_branch
    %13 = sbr.rel (0) target = $region9
  $region8: #{clip_forward.32} parent=0 // pred_region
    _
  $region9: #{clip_forward.32} parent=0 // pred_fallthru
    _
  // Predicated region
  $region10: #{clip_forward.32} parent=0 // pred_check
    _
  $region11: #{clip_forward.32} parent=0 // pred_check_branch
    %15 = sbr.rel (0) target = $region13
  $region12: #{clip_forward.32} parent=0 // pred_region
    _
  $region13: #{clip_forward.32} parent=0 // pred_fallthru
    _
  // Predicated region
  $region14: #{clip_forward.32} parent=0 // pred_check
    _
  $region15: #{clip_forward.32} parent=0 // pred_check_branch
    %17 = sbr.rel (0) target = $region17
  $region16: #{clip_forward.32} parent=0 // pred_region
    _
  $region17: #{clip_forward.32} parent=0 // pred_fallthru
    _
  // Predicated region
  $region18: #{clip_forward.32} parent=0 // pred_check
    _
  $region19: #{clip_forward.32} parent=0 // pred_check_branch
    %19 = sbr.rel (0) target = $region21
  $region20: #{clip_forward.32} parent=0 // pred_region
    _
  $region21: #{clip_forward.32} parent=0 // pred_fallthru
    _
  %v21 = vld [vmem:[%s0] sm:$0xff]
  %v22 = vld [vmem:[%s0 + $0x8] sm:$0xff]
  %vm23 = vcmask 261120
  %v24 = vsel %vm23, %v21, 0.0
  %25 = vadd.xlane.f32.xlu0 %v24
  %v26 = vpop.xlane.xlu0 %25
  %v27 = vsel %vm23, %v22, 0.0
  %28 = vadd.xlane.f32.xlu0 %v27
  %v29 = vpop.xlane.xlu0 %28
  %v30 = vrcp.pop 32.0
  %v31 = vmul.f32 32.0, %v30
  %v32 = vsub.f32 1.0, %v31
  %v33 = vmul.f32 %v30, %v32
  %v34 = vadd.f32 %v30, %v33
  %vm35 = vweird.f32 %v30
  %v36 = vsel %vm35, %v30, %v34
  %v37 = vmul.f32 %v26, %v36
  %v38 = vmul.f32 %v29, %v36
  %v39 = vsub.f32 %v21, %v37
  %v40 = vsub.f32 %v22, %v38
  %v41 = vmul.f32 %v39, %v39
  %v42 = vmul.f32 %v40, %v40
  %v43 = vsel %vm23, %v41, 0.0
  %44 = vadd.xlane.f32.xlu0 %v43
  %v45 = vpop.xlane.xlu0 %44
  %v46 = vsel %vm23, %v42, 0.0
  %47 = vadd.xlane.f32.xlu0 %v46
  %v48 = vpop.xlane.xlu0 %47
  %v49 = vmul.f32 %v45, %v36
  %v50 = vmul.f32 %v48, %v36
  %v51 = vadd.f32 %v49, 1e-05
  %v52 = vadd.f32 %v50, 1e-05
  %v53 = vrsqrt.pop %v51
  %v54 = vmul.f32 %v53, %v51
  %v55 = vmul.f32 %v54, %v53
  %v56 = vmul.f32 0.5, %v55
  %v57 = vsub.f32 1.5, %v56
  %v58 = vmul.f32 %v53, %v57
  %vm59 = vweird.f32 %v51
  %vm60 = vweird.f32 %v53
  %vm61 = vmor %vm59, %vm60
  %v62 = vsel %vm61, %v53, %v58
  %v63 = vrsqrt.pop %v52
  %v64 = vmul.f32 %v63, %v52
  %v65 = vmul.f32 %v64, %v63
  %v66 = vmul.f32 0.5, %v65
  %v67 = vsub.f32 1.5, %v66
  %v68 = vmul.f32 %v63, %v67
  %vm69 = vweird.f32 %v52
  %vm70 = vweird.f32 %v63
  %vm71 = vmor %vm69, %vm70
  %v72 = vsel %vm71, %v63, %v68
  %v73 = vmul.f32 %v39, %v62
  %v74 = vmul.f32 %v40, %v72
  %v75 = vld [vmem:[%s1] sm:$0x1]
  %v77 = vperm.slane %v75, 0
  %v79 = vmul.f32 %v73, %v77
  %v80 = vmul.f32 %v74, %v77
  %v81 = vld [vmem:[%s2] sm:$0x1]
  %v83 = vperm.slane %v81, 0
  %v85 = vadd.f32 %v79, %v83
  %v86 = vadd.f32 %v80, %v83
  %v87 = vpack.c.bf16 %v86, %v85
  %v88 = vld [vmem:[%s3] sm:$0xf]
  %v89 = vld [vmem:[%s3 + $0x4] sm:$0xf]
  %v90 = vld [vmem:[%s3 + $0x8] sm:$0xf]
  %v91 = vld [vmem:[%s3 + $0xc] sm:$0xf]
  %v92 = vld [vmem:[%s4] sm:$0x1]
  %v94 = vperm.slane %v92, 0
  %v100 = vunpack.c.l.b16 %v88
  %v101 = vunpack.c.l.b16 %v89
  %v102 = vunpack.c.l.b16 %v90
  %v103 = vunpack.c.l.b16 %v91
  %v104 = vpack.c.b16 %v101, %v100
  %v105 = vpack.c.b16 %v103, %v102
  %v109 = vsel %vm23, %v87, 0
  %111 = vmatpush.bf16.msra.mxu0 0
  %112 = vmatpush.bf16.msra.mxu0 0
  %113 = vmatpush.bf16.msra.mxu0 0
  %114 = vmatpush.bf16.msra.mxu0 0
  %115 = vmatpush.bf16.msra.mxu0 0
  %116 = vmatpush.bf16.msra.mxu0 0
  %117 = vmatpush.bf16.msra.mxu0 %v105
  %118 = vmatpush.bf16.msra.mxu0 %v104
  %119 = vmatmul.bf16.gmra.mxu0 %v109
  %v120 = vpop.f32.mrf.mxu0
  %v121 = vadd.f32 %v94, %v120
  %v122 = vpop.f32.mrf.mxu0
  %v123 = vadd.f32 %v94, %v122
  %124 = vdwg.mxu0
  %vm125 = vcmask 785408
  %126 = vst.msk [vmem:[%s5] sm:$0xff] %vm125, %v121
  %127 = vst.msk [vmem:[%s5 + $0x8] sm:$0xff] %vm125, %v123
  // Predicated region
  $region22: #{clip_forward.32} parent=0 // pred_check
    _
  $region23: #{clip_forward.32} parent=0 // pred_check_branch
    %129 = sbr.rel (0) target = $region25
  $region24: #{clip_forward.32} parent=0 // pred_region
    _
  $region25: #{clip_forward.32} parent=0 // pred_fallthru
    _
  // Predicated region
  $region26: #{clip_forward.32} parent=0 // pred_check
    _
  $region27: #{clip_forward.32} parent=0 // pred_check_branch
    %131 = sbr.rel (0) target = $region29
  $region28: #{clip_forward.32} parent=0 // pred_region
    _
  $region29: #{clip_forward.32} parent=0 // pred_fallthru
    _

// kernel: clip_forward.33
$region0: #{clip_forward.33}
  #allocation0 [shape = 'u32[]', space=smem, size = 0x4, offset = 0x4, fixed_abs, tag = 'smem constant byte address 0x4 - core index']
  #allocation1 [shape = 'u32[72,128]{1,0:T(1,128)}', space=vmem, size = 0x9000, scoped, tag = 'internal scratch']
  %s0 = inlined_call_operand.vmem [shape: f32[2,8,96], index: 0, kind: input, shape index: {}]
  %s1 = inlined_call_operand.vmem [shape: f32[8,8], index: 1, kind: input, shape index: {}]
  %s2 = inlined_call_operand.vmem [shape: f32[2,8,32], index: 2, kind: output, shape index: {}]
  %s3 = sld [smem:[#allocation0]]
  $region41: #{clip_forward.33} parent=0
    _
  %s5 = ssub.s32 1, %s3
  %s6 = scalar_select 0, %s5, %s3
  loop: start=0, step=1, limit=4
  $region2: #{clip_forward.33} parent=0 // loop_pre_header
    _
  $region3: #{clip_forward.33} parent=0 // loop_header
    %s8 = sphi 0, %s12
    %p9 = scmp.ge.s32.totalorder %s8, 4
    %s18 = sphi 0, %s20
    %s21 = sphi 0, %s18
    %s22 = sphi 0, %s21
    %s38 = sphi 0, %s22
    %s42 = sphi 0, %s42
    %s44 = sphi 0, %s42
    %s45 = sphi 0, %s44
    %s59 = sphi 0, %s45
    %s65 = sphi 0, %s67
    %s68 = sphi 0, %s65
    %s69 = sphi 0, %s68
    %s85 = sphi 0, %s69
  $region4: #{clip_forward.33} parent=0 // loop_header_branch
    %11 = sbr.rel (%p9) target = $region8
  $region5: #{clip_forward.33} parent=0 // loop_body
    %s13 = ssub.s32 %s8, 1
    %s14 = ssub.s32 %s8, 2
    %s15 = sadd.s32 %s8, 1
    %s16 = ssub.s32 %s8, %s15
    %p17 = scmp.eq.s32.totalorder %s16, 0
    %s19 = sadd.s32 %s18, 1
    %s20 = scalar_select %p17, %s18, %s19
    %p23 = pneg %p17
    %p24 = scmp.eq.s32.totalorder %s8, 1
    %p25 = por %p23, %p24
    %p26 = scmp.ne.s32.totalorder %s18, %s21
    %p27 = scmp.eq.s32.totalorder %s8, 0
    %p28 = por %p26, %p27
    %p29 = scmp.ne.s32.totalorder %s18, %s21
    %p30 = scmp.eq.s32.totalorder %s13, 1
    %p31 = por %p29, %p30
    %p32 = scmp.ne.s32.totalorder %s21, %s22
    %p33 = scmp.eq.s32.totalorder %s13, 0
    %p34 = por %p32, %p33
    %p35 = scmp.ne.s32.totalorder %s21, %s22
    %p36 = scmp.eq.s32.totalorder %s14, 1
    %p37 = por %p35, %p36
    %p39 = scmp.ne.s32.totalorder %s22, %s38
    %p40 = scmp.eq.s32.totalorder %s14, 0
    %p41 = por %p39, %p40
    %s43 = sadd.s32 %s42, 1
    %p46 = scmp.eq.s32.totalorder %s8, 1
    %p47 = scmp.ne.s32.totalorder %s42, %s44
    %p48 = scmp.eq.s32.totalorder %s8, 0
    %p49 = por %p47, %p48
    %p50 = scmp.ne.s32.totalorder %s42, %s44
    %p51 = scmp.eq.s32.totalorder %s13, 1
    %p52 = por %p50, %p51
    %p53 = scmp.ne.s32.totalorder %s44, %s45
    %p54 = scmp.eq.s32.totalorder %s13, 0
    %p55 = por %p53, %p54
    %p56 = scmp.ne.s32.totalorder %s44, %s45
    %p57 = scmp.eq.s32.totalorder %s14, 1
    %p58 = por %p56, %p57
    %p60 = scmp.ne.s32.totalorder %s45, %s59
    %p61 = scmp.eq.s32.totalorder %s14, 0
    %p62 = por %p60, %p61
    %s63 = ssub.s32 %s8, %s15
    %p64 = scmp.eq.s32.totalorder %s63, 0
    %s66 = sadd.s32 %s65, 1
    %s67 = scalar_select %p64, %s65, %s66
    %p70 = pneg %p64
    %p71 = scmp.eq.s32.totalorder %s8, 1
    %p72 = por %p70, %p71
    %p73 = scmp.ne.s32.totalorder %s65, %s68
    %p74 = scmp.eq.s32.totalorder %s8, 0
    %p75 = por %p73, %p74
    %p76 = scmp.ne.s32.totalorder %s65, %s68
    %p77 = scmp.eq.s32.totalorder %s13, 1
    %p78 = por %p76, %p77
    %p79 = scmp.ne.s32.totalorder %s68, %s69
    %p80 = scmp.eq.s32.totalorder %s13, 0
    %p81 = por %p79, %p80
    %p82 = scmp.ne.s32.totalorder %s68, %s69
    %p83 = scmp.eq.s32.totalorder %s14, 1
    %p84 = por %p82, %p83
    %p86 = scmp.ne.s32.totalorder %s69, %s85
    %p87 = scmp.eq.s32.totalorder %s14, 0
    %p88 = por %p86, %p87
    %p89 = scmp.le.s32.totalorder 1, %s8
    %p90 = scmp.lt.s32.totalorder %s8, 3
    %p91 = pnand %p89, %p90
    %p92 = pneg %p91
    // Predicated region
    $region9: #{clip_forward.33} parent=5 // pred_check
      _
    $region10: #{clip_forward.33} parent=5 // pred_check_branch
      %94 = sbr.rel (%p91) target = $region12
    $region11: #{clip_forward.33} parent=5 // pred_region
      %s95 = ssub.s32 %s8, 1
      // Predicated region
      $region13: #{clip_forward.33} parent=11 // pred_check
        %p96 = pneg %p55
      $region14: #{clip_forward.33} parent=11 // pred_check_branch
        %98 = sbr.rel (%p96) target = $region16
      $region15: #{clip_forward.33} parent=11 // pred_region
        _
      $region16: #{clip_forward.33} parent=11 // pred_fallthru
        _
    $region12: #{clip_forward.33} parent=5 // pred_fallthru
      _
    %p99 = scmp.lt.s32.totalorder %s8, 2
    // Predicated region
    $region17: #{clip_forward.33} parent=5 // pred_check
      %p100 = pneg %p99
    $region18: #{clip_forward.33} parent=5 // pred_check_branch
      %102 = sbr.rel (%p100) target = $region20
    $region19: #{clip_forward.33} parent=5 // pred_region
      // Predicated region
      $region21: #{clip_forward.33} parent=19 // pred_check
        %p103 = pneg %p28
      $region22: #{clip_forward.33} parent=19 // pred_check_branch
        %105 = sbr.rel (%p103) target = $region24
      $region23: #{clip_forward.33} parent=19 // pred_region
        %p106 = scmp.lt.s32.totalorder %s8, 1
        %s107 = scalar_select %p106, %s8, 1
        %s108 = smul.addr %s107, 8
        %s109 = scalar_lea.vmem %s0, %s108
      $region24: #{clip_forward.33} parent=19 // pred_fallthru
        _
    $region20: #{clip_forward.33} parent=5 // pred_fallthru
      _
    %p110 = scmp.le.s32.totalorder 1, %s8
    %p111 = scmp.lt.s32.totalorder %s8, 3
    %p112 = pnand %p110, %p111
    %p113 = pneg %p112
    // Predicated region
    $region25: #{clip_forward.33} parent=5 // pred_check
      _
    $region26: #{clip_forward.33} parent=5 // pred_check_branch
      %115 = sbr.rel (%p112) target = $region28
    $region27: #{clip_forward.33} parent=5 // pred_region
      %s116 = ssub.s32 %s8, 1
      %p117 = scmp.lt.s32.totalorder %s13, 1
      %s118 = scalar_select %p117, %s13, 1
      %s119 = smul.addr %s118, 8
      %s120 = scalar_lea.vmem %s0, %s119
      %p121 = pneg %p34
      %p122 = pneg %p31
      %p123 = pneg %p55
      %p124 = pneg %p52
      %p125 = pneg %p81
      %p126 = pneg %p78
      %p127 = scmp.lt.s32.totalorder %s13, 1
      %s128 = scalar_select %p127, %s13, 1
      %s129 = smul.addr %s128, 8
      %s130 = scalar_lea.vmem %s2, %s129
      %p131 = scmp.lt.s32.totalorder %s13, 1
      %s132 = scalar_select %p131, %s13, 1
      %s133 = smul.addr %s132, 8
      %s134 = scalar_lea.vmem %s0, %s133
      %p135 = scmp.lt.s32.totalorder %s13, 1
      %s136 = scalar_select %p135, %s13, 1
      %s137 = smul.addr %s136, 8
      %s138 = scalar_lea.vmem %s2, %s137
      %v140 = vld [vmem:[%s134] sm:$0xff]
      %v141 = vmul.f32 %v140, 0.25
      %v142 = vpack.c.bf16 %v141, %v141
      %v143 = vpack.c.bf16 %v140, %v140
      %v144 = vld [vmem:[%s1] sm:$0xff]
      %146 = vrot.lane.b32.xlu0 %v143, 96
      %v147 = vpop.permute.xlu0 %146
      %vm148 = vcmask 130048
      %v150 = vsel %vm148, %v142, 0
      %v153 = vsel %vm148, %v147, 0
      %155 = vmatpush.bf16.xpose.msra.mxu0 0
      %156 = vmatpush.bf16.xpose.msra.mxu0 0
      %157 = vmatpush.bf16.xpose.msra.mxu0 0
      %158 = vmatpush.bf16.xpose.msra.mxu0 0
      %159 = vmatpush.bf16.xpose.msra.mxu0 0
      %160 = vmatpush.bf16.xpose.msra.mxu0 0
      %161 = vmatpush.bf16.xpose.msra.mxu0 0
      %162 = vmatpush.bf16.xpose.msra.mxu0 %v153
      %163 = vmatmul.bf16.gmra.mxu0 %v150
      %v164 = vpop.f32.mrf.mxu0
      %v165 = vadd.f32 %v144, %v164
      %v166 = vpop.f32.mrf.mxu0
      %167 = vdwg.mxu0
      %vm168 = vcmask 64512
      %v169 = vsel %vm168, %v165, -inf
      %170 = vmax.xlane.f32.xlu0 %v169
      %v171 = vpop.xlane.xlu0 %170
      %v172 = vsub.f32 %v165, %v171
      %v173 = vmul.f32 %v172, 1.442695
      %v174 = vpow.pop %v173
      %v175 = vsel %vm168, %v174, 0.0
      %176 = vadd.xlane.f32.xlu0 %v175
      %v177 = vpop.xlane.xlu0 %176
      %v178 = vrcp.pop %v177
      %v179 = vmul.f32 %v174, %v178
      %v180 = vpack.c.bf16 %v179, %v179
      %181 = vrot.lane.b32.xlu0 %v143, 64
      %v182 = vpop.permute.xlu0 %181
      %v184 = vsel %vm168, %v180, 0
      %vm186 = vcmask 1043456
      %v188 = vsel %vm186, %v182, 0
      %190 = vmatpush.bf16.msra.mxu0 0
      %191 = vmatpush.bf16.msra.mxu0 0
      %192 = vmatpush.bf16.msra.mxu0 0
      %193 = vmatpush.bf16.msra.mxu0 0
      %194 = vmatpush.bf16.msra.mxu0 0
      %195 = vmatpush.bf16.msra.mxu0 0
      %196 = vmatpush.bf16.msra.mxu0 0
      %197 = vmatpush.bf16.msra.mxu0 %v188
      %198 = vmatmul.bf16.gmra.mxu0 %v184
      %v199 = vpop.f32.mrf.mxu0
      %v200 = vadd.f32 0.0, %v199
      %v201 = vpop.f32.mrf.mxu0
      %202 = vdwg.mxu0
      %204 = vrot.lane.b32.xlu0 %v142, 112
      %v205 = vpop.permute.xlu0 %204
      %206 = vrot.lane.b32.xlu0 %v143, 80
      %v207 = vpop.permute.xlu0 %206
      %v209 = vsel %vm148, %v205, 0
      %v212 = vsel %vm148, %v207, 0
      %214 = vmatpush.bf16.xpose.msra.mxu0 0
      %215 = vmatpush.bf16.xpose.msra.mxu0 0
      %216 = vmatpush.bf16.xpose.msra.mxu0 0
      %217 = vmatpush.bf16.xpose.msra.mxu0 0
      %218 = vmatpush.bf16.xpose.msra.mxu0 0
      %219 = vmatpush.bf16.xpose.msra.mxu0 0
      %220 = vmatpush.bf16.xpose.msra.mxu0 0
      %221 = vmatpush.bf16.xpose.msra.mxu0 %v212
      %222 = vmatmul.bf16.gmra.mxu0 %v209
      %v223 = vpop.f32.mrf.mxu0
      %v224 = vadd.f32 %v144, %v223
      %v225 = vpop.f32.mrf.mxu0
      %226 = vdwg.mxu0
      %v227 = vsel %vm168, %v224, -inf
      %228 = vmax.xlane.f32.xlu0 %v227
      %v229 = vpop.xlane.xlu0 %228
      %v230 = vsub.f32 %v224, %v229
      %v231 = vmul.f32 %v230, 1.442695
      %v232 = vpow.pop %v231
      %v233 = vsel %vm168, %v232, 0.0
      %234 = vadd.xlane.f32.xlu0 %v233
      %v235 = vpop.xlane.xlu0 %234
      %v236 = vrcp.pop %v235
      %v237 = vmul.f32 %v232, %v236
      %v238 = vpack.c.bf16 %v237, %v237
      %239 = vrot.lane.b32.xlu0 %v143, 48
      %v240 = vpop.permute.xlu0 %239
      %v242 = vsel %vm168, %v238, 0
      %v245 = vsel %vm186, %v240, 0
      %247 = vmatpush.bf16.msra.mxu0 0
      %248 = vmatpush.bf16.msra.mxu0 0
      %249 = vmatpush.bf16.msra.mxu0 0
      %250 = vmatpush.bf16.msra.mxu0 0
      %251 = vmatpush.bf16.msra.mxu0 0
      %252 = vmatpush.bf16.msra.mxu0 0
      %253 = vmatpush.bf16.msra.mxu0 0
      %254 = vmatpush.bf16.msra.mxu0 %v245
      %255 = vmatmul.bf16.gmra.mxu0 %v242
      %v256 = vpop.f32.mrf.mxu0
      %v257 = vadd.f32 0.0, %v256
      %v258 = vpop.f32.mrf.mxu0
      %259 = vdwg.mxu0
      %261 = vrot.lane.b32.xlu0 %v257, 16
      %v262 = vpop.permute.xlu0 %261
      %v264 = vsel %vm148, %v200, %v262
      %vm265 = vcmask 261120
      %266 = vst.msk [vmem:[%s138] sm:$0xff] %vm265, %v264
      %p267 = scmp.lt.s32.totalorder %s13, 1
      %s268 = scalar_select %p267, %s13, 1
      %s269 = smul.addr %s268, 8
      %s270 = scalar_lea.vmem %s2, %s269
      // Predicated region
      $region29: #{clip_forward.33} parent=27 // pred_check
        %p271 = pneg %p78
      $region30: #{clip_forward.33} parent=27 // pred_check_branch
        %273 = sbr.rel (%p271) target = $region32
      $region31: #{clip_forward.33} parent=27 // pred_region
        _
      $region32: #{clip_forward.33} parent=27 // pred_fallthru
        _
    $region28: #{clip_forward.33} parent=5 // pred_fallthru
      _
    %p274 = scmp.le.s32.totalorder 2, %s8
    // Predicated region
    $region33: #{clip_forward.33} parent=5 // pred_check
      %p275 = pneg %p274
    $region34: #{clip_forward.33} parent=5 // pred_check_branch
      %277 = sbr.rel (%p275) target = $region36
    $region35: #{clip_forward.33} parent=5 // pred_region
      %s278 = ssub.s32 %s8, 2
      // Predicated region
      $region37: #{clip_forward.33} parent=35 // pred_check
        %p279 = pneg %p84
      $region38: #{clip_forward.33} parent=35 // pred_check_branch
        %281 = sbr.rel (%p279) target = $region40
      $region39: #{clip_forward.33} parent=35 // pred_region
        %p282 = scmp.lt.s32.totalorder %s14, 1
        %s283 = scalar_select %p282, %s14, 1
        %s284 = smul.addr %s283, 8
        %s285 = scalar_lea.vmem %s2, %s284
      $region40: #{clip_forward.33} parent=35 // pred_fallthru
        _
    $region36: #{clip_forward.33} parent=5 // pred_fallthru
      _
  $region6: #{clip_forward.33} parent=0 // loop_footer
    %s12 = sadd.s32 1, %s8
  $region7: #{clip_forward.33} parent=0 // loop_footer_branch
    %7 = sbr.rel target = $region3
  $region8: #{clip_forward.33} parent=0 // loop_exit
    _

// kernel: clip_forward.34
$region0: #{clip_forward.34}
  #allocation0 [shape = 'u32[]', space=smem, size = 0x4, offset = 0x4, fixed_abs, tag = 'smem constant byte address 0x4 - core index']
  #allocation1 [shape = 'u32[72,128]{1,0:T(1,128)}', space=vmem, size = 0x9000, scoped, tag = 'internal scratch']
  %s0 = inlined_call_operand.vmem [shape: f32[16,32], index: 0, kind: input, shape index: {}]
  %s1 = inlined_call_operand.vmem [shape: bf16[32,32], index: 1, kind: input, shape index: {}]
  %s2 = inlined_call_operand.vmem [shape: f32[1,32], index: 2, kind: input, shape index: {}]
  %s3 = inlined_call_operand.vmem [shape: f32[16,32], index: 3, kind: input, shape index: {}]
  %s4 = inlined_call_operand.vmem [shape: f32[16,32], index: 4, kind: output, shape index: {}]
  %s5 = sld [smem:[#allocation0]]
  $region26: #{clip_forward.34} parent=0
    _
  %s7 = ssub.s32 1, %s5
  %s8 = scalar_select 0, %s7, %s5
  // Predicated region
  $region2: #{clip_forward.34} parent=0 // pred_check
    _
  $region3: #{clip_forward.34} parent=0 // pred_check_branch
    %10 = sbr.rel (0) target = $region5
  $region4: #{clip_forward.34} parent=0 // pred_region
    _
  $region5: #{clip_forward.34} parent=0 // pred_fallthru
    _
  // Predicated region
  $region6: #{clip_forward.34} parent=0 // pred_check
    _
  $region7: #{clip_forward.34} parent=0 // pred_check_branch
    %12 = sbr.rel (0) target = $region9
  $region8: #{clip_forward.34} parent=0 // pred_region
    _
  $region9: #{clip_forward.34} parent=0 // pred_fallthru
    _
  // Predicated region
  $region10: #{clip_forward.34} parent=0 // pred_check
    _
  $region11: #{clip_forward.34} parent=0 // pred_check_branch
    %14 = sbr.rel (0) target = $region13
  $region12: #{clip_forward.34} parent=0 // pred_region
    _
  $region13: #{clip_forward.34} parent=0 // pred_fallthru
    _
  // Predicated region
  $region14: #{clip_forward.34} parent=0 // pred_check
    _
  $region15: #{clip_forward.34} parent=0 // pred_check_branch
    %16 = sbr.rel (0) target = $region17
  $region16: #{clip_forward.34} parent=0 // pred_region
    _
  $region17: #{clip_forward.34} parent=0 // pred_fallthru
    _
  %v18 = vld [vmem:[%s0] sm:$0xff]
  %v19 = vld [vmem:[%s0 + $0x8] sm:$0xff]
  %v20 = vpack.c.bf16 %v19, %v18
  %v21 = vld [vmem:[%s1] sm:$0xf]
  %v22 = vld [vmem:[%s1 + $0x4] sm:$0xf]
  %v23 = vld [vmem:[%s1 + $0x8] sm:$0xf]
  %v24 = vld [vmem:[%s1 + $0xc] sm:$0xf]
  %v25 = vld [vmem:[%s2] sm:$0x1]
  %v27 = vperm.slane %v25, 0
  %v33 = vunpack.c.l.b16 %v21
  %v34 = vunpack.c.l.b16 %v22
  %v35 = vunpack.c.l.b16 %v23
  %v36 = vunpack.c.l.b16 %v24
  %v37 = vpack.c.b16 %v34, %v33
  %v38 = vpack.c.b16 %v36, %v35
  %vm41 = vcmask 261120
  %v43 = vsel %vm41, %v20, 0
  %45 = vmatpush.bf16.msra.mxu0 0
  %46 = vmatpush.bf16.msra.mxu0 0
  %47 = vmatpush.bf16.msra.mxu0 0
  %48 = vmatpush.bf16.msra.mxu0 0
  %49 = vmatpush.bf16.msra.mxu0 0
  %50 = vmatpush.bf16.msra.mxu0 0
  %51 = vmatpush.bf16.msra.mxu0 %v38
  %52 = vmatpush.bf16.msra.mxu0 %v37
  %53 = vmatmul.bf16.gmra.mxu0 %v43
  %v54 = vpop.f32.mrf.mxu0
  %v55 = vadd.f32 %v27, %v54
  %v56 = vpop.f32.mrf.mxu0
  %v57 = vadd.f32 %v27, %v56
  %58 = vdwg.mxu0
  %v59 = vld [vmem:[%s3] sm:$0xff]
  %v60 = vld [vmem:[%s3 + $0x8] sm:$0xff]
  %v61 = vadd.f32 %v55, %v59
  %v62 = vadd.f32 %v57, %v60
  %63 = vst.msk [vmem:[%s4] sm:$0xff] %vm41, %v61
  %64 = vst.msk [vmem:[%s4 + $0x8] sm:$0xff] %vm41, %v62
  // Predicated region
  $region18: #{clip_forward.34} parent=0 // pred_check
    _
  $region19: #{clip_forward.34} parent=0 // pred_check_branch
    %66 = sbr.rel (0) target = $region21
  $region20: #{clip_forward.34} parent=0 // pred_region
    _
  $region21: #{clip_forward.34} parent=0 // pred_fallthru
    _
  // Predicated region
  $region22: #{clip_forward.34} parent=0 // pred_check
    _
  $region23: #{clip_forward.34} parent=0 // pred_check_branch
    %68 = sbr.rel (0) target = $region25
  $region24: #{clip_forward.34} parent=0 // pred_region
    _
  $region25: #{clip_forward.34} parent=0 // pred_fallthru
    _

// kernel: clip_forward.35
$region0: #{clip_forward.35}
  #allocation0 [shape = 'u32[]', space=smem, size = 0x4, offset = 0x4, fixed_abs, tag = 'smem constant byte address 0x4 - core index']
  #allocation1 [shape = 'u32[72,128]{1,0:T(1,128)}', space=vmem, size = 0x9000, scoped, tag = 'internal scratch']
  %s0 = inlined_call_operand.vmem [shape: f32[16,32], index: 0, kind: input, shape index: {}]
  %s1 = inlined_call_operand.vmem [shape: f32[1,32], index: 1, kind: input, shape index: {}]
  %s2 = inlined_call_operand.vmem [shape: f32[1,32], index: 2, kind: input, shape index: {}]
  %s3 = inlined_call_operand.vmem [shape: bf16[32,128], index: 3, kind: input, shape index: {}]
  %s4 = inlined_call_operand.vmem [shape: f32[1,128], index: 4, kind: input, shape index: {}]
  %s5 = inlined_call_operand.vmem [shape: bf16[128,32], index: 5, kind: input, shape index: {}]
  %s6 = inlined_call_operand.vmem [shape: f32[1,32], index: 6, kind: input, shape index: {}]
  %s7 = inlined_call_operand.vmem [shape: f32[16,32], index: 7, kind: output, shape index: {}]
  %s8 = sld [smem:[#allocation0]]
  $region38: #{clip_forward.35} parent=0
    _
  %s10 = ssub.s32 1, %s8
  %s11 = scalar_select 0, %s10, %s8
  // Predicated region
  $region2: #{clip_forward.35} parent=0 // pred_check
    _
  $region3: #{clip_forward.35} parent=0 // pred_check_branch
    %13 = sbr.rel (0) target = $region5
  $region4: #{clip_forward.35} parent=0 // pred_region
    _
  $region5: #{clip_forward.35} parent=0 // pred_fallthru
    _
  // Predicated region
  $region6: #{clip_forward.35} parent=0 // pred_check
    _
  $region7: #{clip_forward.35} parent=0 // pred_check_branch
    %15 = sbr.rel (0) target = $region9
  $region8: #{clip_forward.35} parent=0 // pred_region
    _
  $region9: #{clip_forward.35} parent=0 // pred_fallthru
    _
  // Predicated region
  $region10: #{clip_forward.35} parent=0 // pred_check
    _
  $region11: #{clip_forward.35} parent=0 // pred_check_branch
    %17 = sbr.rel (0) target = $region13
  $region12: #{clip_forward.35} parent=0 // pred_region
    _
  $region13: #{clip_forward.35} parent=0 // pred_fallthru
    _
  // Predicated region
  $region14: #{clip_forward.35} parent=0 // pred_check
    _
  $region15: #{clip_forward.35} parent=0 // pred_check_branch
    %19 = sbr.rel (0) target = $region17
  $region16: #{clip_forward.35} parent=0 // pred_region
    _
  $region17: #{clip_forward.35} parent=0 // pred_fallthru
    _
  // Predicated region
  $region18: #{clip_forward.35} parent=0 // pred_check
    _
  $region19: #{clip_forward.35} parent=0 // pred_check_branch
    %21 = sbr.rel (0) target = $region21
  $region20: #{clip_forward.35} parent=0 // pred_region
    _
  $region21: #{clip_forward.35} parent=0 // pred_fallthru
    _
  // Predicated region
  $region22: #{clip_forward.35} parent=0 // pred_check
    _
  $region23: #{clip_forward.35} parent=0 // pred_check_branch
    %23 = sbr.rel (0) target = $region25
  $region24: #{clip_forward.35} parent=0 // pred_region
    _
  $region25: #{clip_forward.35} parent=0 // pred_fallthru
    _
  // Predicated region
  $region26: #{clip_forward.35} parent=0 // pred_check
    _
  $region27: #{clip_forward.35} parent=0 // pred_check_branch
    %25 = sbr.rel (0) target = $region29
  $region28: #{clip_forward.35} parent=0 // pred_region
    _
  $region29: #{clip_forward.35} parent=0 // pred_fallthru
    _
  %v27 = vld [vmem:[%s0] sm:$0xff]
  %v28 = vld [vmem:[%s0 + $0x8] sm:$0xff]
  %vm29 = vcmask 261120
  %v30 = vsel %vm29, %v27, 0.0
  %31 = vadd.xlane.f32.xlu0 %v30
  %v32 = vpop.xlane.xlu0 %31
  %v33 = vsel %vm29, %v28, 0.0
  %34 = vadd.xlane.f32.xlu0 %v33
  %v35 = vpop.xlane.xlu0 %34
  %v36 = vrcp.pop 32.0
  %v37 = vmul.f32 32.0, %v36
  %v38 = vsub.f32 1.0, %v37
  %v39 = vmul.f32 %v36, %v38
  %v40 = vadd.f32 %v36, %v39
  %vm41 = vweird.f32 %v36
  %v42 = vsel %vm41, %v36, %v40
  %v43 = vmul.f32 %v32, %v42
  %v44 = vmul.f32 %v35, %v42
  %v45 = vsub.f32 %v27, %v43
  %v46 = vsub.f32 %v28, %v44
  %v47 = vmul.f32 %v45, %v45
  %v48 = vmul.f32 %v46, %v46
  %v49 = vsel %vm29, %v47, 0.0
  %50 = vadd.xlane.f32.xlu0 %v49
  %v51 = vpop.xlane.xlu0 %50
  %v52 = vsel %vm29, %v48, 0.0
  %53 = vadd.xlane.f32.xlu0 %v52
  %v54 = vpop.xlane.xlu0 %53
  %v55 = vmul.f32 %v51, %v42
  %v56 = vmul.f32 %v54, %v42
  %v57 = vadd.f32 %v55, 1e-05
  %v58 = vadd.f32 %v56, 1e-05
  %v59 = vrsqrt.pop %v57
  %v60 = vmul.f32 %v59, %v57
  %v61 = vmul.f32 %v60, %v59
  %v62 = vmul.f32 0.5, %v61
  %v63 = vsub.f32 1.5, %v62
  %v64 = vmul.f32 %v59, %v63
  %vm65 = vweird.f32 %v57
  %vm66 = vweird.f32 %v59
  %vm67 = vmor %vm65, %vm66
  %v68 = vsel %vm67, %v59, %v64
  %v69 = vrsqrt.pop %v58
  %v70 = vmul.f32 %v69, %v58
  %v71 = vmul.f32 %v70, %v69
  %v72 = vmul.f32 0.5, %v71
  %v73 = vsub.f32 1.5, %v72
  %v74 = vmul.f32 %v69, %v73
  %vm75 = vweird.f32 %v58
  %vm76 = vweird.f32 %v69
  %vm77 = vmor %vm75, %vm76
  %v78 = vsel %vm77, %v69, %v74
  %v79 = vmul.f32 %v45, %v68
  %v80 = vmul.f32 %v46, %v78
  %v81 = vld [vmem:[%s1] sm:$0x1]
  %v83 = vperm.slane %v81, 0
  %v85 = vmul.f32 %v79, %v83
  %v86 = vmul.f32 %v80, %v83
  %v87 = vld [vmem:[%s2] sm:$0x1]
  %v89 = vperm.slane %v87, 0
  %v91 = vadd.f32 %v85, %v89
  %v92 = vadd.f32 %v86, %v89
  %v93 = vpack.c.bf16 %v92, %v91
  %v94 = vld [vmem:[%s3] sm:$0xf]
  %v95 = vld [vmem:[%s3 + $0x4] sm:$0xf]
  %v96 = vld [vmem:[%s3 + $0x8] sm:$0xf]
  %v97 = vld [vmem:[%s3 + $0xc] sm:$0xf]
  %v98 = vld [vmem:[%s4] sm:$0x1]
  %v100 = vperm.slane %v98, 0
  %v106 = vunpack.c.l.b16 %v94
  %v107 = vunpack.c.l.b16 %v95
  %v108 = vunpack.c.l.b16 %v96
  %v109 = vunpack.c.l.b16 %v97
  %v110 = vpack.c.b16 %v107, %v106
  %v111 = vpack.c.b16 %v109, %v108
  %v115 = vsel %vm29, %v93, 0
  %117 = vmatpush.bf16.msra.mxu0 0
  %118 = vmatpush.bf16.msra.mxu0 0
  %119 = vmatpush.bf16.msra.mxu0 0
  %120 = vmatpush.bf16.msra.mxu0 0
  %121 = vmatpush.bf16.msra.mxu0 0
  %122 = vmatpush.bf16.msra.mxu0 0
  %123 = vmatpush.bf16.msra.mxu0 %v111
  %124 = vmatpush.bf16.msra.mxu0 %v110
  %125 = vmatmul.bf16.gmra.mxu0 %v115
  %v126 = vpop.f32.mrf.mxu0
  %v127 = vadd.f32 %v100, %v126
  %v128 = vpop.f32.mrf.mxu0
  %v129 = vadd.f32 %v100, %v128
  %130 = vdwg.mxu0
  %v131 = vmul.f32 %v127, 1.702
  %v132 = vmul.f32 %v129, 1.702
  %v133 = vxor.u32 %v131, 2147483648
  %v134 = vxor.u32 %v132, 2147483648
  %v135 = vmul.f32 %v133, 1.442695
  %v136 = vpow.pop %v135
  %v137 = vmul.f32 %v134, 1.442695
  %v138 = vpow.pop %v137
  %v139 = vadd.f32 %v136, 1.0
  %v140 = vadd.f32 %v138, 1.0
  %v141 = vrcp.pop %v139
  %v142 = vmul.f32 %v139, %v141
  %v143 = vsub.f32 1.0, %v142
  %v144 = vmul.f32 %v141, %v143
  %v145 = vadd.f32 %v141, %v144
  %vm146 = vweird.f32 %v139
  %vm147 = vweird.f32 %v141
  %vm148 = vmor %vm146, %vm147
  %v149 = vsel %vm148, %v141, %v145
  %v150 = vand.u32 2147483647, %v139
  %vm151 = vcmp.eq.f32.partialorder %v150, 8.507059e+37
  %v152 = vand.u32 %v139, 2147483648
  %v153 = vor.u32 1.1754944e-38, %v152
  %v154 = vsel %vm151, %v153, %v149
  %v155 = vmul.f32 1.0, %v154
  %v156 = vrcp.pop %v140
  %v157 = vmul.f32 %v140, %v156
  %v158 = vsub.f32 1.0, %v157
  %v159 = vmul.f32 %v156, %v158
  %v160 = vadd.f32 %v156, %v159
  %vm161 = vweird.f32 %v140
  %vm162 = vweird.f32 %v156
  %vm163 = vmor %vm161, %vm162
  %v164 = vsel %vm163, %v156, %v160
  %v165 = vand.u32 2147483647, %v140
  %vm166 = vcmp.eq.f32.partialorder %v165, 8.507059e+37
  %v167 = vand.u32 %v140, 2147483648
  %v168 = vor.u32 1.1754944e-38, %v167
  %v169 = vsel %vm166, %v168, %v164
  %v170 = vmul.f32 1.0, %v169
  %v171 = vmul.f32 %v127, %v155
  %v172 = vmul.f32 %v129, %v170
  %v173 = vpack.c.bf16 %v172, %v171
  %v174 = vld [vmem:[%s5] sm:$0xf]
  %v175 = vld [vmem:[%s5 + $0x4] sm:$0xf]
  %v176 = vld [vmem:[%s5 + $0x8] sm:$0xf]
  %v177 = vld [vmem:[%s5 + $0xc] sm:$0xf]
  %v178 = vld [vmem:[%s5 + $0x10] sm:$0xf]
  %v179 = vld [vmem:[%s5 + $0x14] sm:$0xf]
  %v180 = vld [vmem:[%s5 + $0x18] sm:$0xf]
  %v181 = vld [vmem:[%s5 + $0x1c] sm:$0xf]
  %v182 = vld [vmem:[%s5 + $0x20] sm:$0xf]
  %v183 = vld [vmem:[%s5 + $0x24] sm:$0xf]
  %v184 = vld [vmem:[%s5 + $0x28] sm:$0xf]
  %v185 = vld [vmem:[%s5 + $0x2c] sm:$0xf]
  %v186 = vld [vmem:[%s5 + $0x30] sm:$0xf]
  %v187 = vld [vmem:[%s5 + $0x34] sm:$0xf]
  %v188 = vld [vmem:[%s5 + $0x38] sm:$0xf]
  %v189 = vld [vmem:[%s5 + $0x3c] sm:$0xf]
  %v190 = vld [vmem:[%s6] sm:$0x1]
  %v192 = vperm.slane %v190, 0
  %v210 = vunpack.c.l.b16 %v174
  %v211 = vunpack.c.l.b16 %v175
  %v212 = vunpack.c.l.b16 %v176
  %v213 = vunpack.c.l.b16 %v177
  %v214 = vunpack.c.l.b16 %v178
  %v215 = vunpack.c.l.b16 %v179
  %v216 = vunpack.c.l.b16 %v180
  %v217 = vunpack.c.l.b16 %v181
  %v218 = vunpack.c.l.b16 %v182
  %v219 = vunpack.c.l.b16 %v183
  %v220 = vunpack.c.l.b16 %v184
  %v221 = vunpack.c.l.b16 %v185
  %v222 = vunpack.c.l.b16 %v186
  %v223 = vunpack.c.l.b16 %v187
  %v224 = vunpack.c.l.b16 %v188
  %v225 = vunpack.c.l.b16 %v189
  %v226 = vpack.c.b16 %v211, %v210
  %v227 = vpack.c.b16 %v213, %v212
  %v228 = vpack.c.b16 %v215, %v214
  %v229 = vpack.c.b16 %v217, %v216
  %v230 = vpack.c.b16 %v219, %v218
  %v231 = vpack.c.b16 %v221, %v220
  %v232 = vpack.c.b16 %v223, %v222
  %v233 = vpack.c.b16 %v225, %v224
  %242 = vmatpush.bf16.msra.mxu0 %v233
  %243 = vmatpush.bf16.msra.mxu0 %v232
  %244 = vmatpush.bf16.msra.mxu0 %v231
  %245 = vmatpush.bf16.msra.mxu0 %v230
  %246 = vmatpush.bf16.msra.mxu0 %v229
  %247 = vmatpush.bf16.msra.mxu0 %v228
  %248 = vmatpush.bf16.msra.mxu0 %v227
  %249 = vmatpush.bf16.msra.mxu0 %v226
  %250 = vmatmul.bf16.gmra.mxu0 %v173
  %v251 = vpop.f32.mrf.mxu0
  %v252 = vadd.f32 %v192, %v251
  %v253 = vpop.f32.mrf.mxu0
  %v254 = vadd.f32 %v192, %v253
  %255 = vdwg.mxu0
  %v256 = vadd.f32 %v27, %v252
  %v257 = vadd.f32 %v28, %v254
  %258 = vst.msk [vmem:[%s7] sm:$0xff] %vm29, %v256
  %259 = vst.msk [vmem:[%s7 + $0x8] sm:$0xff] %vm29, %v257
  // Predicated region
  $region30: #{clip_forward.35} parent=0 // pred_check
    _
  $region31: #{clip_forward.35} parent=0 // pred_check_branch
    %261 = sbr.rel (0) target = $region33
  $region32: #{clip_forward.35} parent=0 // pred_region
    _
  $region33: #{clip_forward.35} parent=0 // pred_fallthru
    _
  // Predicated region
  $region34: #{clip_forward.35} parent=0 // pred_check
    _
  $region35: #{clip_forward.35} parent=0 // pred_check_branch
    %263 = sbr.rel (0) target = $region37
  $region36: #{clip_forward.35} parent=0 // pred_region
    _
  $region37: #{clip_forward.35} parent=0 // pred_fallthru
    _

// kernel: clip_forward.41
$region0: #{clip_forward.41}
  #allocation0 [shape = 'u32[]', space=smem, size = 0x4, offset = 0x4, fixed_abs, tag = 'smem constant byte address 0x4 - core index']
  #allocation1 [shape = 'u32[72,128]{1,0:T(1,128)}', space=vmem, size = 0x9000, scoped, tag = 'internal scratch']
  #allocation2 [shape = 'f32[1,1]{1,0:T(1,128)S(1)}', space=vmem, size = 0x200, scoped, tag = 'scoped memory for clip_forward.41']
  %s0 = inlined_call_operand.vmem [shape: f32[2,32], index: 0, kind: input, shape index: {}]
  %s1 = inlined_call_operand.vmem [shape: f32[2,32], index: 1, kind: input, shape index: {}]
  %s2 = inlined_call_operand.<no memory space> [shape: f32[1,1], index: 2, kind: input, shape index: {}]
  %s3 = inlined_call_operand.vmem [shape: f32[2,2], index: 3, kind: output, shape index: {}]
  %s4 = sld [smem:[#allocation0]]
  $region22: #{clip_forward.41} parent=0
    _
  %s6 = ssub.s32 1, %s4
  %s7 = scalar_select 0, %s6, %s4
  %v8 = vstv %s2
  %9 = vst [vmem:[#allocation2] sm:$0x1] %v8
  // Predicated region
  $region2: #{clip_forward.41} parent=0 // pred_check
    _
  $region3: #{clip_forward.41} parent=0 // pred_check_branch
    %11 = sbr.rel (0) target = $region5
  $region4: #{clip_forward.41} parent=0 // pred_region
    _
  $region5: #{clip_forward.41} parent=0 // pred_fallthru
    _
  // Predicated region
  $region6: #{clip_forward.41} parent=0 // pred_check
    _
  $region7: #{clip_forward.41} parent=0 // pred_check_branch
    %13 = sbr.rel (0) target = $region9
  $region8: #{clip_forward.41} parent=0 // pred_region
    _
  $region9: #{clip_forward.41} parent=0 // pred_fallthru
    _
  // Predicated region
  $region10: #{clip_forward.41} parent=0 // pred_check
    _
  $region11: #{clip_forward.41} parent=0 // pred_check_branch
    %15 = sbr.rel (0) target = $region13
  $region12: #{clip_forward.41} parent=0 // pred_region
    _
  $region13: #{clip_forward.41} parent=0 // pred_fallthru
    _
  %v16 = vld [vmem:[%s0] sm:$0x3]
  %v17 = vld [vmem:[%s1] sm:$0x3]
  %v18 = vmul.f32 %v16, %v16
  %vm19 = vcmask 254976
  %v20 = vsel %vm19, %v18, 0.0
  %21 = vadd.xlane.f32.xlu0 %v20
  %v22 = vpop.xlane.xlu0 %21
  %v23 = vrsqrt.pop %v22
  %v24 = vmul.f32 %v23, %v22
  %v25 = vmul.f32 %v24, %v23
  %v26 = vmul.f32 0.5, %v25
  %v27 = vsub.f32 1.5, %v26
  %v28 = vmul.f32 %v23, %v27
  %vm29 = vweird.f32 %v22
  %vm30 = vweird.f32 %v23
  %vm31 = vmor %vm29, %vm30
  %v32 = vsel %vm31, %v23, %v28
  %v33 = vmul.f32 %v16, %v32
  %v34 = vmul.f32 %v17, %v17
  %v35 = vsel %vm19, %v34, 0.0
  %36 = vadd.xlane.f32.xlu0 %v35
  %v37 = vpop.xlane.xlu0 %36
  %v38 = vrsqrt.pop %v37
  %v39 = vmul.f32 %v38, %v37
  %v40 = vmul.f32 %v39, %v38
  %v41 = vmul.f32 0.5, %v40
  %v42 = vsub.f32 1.5, %v41
  %v43 = vmul.f32 %v38, %v42
  %vm44 = vweird.f32 %v37
  %vm45 = vweird.f32 %v38
  %vm46 = vmor %vm44, %vm45
  %v47 = vsel %vm46, %v38, %v43
  %v48 = vmul.f32 %v17, %v47
  %vm49 = vcmask 261120
  %v51 = vsel %vm49, %v33, 0
  %v54 = vsel %vm49, %v48, 0
  %56 = vmatpush.xpose.msra.mxu0 0.0
  %57 = vmatpush.xpose.msra.mxu0 0.0
  %58 = vmatpush.xpose.msra.mxu0 0.0
  %59 = vmatpush.xpose.msra.mxu0 0.0
  %60 = vmatpush.xpose.msra.mxu0 0.0
  %61 = vmatpush.xpose.msra.mxu0 0.0
  %62 = vmatpush.xpose.msra.mxu0 0.0
  %63 = vmatpush.xpose.msra.mxu0 0.0
  %64 = vmatpush.xpose.msra.mxu0 0.0
  %65 = vmatpush.xpose.msra.mxu0 0.0
  %66 = vmatpush.xpose.msra.mxu0 0.0
  %67 = vmatpush.xpose.msra.mxu0 0.0
  %68 = vmatpush.xpose.msra.mxu0 0.0
  %69 = vmatpush.xpose.msra.mxu0 0.0
  %70 = vmatpush.xpose.msra.mxu0 0.0
  %71 = vmatpush.xpose.msra.mxu0 %v54
  %72 = vmatmul.f32.gmra.mxu0 %v51
  %v73 = vpop.f32.mrf.mxu0
  %v74 = vadd.f32 0.0, %v73
  %75 = vdwg.mxu0
  %v76 = vld [vmem:[#allocation2] sm:$0x1]
  %v78 = vperm.slane %v76, 0
  %79 = vset.pattern.permute.xlu0 0
  %80 = vperm.xlu0 %79, %v78
  %v81 = vpop.permute.xlu0 %80
  %v83 = vmul.f32 %v74, %v81
  %vm84 = vcmask 9216
  %85 = vst.msk [vmem:[%s3] sm:$0x3] %vm84, %v83
  // Predicated region
  $region14: #{clip_forward.41} parent=0 // pred_check
    _
  $region15: #{clip_forward.41} parent=0 // pred_check_branch
    %87 = sbr.rel (0) target = $region17
  $region16: #{clip_forward.41} parent=0 // pred_region
    _
  $region17: #{clip_forward.41} parent=0 // pred_fallthru
    _
  // Predicated region
  $region18: #{clip_forward.41} parent=0 // pred_check
    _
  $region19: #{clip_forward.41} parent=0 // pred_check_branch
    %89 = sbr.rel (0) target = $region21
  $region20: #{clip_forward.41} parent=0 // pred_region
    _
  $region21: #{clip_forward.41} parent=0 // pred_fallthru
    _

// kernel: clip_forward.40
$region0: #{clip_forward.40}
  #allocation0 [shape = 'u32[]', space=smem, size = 0x4, offset = 0x4, fixed_abs, tag = 'smem constant byte address 0x4 - core index']
  #allocation1 [shape = 'u32[72,128]{1,0:T(1,128)}', space=vmem, size = 0x9000, scoped, tag = 'internal scratch']
  %s0 = inlined_call_operand.vmem [shape: f32[2,32], index: 0, kind: input, shape index: {}]
  %s1 = inlined_call_operand.vmem [shape: f32[1,32], index: 1, kind: input, shape index: {}]
  %s2 = inlined_call_operand.vmem [shape: f32[1,32], index: 2, kind: input, shape index: {}]
  %s3 = inlined_call_operand.vmem [shape: bf16[32,32], index: 3, kind: input, shape index: {}]
  %s4 = inlined_call_operand.vmem [shape: f32[1,32], index: 4, kind: input, shape index: {}]
  %s5 = inlined_call_operand.vmem [shape: f32[2,32], index: 5, kind: output, shape index: {}]
  %s6 = sld [smem:[#allocation0]]
  $region30: #{clip_forward.40} parent=0
    _
  %s8 = ssub.s32 1, %s6
  %s9 = scalar_select 0, %s8, %s6
  // Predicated region
  $region2: #{clip_forward.40} parent=0 // pred_check
    _
  $region3: #{clip_forward.40} parent=0 // pred_check_branch
    %11 = sbr.rel (0) target = $region5
  $region4: #{clip_forward.40} parent=0 // pred_region
    _
  $region5: #{clip_forward.40} parent=0 // pred_fallthru
    _
  // Predicated region
  $region6: #{clip_forward.40} parent=0 // pred_check
    _
  $region7: #{clip_forward.40} parent=0 // pred_check_branch
    %13 = sbr.rel (0) target = $region9
  $region8: #{clip_forward.40} parent=0 // pred_region
    _
  $region9: #{clip_forward.40} parent=0 // pred_fallthru
    _
  // Predicated region
  $region10: #{clip_forward.40} parent=0 // pred_check
    _
  $region11: #{clip_forward.40} parent=0 // pred_check_branch
    %15 = sbr.rel (0) target = $region13
  $region12: #{clip_forward.40} parent=0 // pred_region
    _
  $region13: #{clip_forward.40} parent=0 // pred_fallthru
    _
  // Predicated region
  $region14: #{clip_forward.40} parent=0 // pred_check
    _
  $region15: #{clip_forward.40} parent=0 // pred_check_branch
    %17 = sbr.rel (0) target = $region17
  $region16: #{clip_forward.40} parent=0 // pred_region
    _
  $region17: #{clip_forward.40} parent=0 // pred_fallthru
    _
  // Predicated region
  $region18: #{clip_forward.40} parent=0 // pred_check
    _
  $region19: #{clip_forward.40} parent=0 // pred_check_branch
    %19 = sbr.rel (0) target = $region21
  $region20: #{clip_forward.40} parent=0 // pred_region
    _
  $region21: #{clip_forward.40} parent=0 // pred_fallthru
    _
  %v21 = vld [vmem:[%s0] sm:$0x3]
  %vm22 = vcmask 254976
  %v23 = vsel %vm22, %v21, 0.0
  %24 = vadd.xlane.f32.xlu0 %v23
  %v25 = vpop.xlane.xlu0 %24
  %v26 = vrcp.pop 32.0
  %v27 = vmul.f32 32.0, %v26
  %v28 = vsub.f32 1.0, %v27
  %v29 = vmul.f32 %v26, %v28
  %v30 = vadd.f32 %v26, %v29
  %vm31 = vweird.f32 %v26
  %v32 = vsel %vm31, %v26, %v30
  %v33 = vmul.f32 %v25, %v32
  %v34 = vsub.f32 %v21, %v33
  %v35 = vmul.f32 %v34, %v34
  %v36 = vsel %vm22, %v35, 0.0
  %37 = vadd.xlane.f32.xlu0 %v36
  %v38 = vpop.xlane.xlu0 %37
  %v39 = vmul.f32 %v38, %v32
  %v40 = vadd.f32 %v39, 1e-05
  %v41 = vrsqrt.pop %v40
  %v42 = vmul.f32 %v41, %v40
  %v43 = vmul.f32 %v42, %v41
  %v44 = vmul.f32 0.5, %v43
  %v45 = vsub.f32 1.5, %v44
  %v46 = vmul.f32 %v41, %v45
  %vm47 = vweird.f32 %v40
  %vm48 = vweird.f32 %v41
  %vm49 = vmor %vm47, %vm48
  %v50 = vsel %vm49, %v41, %v46
  %v51 = vmul.f32 %v34, %v50
  %v52 = vld [vmem:[%s1] sm:$0x1]
  %v54 = vperm.slane %v52, 0
  %v56 = vmul.f32 %v51, %v54
  %v57 = vld [vmem:[%s2] sm:$0x1]
  %v59 = vperm.slane %v57, 0
  %v61 = vadd.f32 %v56, %v59
  %v62 = vpack.c.bf16 %v61, %v61
  %v63 = vld [vmem:[%s3] sm:$0xf]
  %v64 = vld [vmem:[%s3 + $0x4] sm:$0xf]
  %v65 = vld [vmem:[%s3 + $0x8] sm:$0xf]
  %v66 = vld [vmem:[%s3 + $0xc] sm:$0xf]
  %v67 = vld [vmem:[%s4] sm:$0x1]
  %v69 = vperm.slane %v67, 0
  %v75 = vunpack.c.l.b16 %v63
  %v76 = vunpack.c.l.b16 %v64
  %v77 = vunpack.c.l.b16 %v65
  %v78 = vunpack.c.l.b16 %v66
  %v79 = vpack.c.b16 %v76, %v75
  %v80 = vpack.c.b16 %v78, %v77
  %vm83 = vcmask 261120
  %v85 = vsel %vm83, %v62, 0
  %87 = vmatpush.bf16.msra.mxu0 0
  %88 = vmatpush.bf16.msra.mxu0 0
  %89 = vmatpush.bf16.msra.mxu0 0
  %90 = vmatpush.bf16.msra.mxu0 0
  %91 = vmatpush.bf16.msra.mxu0 0
  %92 = vmatpush.bf16.msra.mxu0 0
  %93 = vmatpush.bf16.msra.mxu0 %v80
  %94 = vmatpush.bf16.msra.mxu0 %v79
  %95 = vmatmul.bf16.gmra.mxu0 %v85
  %v96 = vpop.f32.mrf.mxu0
  %v97 = vadd.f32 %v69, %v96
  %v98 = vpop.f32.mrf.mxu0
  %99 = vdwg.mxu0
  %100 = vst.msk [vmem:[%s5] sm:$0x3] %vm22, %v97
  // Predicated region
  $region22: #{clip_forward.40} parent=0 // pred_check
    _
  $region23: #{clip_forward.40} parent=0 // pred_check_branch
    %102 = sbr.rel (0) target = $region25
  $region24: #{clip_forward.40} parent=0 // pred_region
    _
  $region25: #{clip_forward.40} parent=0 // pred_fallthru
    _
  // Predicated region
  $region26: #{clip_forward.40} parent=0 // pred_check
    _
  $region27: #{clip_forward.40} parent=0 // pred_check_branch
    %104 = sbr.rel (0) target = $region29
  $region28: #{clip_forward.40} parent=0 // pred_region
    _
  $region29: #{clip_forward.40} parent=0 // pred_fallthru
    _

</llo_original>
